<compile_context>
chip_gen: v7x
topology: tpu7x:2x2x1
jax: 0.10.0
libtpu: 0.0.40
codegen_flags: <defaults>
</compile_context>

<pallas_src>
import math
import functools

import jax
import jax.numpy as jnp
from jax.experimental import pallas as pl
from jax.experimental.pallas import tpu as pltpu


# ---------------------------------------------------------------- kernel ----

def _layernorm(x, gamma, beta, eps=1e-5):
    mu = jnp.mean(x, axis=-1, keepdims=True)
    var = jnp.mean((x - mu) ** 2, axis=-1, keepdims=True)
    return (x - mu) * jax.lax.rsqrt(var + eps) * gamma + beta


def _make_forward_kernel(nlayers, d_model, nhead, seq_len):
    """Fused forward kernel for ONE batch row: PE add + encoder stack + vocab head."""
    hd = d_model // nhead
    neg = -1e30  # finite sentinel; safe because every row keeps its diagonal unmasked

    def kernel(x_ref, pe_ref, wqkv_ref, bqkv_ref, wo_ref,
               wff1_ref, bff1_ref, wff2_ref, vecd_ref,
               wout_ref, bout_ref, o_ref):
        # positional encoding (module quirk: indexed by batch, broadcast over seq)
        x = x_ref[...].astype(jnp.float32) + pe_ref[...].astype(jnp.float32)   # [S, D]

        # causal mask for this batch row only: [S, S]
        row = jax.lax.broadcasted_iota(jnp.int32, (seq_len, seq_len), 0)
        col = jax.lax.broadcasted_iota(jnp.int32, (seq_len, seq_len), 1)
        mask = jnp.where(col <= row, 0.0, neg).astype(jnp.float32)

        for li in range(nlayers):                       # static unroll (nlayers small)
            wqkv = wqkv_ref[li]                         # [D, 3D] (Q columns pre-scaled)
            bqkv = bqkv_ref[li]                         # [1, 3D]
            wo   = wo_ref[li]                           # [D, D]
            w1   = wff1_ref[li]                         # [D, H]
            b1   = bff1_ref[li]                         # [1, H]
            w2   = wff2_ref[li]                         # [H, D]
            vec  = vecd_ref[li]                         # [6, D]: bo, b2, g1, bt1, g2, bt2
            bo, b2  = vec[0:1], vec[1:2]
            g1, bt1 = vec[2:3], vec[3:4]
            g2, bt2 = vec[4:5], vec[5:6]

            # --- fused QKV projection: one lane-dense MXU op per layer ---
            qkv = jnp.dot(x, wqkv, preferred_element_type=jnp.float32) + bqkv  # [S, 3D]

            # --- per-head attention on static lane slices of qkv ---
            ctx_heads = []
            for h in range(nhead):                      # static unroll
                lo = h * hd
                qh = qkv[:, lo:lo + hd]                                   # pre-scaled
                kh = qkv[:, d_model + lo:d_model + lo + hd]
                vh = qkv[:, 2 * d_model + lo:2 * d_model + lo + hd]
                s = jax.lax.dot_general(
                    qh, kh, (((1,), (1,)), ((), ())),
                    preferred_element_type=jnp.float32) + mask            # [S, S]
                s = s - jnp.max(s, axis=-1, keepdims=True)
                p = jnp.exp(s)
                p = p / jnp.sum(p, axis=-1, keepdims=True)                # exact softmax
                ctx_heads.append(
                    jnp.dot(p, vh, preferred_element_type=jnp.float32))   # [S, hd]
            ctx = jnp.concatenate(ctx_heads, axis=-1)                     # [S, D]

            # --- single fused output projection (contraction = D) ---
            attn = jnp.dot(ctx, wo, preferred_element_type=jnp.float32) + bo

            # --- residual + LayerNorm 1 (post-norm) ---
            y = _layernorm(x + attn, g1, bt1)

            # --- feed-forward: linear -> ReLU -> linear ---
            f = jnp.maximum(
                jnp.dot(y, w1, preferred_element_type=jnp.float32) + b1, 0.0)
            f = jnp.dot(f, w2, preferred_element_type=jnp.float32) + b2

            # --- residual + LayerNorm 2 ---
            x = _layernorm(y + f, g2, bt2)

        # --- vocab head, lane-dense (padded to a multiple of 128 columns) ---
        logits = (jnp.dot(x, wout_ref[...], preferred_element_type=jnp.float32)
                  + bout_ref[...])
        o_ref[...] = logits.astype(o_ref.dtype)

    return kernel


# --------------------------------------------------------------- wrapper ----

def make_positional_encoding(max_len, d_model):
    position = jnp.arange(max_len, dtype=jnp.float32)[:, None]
    div_term = jnp.exp(jnp.arange(0, d_model, 2, dtype=jnp.float32)
                       * (-math.log(10000.0) / d_model))
    pe = jnp.zeros((max_len, 1, d_model), jnp.float32)
    pe = pe.at[:, 0, 0::2].set(jnp.sin(position * div_term))
    pe = pe.at[:, 0, 1::2].set(jnp.cos(position * div_term))
    return pe


def preprocess_params(params, *, d_model, nhead, batch_size):
    """One-time parameter massaging, hoisted out of the per-call forward path."""
    hd = d_model // nhead
    scale = 1.0 / math.sqrt(hd)
    # fold 1/sqrt(hd) into the Q columns of the fused QKV projection
    qscale = jnp.concatenate([jnp.full((d_model,), scale, jnp.float32),
                              jnp.ones((2 * d_model,), jnp.float32)])

    w_qkv, b_qkv, w_o, w_ff1, b_ff1, w_ff2, vec_d = ([] for _ in range(7))
    for (wqkv, bqkv, wo, bo, g1, bt1, w1, b1, w2, b2, g2, bt2) in params["layers"]:
        w_qkv.append(wqkv * qscale[None, :])
        b_qkv.append(bqkv * qscale[None, :])
        w_o.append(wo)
        w_ff1.append(w1)
        b_ff1.append(b1)
        w_ff2.append(w2)
        vec_d.append(jnp.concatenate([bo, b2, g1, bt1, g2, bt2], axis=0))    # [6, D]

    ntoken = params["w_out"].shape[1]
    npad = pl.cdiv(ntoken, 128) * 128
    w_out_p = jnp.zeros((d_model, npad), jnp.float32).at[:, :ntoken].set(params["w_out"])
    b_out_p = jnp.zeros((1, npad), jnp.float32).at[:, :ntoken].set(params["b_out"])

    return dict(
        embedding_scaled=params["embedding"] * math.sqrt(d_model),  # sqrt(D) pre-folded
        pe_b=params["pe"][:batch_size],      # [B, 1, D] (module's batch-index PE quirk)
        w_qkv=jnp.stack(w_qkv), b_qkv=jnp.stack(b_qkv), w_o=jnp.stack(w_o),
        w_ff1=jnp.stack(w_ff1), b_ff1=jnp.stack(b_ff1), w_ff2=jnp.stack(w_ff2),
        vec_d=jnp.stack(vec_d),
        w_out=w_out_p, b_out=b_out_p,
    )


def transformer_forward(src, prep, *, d_model, nhead, ntoken):
    B, S = src.shape
    nlayers = prep["w_qkv"].shape[0]
    npad = prep["w_out"].shape[1]

    # TODO(synk): embedding token gather stays in plain JAX (data-dependent gather;
    # no clean tiled BlockSpec form at this size).
    x = prep["embedding_scaled"][src]                   # [B, S, D]

    kernel = _make_forward_kernel(nlayers, d_model, nhead, S)

    def full(a):  # whole-array resident block, identical for every grid step
        return pl.BlockSpec(a.shape, lambda b, _nd=a.ndim: (0,) * _nd)

    logits = pl.pallas_call(
        kernel,
        grid=(B,),
        in_specs=[
            pl.BlockSpec((None, S, d_model), lambda b: (b, 0, 0)),   # x, per batch row
            pl.BlockSpec((None, 1, d_model), lambda b: (b, 0, 0)),   # pe row, per batch
            full(prep["w_qkv"]), full(prep["b_qkv"]), full(prep["w_o"]),
            full(prep["w_ff1"]), full(prep["b_ff1"]), full(prep["w_ff2"]),
            full(prep["vec_d"]), full(prep["w_out"]), full(prep["b_out"]),
        ],
        out_specs=pl.BlockSpec((None, S, npad), lambda b: (b, 0, 0)),
        out_shape=jax.ShapeDtypeStruct((B, S, npad), jnp.float32),
        compiler_params=pltpu.CompilerParams(dimension_semantics=("parallel",)),
    )(x, prep["pe_b"], prep["w_qkv"], prep["b_qkv"], prep["w_o"],
      prep["w_ff1"], prep["b_ff1"], prep["w_ff2"], prep["vec_d"],
      prep["w_out"], prep["b_out"])

    return logits[:, :, :ntoken]


# ------------------------------------------------------------------- main ---

if __name__ == "__main__":
    ntoken, d_model, nhead, d_hid, nlayers = 50, 32, 4, 64, 2
    B, S = 2, 8

    key = jax.random.PRNGKey(0)
    keys = jax.random.split(key, 3 + nlayers)

    src = jax.random.randint(keys[0], (B, S), 0, ntoken)

    embedding = jax.random.uniform(keys[1], (ntoken, d_model), jnp.float32, -0.1, 0.1)
    w_out = jax.random.uniform(keys[2], (d_model, ntoken), jnp.float32, -0.1, 0.1)
    b_out = jnp.zeros((1, ntoken), jnp.float32)

    layers = []
    for li in range(nlayers):
        k = jax.random.split(keys[3 + li], 4)
        wqkv = jax.random.normal(k[0], (d_model, 3 * d_model), jnp.float32) * 0.05
        bqkv = jnp.zeros((1, 3 * d_model), jnp.float32)
        wo = jax.random.normal(k[1], (d_model, d_model), jnp.float32) * 0.05
        bo = jnp.zeros((1, d_model), jnp.float32)
        g1 = jnp.ones((1, d_model), jnp.float32)
        bt1 = jnp.zeros((1, d_model), jnp.float32)
        w1 = jax.random.normal(k[2], (d_model, d_hid), jnp.float32) * 0.05
        b1 = jnp.zeros((1, d_hid), jnp.float32)
        w2 = jax.random.normal(k[3], (d_hid, d_model), jnp.float32) * 0.05
        b2 = jnp.zeros((1, d_model), jnp.float32)
        g2 = jnp.ones((1, d_model), jnp.float32)
        bt2 = jnp.zeros((1, d_model), jnp.float32)
        layers.append((wqkv, bqkv, wo, bo, g1, bt1, w1, b1, w2, b2, g2, bt2))

    params = dict(
        embedding=embedding,
        pe=make_positional_encoding(64, d_model),
        layers=layers,
        w_out=w_out,
        b_out=b_out,
    )

    # one-time preprocessing (outside the jitted per-call path)
    prep = preprocess_params(params, d_model=d_model, nhead=nhead, batch_size=B)

    fwd = jax.jit(functools.partial(transformer_forward,
                                    d_model=d_model, nhead=nhead, ntoken=ntoken))
    out = jax.block_until_ready(fwd(src, prep))
    assert out.shape == (B, S, ntoken), out.shape
    assert bool(jnp.all(jnp.isfinite(out)))
    print("KERNEL_OK")
</pallas_src>

<mosaic_0001>
module attributes {stable_mosaic.version = 11 : i64} {
  func.func @kernel(%arg0: i32, %arg1: memref<1x8x32xf32, #tpu.memory_space<vmem>>, %arg2: memref<1x1x32xf32, #tpu.memory_space<vmem>>, %arg3: memref<2x32x96xf32, #tpu.memory_space<vmem>>, %arg4: memref<2x1x96xf32, #tpu.memory_space<vmem>>, %arg5: memref<2x32x32xf32, #tpu.memory_space<vmem>>, %arg6: memref<2x32x64xf32, #tpu.memory_space<vmem>>, %arg7: memref<2x1x64xf32, #tpu.memory_space<vmem>>, %arg8: memref<2x64x32xf32, #tpu.memory_space<vmem>>, %arg9: memref<2x6x32xf32, #tpu.memory_space<vmem>>, %arg10: memref<32x128xf32, #tpu.memory_space<vmem>>, %arg11: memref<1x128xf32, #tpu.memory_space<vmem>>, %arg12: memref<1x8x128xf32, #tpu.memory_space<vmem>>) attributes {dimension_semantics = [#tpu.dimension_semantics<parallel>], iteration_bounds = array<i64: 2>, scalar_prefetch = 0 : i64, scratch_operands = 0 : i64, tpu.core_type = #tpu.core_type<tc>, window_params = [{transform_indices = @transform_0, window_bounds = array<i64: 1, 8, 32>}, {transform_indices = @transform_1, window_bounds = array<i64: 1, 1, 32>}, {pipeline_mode = #tpu.pipeline_mode<synchronous>, transform_indices = @transform_2, window_bounds = array<i64: 2, 32, 96>}, {pipeline_mode = #tpu.pipeline_mode<synchronous>, transform_indices = @transform_3, window_bounds = array<i64: 2, 1, 96>}, {pipeline_mode = #tpu.pipeline_mode<synchronous>, transform_indices = @transform_4, window_bounds = array<i64: 2, 32, 32>}, {pipeline_mode = #tpu.pipeline_mode<synchronous>, transform_indices = @transform_5, window_bounds = array<i64: 2, 32, 64>}, {pipeline_mode = #tpu.pipeline_mode<synchronous>, transform_indices = @transform_6, window_bounds = array<i64: 2, 1, 64>}, {pipeline_mode = #tpu.pipeline_mode<synchronous>, transform_indices = @transform_7, window_bounds = array<i64: 2, 64, 32>}, {pipeline_mode = #tpu.pipeline_mode<synchronous>, transform_indices = @transform_8, window_bounds = array<i64: 2, 6, 32>}, {pipeline_mode = #tpu.pipeline_mode<synchronous>, transform_indices = @transform_9, window_bounds = array<i64: 32, 128>}, {pipeline_mode = #tpu.pipeline_mode<synchronous>, transform_indices = @transform_10, window_bounds = array<i64: 1, 128>}, {transform_indices = @transform_11, window_bounds = array<i64: 1, 8, 128>}]} {
    %c0 = arith.constant 0 : index
    %c0_0 = arith.constant 0 : index
    %c0_1 = arith.constant 0 : index
    %0 = vector.load %arg1[%c0, %c0_0, %c0_1] : memref<1x8x32xf32, #tpu.memory_space<vmem>>, vector<1x8x32xf32>
    %1 = vector.shape_cast %0 : vector<1x8x32xf32> to vector<8x32xf32>
    %c0_2 = arith.constant 0 : index
    %c0_3 = arith.constant 0 : index
    %c0_4 = arith.constant 0 : index
    %2 = vector.load %arg2[%c0_2, %c0_3, %c0_4] : memref<1x1x32xf32, #tpu.memory_space<vmem>>, vector<1x1x32xf32>
    %3 = vector.shape_cast %2 : vector<1x1x32xf32> to vector<1x32xf32>
    %4 = vector.broadcast %3 : vector<1x32xf32> to vector<8x32xf32>
    %5 = arith.addf %1, %4 : vector<8x32xf32>
    %6 = tpu.iota {dimensions = array<i32: 0>} : vector<8x8xi32>
    %7 = tpu.iota {dimensions = array<i32: 1>} : vector<8x8xi32>
    %8 = arith.cmpi sle, %7, %6 : vector<8x8xi32>
    %cst = arith.constant 0.000000e+00 : f32
    %cst_5 = arith.constant -1.000000e+30 : f32
    %9 = vector.broadcast %cst : f32 to vector<8x8xf32>
    %10 = vector.broadcast %cst_5 : f32 to vector<8x8xf32>
    %11 = arith.select %8, %9, %10 : vector<8x8xi1>, vector<8x8xf32>
    %c0_6 = arith.constant 0 : index
    %c0_7 = arith.constant 0 : index
    %c0_8 = arith.constant 0 : index
    %12 = vector.load %arg3[%c0_6, %c0_7, %c0_8] : memref<2x32x96xf32, #tpu.memory_space<vmem>>, vector<1x32x96xf32>
    %13 = vector.shape_cast %12 : vector<1x32x96xf32> to vector<32x96xf32>
    %c0_9 = arith.constant 0 : index
    %c0_10 = arith.constant 0 : index
    %c0_11 = arith.constant 0 : index
    %14 = vector.load %arg4[%c0_9, %c0_10, %c0_11] : memref<2x1x96xf32, #tpu.memory_space<vmem>>, vector<1x1x96xf32>
    %15 = vector.shape_cast %14 : vector<1x1x96xf32> to vector<1x96xf32>
    %c0_12 = arith.constant 0 : index
    %c0_13 = arith.constant 0 : index
    %c0_14 = arith.constant 0 : index
    %16 = vector.load %arg5[%c0_12, %c0_13, %c0_14] : memref<2x32x32xf32, #tpu.memory_space<vmem>>, vector<1x32x32xf32>
    %17 = vector.shape_cast %16 : vector<1x32x32xf32> to vector<32x32xf32>
    %c0_15 = arith.constant 0 : index
    %c0_16 = arith.constant 0 : index
    %c0_17 = arith.constant 0 : index
    %18 = vector.load %arg6[%c0_15, %c0_16, %c0_17] : memref<2x32x64xf32, #tpu.memory_space<vmem>>, vector<1x32x64xf32>
    %19 = vector.shape_cast %18 : vector<1x32x64xf32> to vector<32x64xf32>
    %c0_18 = arith.constant 0 : index
    %c0_19 = arith.constant 0 : index
    %c0_20 = arith.constant 0 : index
    %20 = vector.load %arg7[%c0_18, %c0_19, %c0_20] : memref<2x1x64xf32, #tpu.memory_space<vmem>>, vector<1x1x64xf32>
    %21 = vector.shape_cast %20 : vector<1x1x64xf32> to vector<1x64xf32>
    %c0_21 = arith.constant 0 : index
    %c0_22 = arith.constant 0 : index
    %c0_23 = arith.constant 0 : index
    %22 = vector.load %arg8[%c0_21, %c0_22, %c0_23] : memref<2x64x32xf32, #tpu.memory_space<vmem>>, vector<1x64x32xf32>
    %23 = vector.shape_cast %22 : vector<1x64x32xf32> to vector<64x32xf32>
    %c0_24 = arith.constant 0 : index
    %c0_25 = arith.constant 0 : index
    %c0_26 = arith.constant 0 : index
    %24 = vector.load %arg9[%c0_24, %c0_25, %c0_26] : memref<2x6x32xf32, #tpu.memory_space<vmem>>, vector<1x6x32xf32>
    %25 = vector.shape_cast %24 : vector<1x6x32xf32> to vector<6x32xf32>
    %26 = vector.extract_strided_slice %25 {offsets = [0, 0], sizes = [1, 32], strides = [1, 1]} : vector<6x32xf32> to vector<1x32xf32>
    %27 = vector.extract_strided_slice %25 {offsets = [1, 0], sizes = [1, 32], strides = [1, 1]} : vector<6x32xf32> to vector<1x32xf32>
    %28 = vector.extract_strided_slice %25 {offsets = [2, 0], sizes = [1, 32], strides = [1, 1]} : vector<6x32xf32> to vector<1x32xf32>
    %29 = vector.extract_strided_slice %25 {offsets = [3, 0], sizes = [1, 32], strides = [1, 1]} : vector<6x32xf32> to vector<1x32xf32>
    %30 = vector.extract_strided_slice %25 {offsets = [4, 0], sizes = [1, 32], strides = [1, 1]} : vector<6x32xf32> to vector<1x32xf32>
    %31 = vector.extract_strided_slice %25 {offsets = [5, 0], sizes = [1, 32], strides = [1, 1]} : vector<6x32xf32> to vector<1x32xf32>
    %cst_27 = arith.constant dense<0.000000e+00> : vector<8x96xf32>
    %32 = tpu.matmul %5, %13, %cst_27 {dimension_numbers = #tpu.dot_dimension_numbers<[1], [0], [0], [1], [0, 0, 1, 1], [], []>} : vector<8x32xf32>, vector<32x96xf32>, vector<8x96xf32> -> vector<8x96xf32>
    %33 = vector.broadcast %15 : vector<1x96xf32> to vector<8x96xf32>
    %34 = arith.addf %32, %33 : vector<8x96xf32>
    %35 = vector.extract_strided_slice %34 {offsets = [0, 0], sizes = [8, 8], strides = [1, 1]} : vector<8x96xf32> to vector<8x8xf32>
    %36 = vector.extract_strided_slice %34 {offsets = [0, 32], sizes = [8, 8], strides = [1, 1]} : vector<8x96xf32> to vector<8x8xf32>
    %37 = vector.extract_strided_slice %34 {offsets = [0, 64], sizes = [8, 8], strides = [1, 1]} : vector<8x96xf32> to vector<8x8xf32>
    %cst_28 = arith.constant dense<0.000000e+00> : vector<8x8xf32>
    %38 = tpu.matmul %35, %36, %cst_28 {dimension_numbers = #tpu.dot_dimension_numbers<[1], [1], [0], [0], [0, 0, 1, 0], [], []>} : vector<8x8xf32>, vector<8x8xf32>, vector<8x8xf32> -> vector<8x8xf32>
    %39 = arith.addf %38, %11 : vector<8x8xf32>
    %cst_29 = arith.constant dense<0xFF800000> : vector<8xf32>
    %40 = vector.multi_reduction <maximumf>, %39, %cst_29 [1] : vector<8x8xf32> to vector<8xf32>
    %41 = vector.shape_cast %40 : vector<8xf32> to vector<8x1xf32>
    %42 = vector.broadcast %41 : vector<8x1xf32> to vector<8x8xf32>
    %43 = arith.subf %39, %42 : vector<8x8xf32>
    %44 = math.exp %43 : vector<8x8xf32>
    %cst_30 = arith.constant dense<0.000000e+00> : vector<8xf32>
    %45 = vector.multi_reduction <add>, %44, %cst_30 [1] : vector<8x8xf32> to vector<8xf32>
    %46 = vector.shape_cast %45 : vector<8xf32> to vector<8x1xf32>
    %47 = vector.broadcast %46 : vector<8x1xf32> to vector<8x8xf32>
    %48 = arith.divf %44, %47 : vector<8x8xf32>
    %cst_31 = arith.constant dense<0.000000e+00> : vector<8x8xf32>
    %49 = tpu.matmul %48, %37, %cst_31 {dimension_numbers = #tpu.dot_dimension_numbers<[1], [0], [0], [1], [0, 0, 1, 1], [], []>} : vector<8x8xf32>, vector<8x8xf32>, vector<8x8xf32> -> vector<8x8xf32>
    %50 = vector.extract_strided_slice %34 {offsets = [0, 8], sizes = [8, 8], strides = [1, 1]} : vector<8x96xf32> to vector<8x8xf32>
    %51 = vector.extract_strided_slice %34 {offsets = [0, 40], sizes = [8, 8], strides = [1, 1]} : vector<8x96xf32> to vector<8x8xf32>
    %52 = vector.extract_strided_slice %34 {offsets = [0, 72], sizes = [8, 8], strides = [1, 1]} : vector<8x96xf32> to vector<8x8xf32>
    %cst_32 = arith.constant dense<0.000000e+00> : vector<8x8xf32>
    %53 = tpu.matmul %50, %51, %cst_32 {dimension_numbers = #tpu.dot_dimension_numbers<[1], [1], [0], [0], [0, 0, 1, 0], [], []>} : vector<8x8xf32>, vector<8x8xf32>, vector<8x8xf32> -> vector<8x8xf32>
    %54 = arith.addf %53, %11 : vector<8x8xf32>
    %cst_33 = arith.constant dense<0xFF800000> : vector<8xf32>
    %55 = vector.multi_reduction <maximumf>, %54, %cst_33 [1] : vector<8x8xf32> to vector<8xf32>
    %56 = vector.shape_cast %55 : vector<8xf32> to vector<8x1xf32>
    %57 = vector.broadcast %56 : vector<8x1xf32> to vector<8x8xf32>
    %58 = arith.subf %54, %57 : vector<8x8xf32>
    %59 = math.exp %58 : vector<8x8xf32>
    %cst_34 = arith.constant dense<0.000000e+00> : vector<8xf32>
    %60 = vector.multi_reduction <add>, %59, %cst_34 [1] : vector<8x8xf32> to vector<8xf32>
    %61 = vector.shape_cast %60 : vector<8xf32> to vector<8x1xf32>
    %62 = vector.broadcast %61 : vector<8x1xf32> to vector<8x8xf32>
    %63 = arith.divf %59, %62 : vector<8x8xf32>
    %cst_35 = arith.constant dense<0.000000e+00> : vector<8x8xf32>
    %64 = tpu.matmul %63, %52, %cst_35 {dimension_numbers = #tpu.dot_dimension_numbers<[1], [0], [0], [1], [0, 0, 1, 1], [], []>} : vector<8x8xf32>, vector<8x8xf32>, vector<8x8xf32> -> vector<8x8xf32>
    %65 = vector.extract_strided_slice %34 {offsets = [0, 16], sizes = [8, 8], strides = [1, 1]} : vector<8x96xf32> to vector<8x8xf32>
    %66 = vector.extract_strided_slice %34 {offsets = [0, 48], sizes = [8, 8], strides = [1, 1]} : vector<8x96xf32> to vector<8x8xf32>
    %67 = vector.extract_strided_slice %34 {offsets = [0, 80], sizes = [8, 8], strides = [1, 1]} : vector<8x96xf32> to vector<8x8xf32>
    %cst_36 = arith.constant dense<0.000000e+00> : vector<8x8xf32>
    %68 = tpu.matmul %65, %66, %cst_36 {dimension_numbers = #tpu.dot_dimension_numbers<[1], [1], [0], [0], [0, 0, 1, 0], [], []>} : vector<8x8xf32>, vector<8x8xf32>, vector<8x8xf32> -> vector<8x8xf32>
    %69 = arith.addf %68, %11 : vector<8x8xf32>
    %cst_37 = arith.constant dense<0xFF800000> : vector<8xf32>
    %70 = vector.multi_reduction <maximumf>, %69, %cst_37 [1] : vector<8x8xf32> to vector<8xf32>
    %71 = vector.shape_cast %70 : vector<8xf32> to vector<8x1xf32>
    %72 = vector.broadcast %71 : vector<8x1xf32> to vector<8x8xf32>
    %73 = arith.subf %69, %72 : vector<8x8xf32>
    %74 = math.exp %73 : vector<8x8xf32>
    %cst_38 = arith.constant dense<0.000000e+00> : vector<8xf32>
    %75 = vector.multi_reduction <add>, %74, %cst_38 [1] : vector<8x8xf32> to vector<8xf32>
    %76 = vector.shape_cast %75 : vector<8xf32> to vector<8x1xf32>
    %77 = vector.broadcast %76 : vector<8x1xf32> to vector<8x8xf32>
    %78 = arith.divf %74, %77 : vector<8x8xf32>
    %cst_39 = arith.constant dense<0.000000e+00> : vector<8x8xf32>
    %79 = tpu.matmul %78, %67, %cst_39 {dimension_numbers = #tpu.dot_dimension_numbers<[1], [0], [0], [1], [0, 0, 1, 1], [], []>} : vector<8x8xf32>, vector<8x8xf32>, vector<8x8xf32> -> vector<8x8xf32>
    %80 = vector.extract_strided_slice %34 {offsets = [0, 24], sizes = [8, 8], strides = [1, 1]} : vector<8x96xf32> to vector<8x8xf32>
    %81 = vector.extract_strided_slice %34 {offsets = [0, 56], sizes = [8, 8], strides = [1, 1]} : vector<8x96xf32> to vector<8x8xf32>
    %82 = vector.extract_strided_slice %34 {offsets = [0, 88], sizes = [8, 8], strides = [1, 1]} : vector<8x96xf32> to vector<8x8xf32>
    %cst_40 = arith.constant dense<0.000000e+00> : vector<8x8xf32>
    %83 = tpu.matmul %80, %81, %cst_40 {dimension_numbers = #tpu.dot_dimension_numbers<[1], [1], [0], [0], [0, 0, 1, 0], [], []>} : vector<8x8xf32>, vector<8x8xf32>, vector<8x8xf32> -> vector<8x8xf32>
    %84 = arith.addf %83, %11 : vector<8x8xf32>
    %cst_41 = arith.constant dense<0xFF800000> : vector<8xf32>
    %85 = vector.multi_reduction <maximumf>, %84, %cst_41 [1] : vector<8x8xf32> to vector<8xf32>
    %86 = vector.shape_cast %85 : vector<8xf32> to vector<8x1xf32>
    %87 = vector.broadcast %86 : vector<8x1xf32> to vector<8x8xf32>
    %88 = arith.subf %84, %87 : vector<8x8xf32>
    %89 = math.exp %88 : vector<8x8xf32>
    %cst_42 = arith.constant dense<0.000000e+00> : vector<8xf32>
    %90 = vector.multi_reduction <add>, %89, %cst_42 [1] : vector<8x8xf32> to vector<8xf32>
    %91 = vector.shape_cast %90 : vector<8xf32> to vector<8x1xf32>
    %92 = vector.broadcast %91 : vector<8x1xf32> to vector<8x8xf32>
    %93 = arith.divf %89, %92 : vector<8x8xf32>
    %cst_43 = arith.constant dense<0.000000e+00> : vector<8x8xf32>
    %94 = tpu.matmul %93, %82, %cst_43 {dimension_numbers = #tpu.dot_dimension_numbers<[1], [0], [0], [1], [0, 0, 1, 1], [], []>} : vector<8x8xf32>, vector<8x8xf32>, vector<8x8xf32> -> vector<8x8xf32>
    %95 = tpu.concatenate %49, %64, %79, %94 in 1 : vector<8x8xf32>, vector<8x8xf32>, vector<8x8xf32>, vector<8x8xf32> -> vector<8x32xf32>
    %cst_44 = arith.constant dense<0.000000e+00> : vector<8x32xf32>
    %96 = tpu.matmul %95, %17, %cst_44 {dimension_numbers = #tpu.dot_dimension_numbers<[1], [0], [0], [1], [0, 0, 1, 1], [], []>} : vector<8x32xf32>, vector<32x32xf32>, vector<8x32xf32> -> vector<8x32xf32>
    %97 = vector.broadcast %26 : vector<1x32xf32> to vector<8x32xf32>
    %98 = arith.addf %96, %97 : vector<8x32xf32>
    %99 = arith.addf %5, %98 : vector<8x32xf32>
    %cst_45 = arith.constant dense<0.000000e+00> : vector<8xf32>
    %100 = vector.multi_reduction <add>, %99, %cst_45 [1] : vector<8x32xf32> to vector<8xf32>
    %101 = vector.shape_cast %100 : vector<8xf32> to vector<8x1xf32>
    %cst_46 = arith.constant 3.200000e+01 : f32
    %102 = vector.broadcast %cst_46 : f32 to vector<8x1xf32>
    %103 = arith.divf %101, %102 : vector<8x1xf32>
    %104 = vector.broadcast %103 : vector<8x1xf32> to vector<8x32xf32>
    %105 = arith.subf %99, %104 : vector<8x32xf32>
    %106 = arith.mulf %105, %105 : vector<8x32xf32>
    %cst_47 = arith.constant dense<0.000000e+00> : vector<8xf32>
    %107 = vector.multi_reduction <add>, %106, %cst_47 [1] : vector<8x32xf32> to vector<8xf32>
    %108 = vector.shape_cast %107 : vector<8xf32> to vector<8x1xf32>
    %cst_48 = arith.constant 3.200000e+01 : f32
    %109 = vector.broadcast %cst_48 : f32 to vector<8x1xf32>
    %110 = arith.divf %108, %109 : vector<8x1xf32>
    %111 = vector.broadcast %103 : vector<8x1xf32> to vector<8x32xf32>
    %112 = arith.subf %99, %111 : vector<8x32xf32>
    %cst_49 = arith.constant 9.99999974E-6 : f32
    %113 = vector.broadcast %cst_49 : f32 to vector<8x1xf32>
    %114 = arith.addf %110, %113 : vector<8x1xf32>
    %115 = math.rsqrt %114 : vector<8x1xf32>
    %116 = vector.broadcast %115 : vector<8x1xf32> to vector<8x32xf32>
    %117 = arith.mulf %112, %116 : vector<8x32xf32>
    %118 = vector.broadcast %28 : vector<1x32xf32> to vector<8x32xf32>
    %119 = arith.mulf %117, %118 : vector<8x32xf32>
    %120 = vector.broadcast %29 : vector<1x32xf32> to vector<8x32xf32>
    %121 = arith.addf %119, %120 : vector<8x32xf32>
    %cst_50 = arith.constant dense<0.000000e+00> : vector<8x64xf32>
    %122 = tpu.matmul %121, %19, %cst_50 {dimension_numbers = #tpu.dot_dimension_numbers<[1], [0], [0], [1], [0, 0, 1, 1], [], []>} : vector<8x32xf32>, vector<32x64xf32>, vector<8x64xf32> -> vector<8x64xf32>
    %123 = vector.broadcast %21 : vector<1x64xf32> to vector<8x64xf32>
    %124 = arith.addf %122, %123 : vector<8x64xf32>
    %cst_51 = arith.constant 0.000000e+00 : f32
    %125 = vector.broadcast %cst_51 : f32 to vector<8x64xf32>
    %126 = arith.maximumf %124, %125 : vector<8x64xf32>
    %cst_52 = arith.constant dense<0.000000e+00> : vector<8x32xf32>
    %127 = tpu.matmul %126, %23, %cst_52 {dimension_numbers = #tpu.dot_dimension_numbers<[1], [0], [0], [1], [0, 0, 1, 1], [], []>} : vector<8x64xf32>, vector<64x32xf32>, vector<8x32xf32> -> vector<8x32xf32>
    %128 = vector.broadcast %27 : vector<1x32xf32> to vector<8x32xf32>
    %129 = arith.addf %127, %128 : vector<8x32xf32>
    %130 = arith.addf %121, %129 : vector<8x32xf32>
    %cst_53 = arith.constant dense<0.000000e+00> : vector<8xf32>
    %131 = vector.multi_reduction <add>, %130, %cst_53 [1] : vector<8x32xf32> to vector<8xf32>
    %132 = vector.shape_cast %131 : vector<8xf32> to vector<8x1xf32>
    %cst_54 = arith.constant 3.200000e+01 : f32
    %133 = vector.broadcast %cst_54 : f32 to vector<8x1xf32>
    %134 = arith.divf %132, %133 : vector<8x1xf32>
    %135 = vector.broadcast %134 : vector<8x1xf32> to vector<8x32xf32>
    %136 = arith.subf %130, %135 : vector<8x32xf32>
    %137 = arith.mulf %136, %136 : vector<8x32xf32>
    %cst_55 = arith.constant dense<0.000000e+00> : vector<8xf32>
    %138 = vector.multi_reduction <add>, %137, %cst_55 [1] : vector<8x32xf32> to vector<8xf32>
    %139 = vector.shape_cast %138 : vector<8xf32> to vector<8x1xf32>
    %cst_56 = arith.constant 3.200000e+01 : f32
    %140 = vector.broadcast %cst_56 : f32 to vector<8x1xf32>
    %141 = arith.divf %139, %140 : vector<8x1xf32>
    %142 = vector.broadcast %134 : vector<8x1xf32> to vector<8x32xf32>
    %143 = arith.subf %130, %142 : vector<8x32xf32>
    %cst_57 = arith.constant 9.99999974E-6 : f32
    %144 = vector.broadcast %cst_57 : f32 to vector<8x1xf32>
    %145 = arith.addf %141, %144 : vector<8x1xf32>
    %146 = math.rsqrt %145 : vector<8x1xf32>
    %147 = vector.broadcast %146 : vector<8x1xf32> to vector<8x32xf32>
    %148 = arith.mulf %143, %147 : vector<8x32xf32>
    %149 = vector.broadcast %30 : vector<1x32xf32> to vector<8x32xf32>
    %150 = arith.mulf %148, %149 : vector<8x32xf32>
    %151 = vector.broadcast %31 : vector<1x32xf32> to vector<8x32xf32>
    %152 = arith.addf %150, %151 : vector<8x32xf32>
    %c1 = arith.constant 1 : index
    %c0_58 = arith.constant 0 : index
    %c0_59 = arith.constant 0 : index
    %153 = vector.load %arg3[%c1, %c0_58, %c0_59] : memref<2x32x96xf32, #tpu.memory_space<vmem>>, vector<1x32x96xf32>
    %154 = vector.shape_cast %153 : vector<1x32x96xf32> to vector<32x96xf32>
    %c1_60 = arith.constant 1 : index
    %c0_61 = arith.constant 0 : index
    %c0_62 = arith.constant 0 : index
    %155 = vector.load %arg4[%c1_60, %c0_61, %c0_62] : memref<2x1x96xf32, #tpu.memory_space<vmem>>, vector<1x1x96xf32>
    %156 = vector.shape_cast %155 : vector<1x1x96xf32> to vector<1x96xf32>
    %c1_63 = arith.constant 1 : index
    %c0_64 = arith.constant 0 : index
    %c0_65 = arith.constant 0 : index
    %157 = vector.load %arg5[%c1_63, %c0_64, %c0_65] : memref<2x32x32xf32, #tpu.memory_space<vmem>>, vector<1x32x32xf32>
    %158 = vector.shape_cast %157 : vector<1x32x32xf32> to vector<32x32xf32>
    %c1_66 = arith.constant 1 : index
    %c0_67 = arith.constant 0 : index
    %c0_68 = arith.constant 0 : index
    %159 = vector.load %arg6[%c1_66, %c0_67, %c0_68] : memref<2x32x64xf32, #tpu.memory_space<vmem>>, vector<1x32x64xf32>
    %160 = vector.shape_cast %159 : vector<1x32x64xf32> to vector<32x64xf32>
    %c1_69 = arith.constant 1 : index
    %c0_70 = arith.constant 0 : index
    %c0_71 = arith.constant 0 : index
    %161 = vector.load %arg7[%c1_69, %c0_70, %c0_71] : memref<2x1x64xf32, #tpu.memory_space<vmem>>, vector<1x1x64xf32>
    %162 = vector.shape_cast %161 : vector<1x1x64xf32> to vector<1x64xf32>
    %c1_72 = arith.constant 1 : index
    %c0_73 = arith.constant 0 : index
    %c0_74 = arith.constant 0 : index
    %163 = vector.load %arg8[%c1_72, %c0_73, %c0_74] : memref<2x64x32xf32, #tpu.memory_space<vmem>>, vector<1x64x32xf32>
    %164 = vector.shape_cast %163 : vector<1x64x32xf32> to vector<64x32xf32>
    %c1_75 = arith.constant 1 : index
    %c0_76 = arith.constant 0 : index
    %c0_77 = arith.constant 0 : index
    %165 = vector.load %arg9[%c1_75, %c0_76, %c0_77] : memref<2x6x32xf32, #tpu.memory_space<vmem>>, vector<1x6x32xf32>
    %166 = vector.shape_cast %165 : vector<1x6x32xf32> to vector<6x32xf32>
    %167 = vector.extract_strided_slice %166 {offsets = [0, 0], sizes = [1, 32], strides = [1, 1]} : vector<6x32xf32> to vector<1x32xf32>
    %168 = vector.extract_strided_slice %166 {offsets = [1, 0], sizes = [1, 32], strides = [1, 1]} : vector<6x32xf32> to vector<1x32xf32>
    %169 = vector.extract_strided_slice %166 {offsets = [2, 0], sizes = [1, 32], strides = [1, 1]} : vector<6x32xf32> to vector<1x32xf32>
    %170 = vector.extract_strided_slice %166 {offsets = [3, 0], sizes = [1, 32], strides = [1, 1]} : vector<6x32xf32> to vector<1x32xf32>
    %171 = vector.extract_strided_slice %166 {offsets = [4, 0], sizes = [1, 32], strides = [1, 1]} : vector<6x32xf32> to vector<1x32xf32>
    %172 = vector.extract_strided_slice %166 {offsets = [5, 0], sizes = [1, 32], strides = [1, 1]} : vector<6x32xf32> to vector<1x32xf32>
    %cst_78 = arith.constant dense<0.000000e+00> : vector<8x96xf32>
    %173 = tpu.matmul %152, %154, %cst_78 {dimension_numbers = #tpu.dot_dimension_numbers<[1], [0], [0], [1], [0, 0, 1, 1], [], []>} : vector<8x32xf32>, vector<32x96xf32>, vector<8x96xf32> -> vector<8x96xf32>
    %174 = vector.broadcast %156 : vector<1x96xf32> to vector<8x96xf32>
    %175 = arith.addf %173, %174 : vector<8x96xf32>
    %176 = vector.extract_strided_slice %175 {offsets = [0, 0], sizes = [8, 8], strides = [1, 1]} : vector<8x96xf32> to vector<8x8xf32>
    %177 = vector.extract_strided_slice %175 {offsets = [0, 32], sizes = [8, 8], strides = [1, 1]} : vector<8x96xf32> to vector<8x8xf32>
    %178 = vector.extract_strided_slice %175 {offsets = [0, 64], sizes = [8, 8], strides = [1, 1]} : vector<8x96xf32> to vector<8x8xf32>
    %cst_79 = arith.constant dense<0.000000e+00> : vector<8x8xf32>
    %179 = tpu.matmul %176, %177, %cst_79 {dimension_numbers = #tpu.dot_dimension_numbers<[1], [1], [0], [0], [0, 0, 1, 0], [], []>} : vector<8x8xf32>, vector<8x8xf32>, vector<8x8xf32> -> vector<8x8xf32>
    %180 = arith.addf %179, %11 : vector<8x8xf32>
    %cst_80 = arith.constant dense<0xFF800000> : vector<8xf32>
    %181 = vector.multi_reduction <maximumf>, %180, %cst_80 [1] : vector<8x8xf32> to vector<8xf32>
    %182 = vector.shape_cast %181 : vector<8xf32> to vector<8x1xf32>
    %183 = vector.broadcast %182 : vector<8x1xf32> to vector<8x8xf32>
    %184 = arith.subf %180, %183 : vector<8x8xf32>
    %185 = math.exp %184 : vector<8x8xf32>
    %cst_81 = arith.constant dense<0.000000e+00> : vector<8xf32>
    %186 = vector.multi_reduction <add>, %185, %cst_81 [1] : vector<8x8xf32> to vector<8xf32>
    %187 = vector.shape_cast %186 : vector<8xf32> to vector<8x1xf32>
    %188 = vector.broadcast %187 : vector<8x1xf32> to vector<8x8xf32>
    %189 = arith.divf %185, %188 : vector<8x8xf32>
    %cst_82 = arith.constant dense<0.000000e+00> : vector<8x8xf32>
    %190 = tpu.matmul %189, %178, %cst_82 {dimension_numbers = #tpu.dot_dimension_numbers<[1], [0], [0], [1], [0, 0, 1, 1], [], []>} : vector<8x8xf32>, vector<8x8xf32>, vector<8x8xf32> -> vector<8x8xf32>
    %191 = vector.extract_strided_slice %175 {offsets = [0, 8], sizes = [8, 8], strides = [1, 1]} : vector<8x96xf32> to vector<8x8xf32>
    %192 = vector.extract_strided_slice %175 {offsets = [0, 40], sizes = [8, 8], strides = [1, 1]} : vector<8x96xf32> to vector<8x8xf32>
    %193 = vector.extract_strided_slice %175 {offsets = [0, 72], sizes = [8, 8], strides = [1, 1]} : vector<8x96xf32> to vector<8x8xf32>
    %cst_83 = arith.constant dense<0.000000e+00> : vector<8x8xf32>
    %194 = tpu.matmul %191, %192, %cst_83 {dimension_numbers = #tpu.dot_dimension_numbers<[1], [1], [0], [0], [0, 0, 1, 0], [], []>} : vector<8x8xf32>, vector<8x8xf32>, vector<8x8xf32> -> vector<8x8xf32>
    %195 = arith.addf %194, %11 : vector<8x8xf32>
    %cst_84 = arith.constant dense<0xFF800000> : vector<8xf32>
    %196 = vector.multi_reduction <maximumf>, %195, %cst_84 [1] : vector<8x8xf32> to vector<8xf32>
    %197 = vector.shape_cast %196 : vector<8xf32> to vector<8x1xf32>
    %198 = vector.broadcast %197 : vector<8x1xf32> to vector<8x8xf32>
    %199 = arith.subf %195, %198 : vector<8x8xf32>
    %200 = math.exp %199 : vector<8x8xf32>
    %cst_85 = arith.constant dense<0.000000e+00> : vector<8xf32>
    %201 = vector.multi_reduction <add>, %200, %cst_85 [1] : vector<8x8xf32> to vector<8xf32>
    %202 = vector.shape_cast %201 : vector<8xf32> to vector<8x1xf32>
    %203 = vector.broadcast %202 : vector<8x1xf32> to vector<8x8xf32>
    %204 = arith.divf %200, %203 : vector<8x8xf32>
    %cst_86 = arith.constant dense<0.000000e+00> : vector<8x8xf32>
    %205 = tpu.matmul %204, %193, %cst_86 {dimension_numbers = #tpu.dot_dimension_numbers<[1], [0], [0], [1], [0, 0, 1, 1], [], []>} : vector<8x8xf32>, vector<8x8xf32>, vector<8x8xf32> -> vector<8x8xf32>
    %206 = vector.extract_strided_slice %175 {offsets = [0, 16], sizes = [8, 8], strides = [1, 1]} : vector<8x96xf32> to vector<8x8xf32>
    %207 = vector.extract_strided_slice %175 {offsets = [0, 48], sizes = [8, 8], strides = [1, 1]} : vector<8x96xf32> to vector<8x8xf32>
    %208 = vector.extract_strided_slice %175 {offsets = [0, 80], sizes = [8, 8], strides = [1, 1]} : vector<8x96xf32> to vector<8x8xf32>
    %cst_87 = arith.constant dense<0.000000e+00> : vector<8x8xf32>
    %209 = tpu.matmul %206, %207, %cst_87 {dimension_numbers = #tpu.dot_dimension_numbers<[1], [1], [0], [0], [0, 0, 1, 0], [], []>} : vector<8x8xf32>, vector<8x8xf32>, vector<8x8xf32> -> vector<8x8xf32>
    %210 = arith.addf %209, %11 : vector<8x8xf32>
    %cst_88 = arith.constant dense<0xFF800000> : vector<8xf32>
    %211 = vector.multi_reduction <maximumf>, %210, %cst_88 [1] : vector<8x8xf32> to vector<8xf32>
    %212 = vector.shape_cast %211 : vector<8xf32> to vector<8x1xf32>
    %213 = vector.broadcast %212 : vector<8x1xf32> to vector<8x8xf32>
    %214 = arith.subf %210, %213 : vector<8x8xf32>
    %215 = math.exp %214 : vector<8x8xf32>
    %cst_89 = arith.constant dense<0.000000e+00> : vector<8xf32>
    %216 = vector.multi_reduction <add>, %215, %cst_89 [1] : vector<8x8xf32> to vector<8xf32>
    %217 = vector.shape_cast %216 : vector<8xf32> to vector<8x1xf32>
    %218 = vector.broadcast %217 : vector<8x1xf32> to vector<8x8xf32>
    %219 = arith.divf %215, %218 : vector<8x8xf32>
    %cst_90 = arith.constant dense<0.000000e+00> : vector<8x8xf32>
    %220 = tpu.matmul %219, %208, %cst_90 {dimension_numbers = #tpu.dot_dimension_numbers<[1], [0], [0], [1], [0, 0, 1, 1], [], []>} : vector<8x8xf32>, vector<8x8xf32>, vector<8x8xf32> -> vector<8x8xf32>
    %221 = vector.extract_strided_slice %175 {offsets = [0, 24], sizes = [8, 8], strides = [1, 1]} : vector<8x96xf32> to vector<8x8xf32>
    %222 = vector.extract_strided_slice %175 {offsets = [0, 56], sizes = [8, 8], strides = [1, 1]} : vector<8x96xf32> to vector<8x8xf32>
    %223 = vector.extract_strided_slice %175 {offsets = [0, 88], sizes = [8, 8], strides = [1, 1]} : vector<8x96xf32> to vector<8x8xf32>
    %cst_91 = arith.constant dense<0.000000e+00> : vector<8x8xf32>
    %224 = tpu.matmul %221, %222, %cst_91 {dimension_numbers = #tpu.dot_dimension_numbers<[1], [1], [0], [0], [0, 0, 1, 0], [], []>} : vector<8x8xf32>, vector<8x8xf32>, vector<8x8xf32> -> vector<8x8xf32>
    %225 = arith.addf %224, %11 : vector<8x8xf32>
    %cst_92 = arith.constant dense<0xFF800000> : vector<8xf32>
    %226 = vector.multi_reduction <maximumf>, %225, %cst_92 [1] : vector<8x8xf32> to vector<8xf32>
    %227 = vector.shape_cast %226 : vector<8xf32> to vector<8x1xf32>
    %228 = vector.broadcast %227 : vector<8x1xf32> to vector<8x8xf32>
    %229 = arith.subf %225, %228 : vector<8x8xf32>
    %230 = math.exp %229 : vector<8x8xf32>
    %cst_93 = arith.constant dense<0.000000e+00> : vector<8xf32>
    %231 = vector.multi_reduction <add>, %230, %cst_93 [1] : vector<8x8xf32> to vector<8xf32>
    %232 = vector.shape_cast %231 : vector<8xf32> to vector<8x1xf32>
    %233 = vector.broadcast %232 : vector<8x1xf32> to vector<8x8xf32>
    %234 = arith.divf %230, %233 : vector<8x8xf32>
    %cst_94 = arith.constant dense<0.000000e+00> : vector<8x8xf32>
    %235 = tpu.matmul %234, %223, %cst_94 {dimension_numbers = #tpu.dot_dimension_numbers<[1], [0], [0], [1], [0, 0, 1, 1], [], []>} : vector<8x8xf32>, vector<8x8xf32>, vector<8x8xf32> -> vector<8x8xf32>
    %236 = tpu.concatenate %190, %205, %220, %235 in 1 : vector<8x8xf32>, vector<8x8xf32>, vector<8x8xf32>, vector<8x8xf32> -> vector<8x32xf32>
    %cst_95 = arith.constant dense<0.000000e+00> : vector<8x32xf32>
    %237 = tpu.matmul %236, %158, %cst_95 {dimension_numbers = #tpu.dot_dimension_numbers<[1], [0], [0], [1], [0, 0, 1, 1], [], []>} : vector<8x32xf32>, vector<32x32xf32>, vector<8x32xf32> -> vector<8x32xf32>
    %238 = vector.broadcast %167 : vector<1x32xf32> to vector<8x32xf32>
    %239 = arith.addf %237, %238 : vector<8x32xf32>
    %240 = arith.addf %152, %239 : vector<8x32xf32>
    %cst_96 = arith.constant dense<0.000000e+00> : vector<8xf32>
    %241 = vector.multi_reduction <add>, %240, %cst_96 [1] : vector<8x32xf32> to vector<8xf32>
    %242 = vector.shape_cast %241 : vector<8xf32> to vector<8x1xf32>
    %cst_97 = arith.constant 3.200000e+01 : f32
    %243 = vector.broadcast %cst_97 : f32 to vector<8x1xf32>
    %244 = arith.divf %242, %243 : vector<8x1xf32>
    %245 = vector.broadcast %244 : vector<8x1xf32> to vector<8x32xf32>
    %246 = arith.subf %240, %245 : vector<8x32xf32>
    %247 = arith.mulf %246, %246 : vector<8x32xf32>
    %cst_98 = arith.constant dense<0.000000e+00> : vector<8xf32>
    %248 = vector.multi_reduction <add>, %247, %cst_98 [1] : vector<8x32xf32> to vector<8xf32>
    %249 = vector.shape_cast %248 : vector<8xf32> to vector<8x1xf32>
    %cst_99 = arith.constant 3.200000e+01 : f32
    %250 = vector.broadcast %cst_99 : f32 to vector<8x1xf32>
    %251 = arith.divf %249, %250 : vector<8x1xf32>
    %252 = vector.broadcast %244 : vector<8x1xf32> to vector<8x32xf32>
    %253 = arith.subf %240, %252 : vector<8x32xf32>
    %cst_100 = arith.constant 9.99999974E-6 : f32
    %254 = vector.broadcast %cst_100 : f32 to vector<8x1xf32>
    %255 = arith.addf %251, %254 : vector<8x1xf32>
    %256 = math.rsqrt %255 : vector<8x1xf32>
    %257 = vector.broadcast %256 : vector<8x1xf32> to vector<8x32xf32>
    %258 = arith.mulf %253, %257 : vector<8x32xf32>
    %259 = vector.broadcast %169 : vector<1x32xf32> to vector<8x32xf32>
    %260 = arith.mulf %258, %259 : vector<8x32xf32>
    %261 = vector.broadcast %170 : vector<1x32xf32> to vector<8x32xf32>
    %262 = arith.addf %260, %261 : vector<8x32xf32>
    %cst_101 = arith.constant dense<0.000000e+00> : vector<8x64xf32>
    %263 = tpu.matmul %262, %160, %cst_101 {dimension_numbers = #tpu.dot_dimension_numbers<[1], [0], [0], [1], [0, 0, 1, 1], [], []>} : vector<8x32xf32>, vector<32x64xf32>, vector<8x64xf32> -> vector<8x64xf32>
    %264 = vector.broadcast %162 : vector<1x64xf32> to vector<8x64xf32>
    %265 = arith.addf %263, %264 : vector<8x64xf32>
    %cst_102 = arith.constant 0.000000e+00 : f32
    %266 = vector.broadcast %cst_102 : f32 to vector<8x64xf32>
    %267 = arith.maximumf %265, %266 : vector<8x64xf32>
    %cst_103 = arith.constant dense<0.000000e+00> : vector<8x32xf32>
    %268 = tpu.matmul %267, %164, %cst_103 {dimension_numbers = #tpu.dot_dimension_numbers<[1], [0], [0], [1], [0, 0, 1, 1], [], []>} : vector<8x64xf32>, vector<64x32xf32>, vector<8x32xf32> -> vector<8x32xf32>
    %269 = vector.broadcast %168 : vector<1x32xf32> to vector<8x32xf32>
    %270 = arith.addf %268, %269 : vector<8x32xf32>
    %271 = arith.addf %262, %270 : vector<8x32xf32>
    %cst_104 = arith.constant dense<0.000000e+00> : vector<8xf32>
    %272 = vector.multi_reduction <add>, %271, %cst_104 [1] : vector<8x32xf32> to vector<8xf32>
    %273 = vector.shape_cast %272 : vector<8xf32> to vector<8x1xf32>
    %cst_105 = arith.constant 3.200000e+01 : f32
    %274 = vector.broadcast %cst_105 : f32 to vector<8x1xf32>
    %275 = arith.divf %273, %274 : vector<8x1xf32>
    %276 = vector.broadcast %275 : vector<8x1xf32> to vector<8x32xf32>
    %277 = arith.subf %271, %276 : vector<8x32xf32>
    %278 = arith.mulf %277, %277 : vector<8x32xf32>
    %cst_106 = arith.constant dense<0.000000e+00> : vector<8xf32>
    %279 = vector.multi_reduction <add>, %278, %cst_106 [1] : vector<8x32xf32> to vector<8xf32>
    %280 = vector.shape_cast %279 : vector<8xf32> to vector<8x1xf32>
    %cst_107 = arith.constant 3.200000e+01 : f32
    %281 = vector.broadcast %cst_107 : f32 to vector<8x1xf32>
    %282 = arith.divf %280, %281 : vector<8x1xf32>
    %283 = vector.broadcast %275 : vector<8x1xf32> to vector<8x32xf32>
    %284 = arith.subf %271, %283 : vector<8x32xf32>
    %cst_108 = arith.constant 9.99999974E-6 : f32
    %285 = vector.broadcast %cst_108 : f32 to vector<8x1xf32>
    %286 = arith.addf %282, %285 : vector<8x1xf32>
    %287 = math.rsqrt %286 : vector<8x1xf32>
    %288 = vector.broadcast %287 : vector<8x1xf32> to vector<8x32xf32>
    %289 = arith.mulf %284, %288 : vector<8x32xf32>
    %290 = vector.broadcast %171 : vector<1x32xf32> to vector<8x32xf32>
    %291 = arith.mulf %289, %290 : vector<8x32xf32>
    %292 = vector.broadcast %172 : vector<1x32xf32> to vector<8x32xf32>
    %293 = arith.addf %291, %292 : vector<8x32xf32>
    %c0_109 = arith.constant 0 : index
    %c0_110 = arith.constant 0 : index
    %294 = vector.load %arg10[%c0_109, %c0_110] : memref<32x128xf32, #tpu.memory_space<vmem>>, vector<32x128xf32>
    %cst_111 = arith.constant dense<0.000000e+00> : vector<8x128xf32>
    %295 = tpu.matmul %293, %294, %cst_111 {dimension_numbers = #tpu.dot_dimension_numbers<[1], [0], [0], [1], [0, 0, 1, 1], [], []>} : vector<8x32xf32>, vector<32x128xf32>, vector<8x128xf32> -> vector<8x128xf32>
    %c0_112 = arith.constant 0 : index
    %c0_113 = arith.constant 0 : index
    %296 = vector.load %arg11[%c0_112, %c0_113] : memref<1x128xf32, #tpu.memory_space<vmem>>, vector<1x128xf32>
    %297 = vector.broadcast %296 : vector<1x128xf32> to vector<8x128xf32>
    %298 = arith.addf %295, %297 : vector<8x128xf32>
    %c0_114 = arith.constant 0 : index
    %c0_115 = arith.constant 0 : index
    %c0_116 = arith.constant 0 : index
    %299 = vector.load %arg12[%c0_114, %c0_115, %c0_116] : memref<1x8x128xf32, #tpu.memory_space<vmem>>, vector<1x8x128xf32>
    %300 = vector.shape_cast %299 : vector<1x8x128xf32> to vector<8x128xf32>
    %301 = vector.shape_cast %298 : vector<8x128xf32> to vector<1x8x128xf32>
    tpu.vector_store %arg12[%c0_114, %c0_115, %c0_116], %301 {strides = array<i32>} : memref<1x8x128xf32, #tpu.memory_space<vmem>>, vector<1x8x128xf32>,
    return
  }
  func.func @transform_0(%arg0: i32) -> (i32, i32, i32) {
    %c0_i32 = arith.constant 0 : i32
    %c0_i32_0 = arith.constant 0 : i32
    %c0_i32_1 = arith.constant 0 : i32
    return %arg0, %c0_i32, %c0_i32_0 : i32, i32, i32
  }
  func.func @transform_1(%arg0: i32) -> (i32, i32, i32) {
    %c0_i32 = arith.constant 0 : i32
    %c0_i32_0 = arith.constant 0 : i32
    %c0_i32_1 = arith.constant 0 : i32
    return %arg0, %c0_i32, %c0_i32_0 : i32, i32, i32
  }
  func.func @transform_2(%arg0: i32) -> (i32, i32, i32) {
    %c0_i32 = arith.constant 0 : i32
    %c0_i32_0 = arith.constant 0 : i32
    %c0_i32_1 = arith.constant 0 : i32
    %c0_i32_2 = arith.constant 0 : i32
    return %c0_i32, %c0_i32_0, %c0_i32_1 : i32, i32, i32
  }
  func.func @transform_3(%arg0: i32) -> (i32, i32, i32) {
    %c0_i32 = arith.constant 0 : i32
    %c0_i32_0 = arith.constant 0 : i32
    %c0_i32_1 = arith.constant 0 : i32
    %c0_i32_2 = arith.constant 0 : i32
    return %c0_i32, %c0_i32_0, %c0_i32_1 : i32, i32, i32
  }
  func.func @transform_4(%arg0: i32) -> (i32, i32, i32) {
    %c0_i32 = arith.constant 0 : i32
    %c0_i32_0 = arith.constant 0 : i32
    %c0_i32_1 = arith.constant 0 : i32
    %c0_i32_2 = arith.constant 0 : i32
    return %c0_i32, %c0_i32_0, %c0_i32_1 : i32, i32, i32
  }
  func.func @transform_5(%arg0: i32) -> (i32, i32, i32) {
    %c0_i32 = arith.constant 0 : i32
    %c0_i32_0 = arith.constant 0 : i32
    %c0_i32_1 = arith.constant 0 : i32
    %c0_i32_2 = arith.constant 0 : i32
    return %c0_i32, %c0_i32_0, %c0_i32_1 : i32, i32, i32
  }
  func.func @transform_6(%arg0: i32) -> (i32, i32, i32) {
    %c0_i32 = arith.constant 0 : i32
    %c0_i32_0 = arith.constant 0 : i32
    %c0_i32_1 = arith.constant 0 : i32
    %c0_i32_2 = arith.constant 0 : i32
    return %c0_i32, %c0_i32_0, %c0_i32_1 : i32, i32, i32
  }
  func.func @transform_7(%arg0: i32) -> (i32, i32, i32) {
    %c0_i32 = arith.constant 0 : i32
    %c0_i32_0 = arith.constant 0 : i32
    %c0_i32_1 = arith.constant 0 : i32
    %c0_i32_2 = arith.constant 0 : i32
    return %c0_i32, %c0_i32_0, %c0_i32_1 : i32, i32, i32
  }
  func.func @transform_8(%arg0: i32) -> (i32, i32, i32) {
    %c0_i32 = arith.constant 0 : i32
    %c0_i32_0 = arith.constant 0 : i32
    %c0_i32_1 = arith.constant 0 : i32
    %c0_i32_2 = arith.constant 0 : i32
    return %c0_i32, %c0_i32_0, %c0_i32_1 : i32, i32, i32
  }
  func.func @transform_9(%arg0: i32) -> (i32, i32) {
    %c0_i32 = arith.constant 0 : i32
    %c0_i32_0 = arith.constant 0 : i32
    %c0_i32_1 = arith.constant 0 : i32
    return %c0_i32, %c0_i32_0 : i32, i32
  }
  func.func @transform_10(%arg0: i32) -> (i32, i32) {
    %c0_i32 = arith.constant 0 : i32
    %c0_i32_0 = arith.constant 0 : i32
    %c0_i32_1 = arith.constant 0 : i32
    return %c0_i32, %c0_i32_0 : i32, i32
  }
  func.func @transform_11(%arg0: i32) -> (i32, i32, i32) {
    %c0_i32 = arith.constant 0 : i32
    %c0_i32_0 = arith.constant 0 : i32
    %c0_i32_1 = arith.constant 0 : i32
    return %arg0, %c0_i32, %c0_i32_0 : i32, i32, i32
  }
}

</mosaic_0001>

<llo_original>
// kernel: transformer_forward.1
$region0: #{transformer_forward.1}
  #allocation0 [shape = 'u32[]', space=smem, size = 0x4, offset = 0x4, fixed_abs, tag = 'smem constant byte address 0x4 - core index']
  #allocation1 [shape = 'u32[144,128]{1,0:T(1,128)}', space=vmem, size = 0x12000, scoped, tag = 'internal scratch']
  %s0 = inlined_call_operand.vmem [shape: f32[2,8,32], index: 0, kind: input, shape index: {}]
  %s1 = inlined_call_operand.vmem [shape: f32[2,1,32], index: 1, kind: input, shape index: {}]
  %s2 = inlined_call_operand.vmem [shape: f32[2,32,96], index: 2, kind: input, shape index: {}]
  %s3 = inlined_call_operand.vmem [shape: f32[2,1,96], index: 3, kind: input, shape index: {}]
  %s4 = inlined_call_operand.vmem [shape: f32[2,32,32], index: 4, kind: input, shape index: {}]
  %s5 = inlined_call_operand.vmem [shape: f32[2,32,64], index: 5, kind: input, shape index: {}]
  %s6 = inlined_call_operand.vmem [shape: f32[2,1,64], index: 6, kind: input, shape index: {}]
  %s7 = inlined_call_operand.vmem [shape: f32[2,64,32], index: 7, kind: input, shape index: {}]
  %s8 = inlined_call_operand.vmem [shape: f32[2,6,32], index: 8, kind: input, shape index: {}]
  %s9 = inlined_call_operand.vmem [shape: f32[32,128], index: 9, kind: input, shape index: {}]
  %s10 = inlined_call_operand.vmem [shape: f32[1,128], index: 10, kind: input, shape index: {}]
  %s11 = inlined_call_operand.hbm [shape: f32[2,8,128], index: 11, kind: output, shape index: {}]
  %s12 = sld [smem:[#allocation0]]
  $region77: #{transformer_forward.1} parent=0
    _
  %s14 = ssub.s32 1, %s12
  %s15 = scalar_select 0, %s14, %s12
  $region1: #{transformer_forward.1} parent=0
    #allocation2 [shape = 'u8[8192]{0}', space=vmem, size = 0x2000, scoped, tag = 'output window, operand 0']
    #allocation3 [shape = 's32[2]{0}', space=sflag, size = 0x8, scoped, tag = 'scoped memory for transformer_forward.1']
    %16 = vsyncpa [#allocation3], 0
    %s17 = scalar_lea.sflag [#allocation3], 1
    %18 = vsyncpa %s17, 0
    loop: start=0, step=1, limit=4
    $region2: #{transformer_forward.1} parent=1 // loop_pre_header
      _
    $region3: #{transformer_forward.1} parent=1 // loop_header
      %s20 = sphi 0, %s24
      %p21 = scmp.ge.s32.totalorder %s20, 4
      %s30 = sphi 0, %s32
      %s33 = sphi 0, %s30
      %s34 = sphi 0, %s33
      %s50 = sphi 0, %s34
      %s56 = sphi 0, %s58
      %s59 = sphi 0, %s56
      %s60 = sphi 0, %s59
      %s76 = sphi 0, %s60
      %s80 = sphi 0, %s80
      %s82 = sphi 0, %s80
      %s83 = sphi 0, %s82
      %s97 = sphi 0, %s83
      %s101 = sphi 0, %s101
      %s103 = sphi 0, %s101
      %s104 = sphi 0, %s103
      %s118 = sphi 0, %s104
      %s122 = sphi 0, %s122
      %s124 = sphi 0, %s122
      %s125 = sphi 0, %s124
      %s139 = sphi 0, %s125
      %s143 = sphi 0, %s143
      %s145 = sphi 0, %s143
      %s146 = sphi 0, %s145
      %s160 = sphi 0, %s146
      %s164 = sphi 0, %s164
      %s166 = sphi 0, %s164
      %s167 = sphi 0, %s166
      %s181 = sphi 0, %s167
      %s185 = sphi 0, %s185
      %s187 = sphi 0, %s185
      %s188 = sphi 0, %s187
      %s202 = sphi 0, %s188
      %s206 = sphi 0, %s206
      %s208 = sphi 0, %s206
      %s209 = sphi 0, %s208
      %s223 = sphi 0, %s209
      %s227 = sphi 0, %s227
      %s229 = sphi 0, %s227
      %s230 = sphi 0, %s229
      %s244 = sphi 0, %s230
      %s248 = sphi 0, %s248
      %s250 = sphi 0, %s248
      %s251 = sphi 0, %s250
      %s265 = sphi 0, %s251
      %s271 = sphi 0, %s273
      %s274 = sphi 0, %s271
      %s275 = sphi 0, %s274
      %s291 = sphi 0, %s275
    $region4: #{transformer_forward.1} parent=1 // loop_header_branch
      %23 = sbr.rel (%p21) target = $region8
    $region5: #{transformer_forward.1} parent=1 // loop_body
      %s25 = ssub.s32 %s20, 1
      %s26 = ssub.s32 %s20, 2
      %s27 = sadd.s32 %s20, 1
      %s28 = ssub.s32 %s20, %s27
      %p29 = scmp.eq.s32.totalorder %s28, 0
      %s31 = sadd.s32 %s30, 1
      %s32 = scalar_select %p29, %s30, %s31
      %p35 = pneg %p29
      %p36 = scmp.eq.s32.totalorder %s20, 1
      %p37 = por %p35, %p36
      %p38 = scmp.ne.s32.totalorder %s30, %s33
      %p39 = scmp.eq.s32.totalorder %s20, 0
      %p40 = por %p38, %p39
      %p41 = scmp.ne.s32.totalorder %s30, %s33
      %p42 = scmp.eq.s32.totalorder %s25, 1
      %p43 = por %p41, %p42
      %p44 = scmp.ne.s32.totalorder %s33, %s34
      %p45 = scmp.eq.s32.totalorder %s25, 0
      %p46 = por %p44, %p45
      %p47 = scmp.ne.s32.totalorder %s33, %s34
      %p48 = scmp.eq.s32.totalorder %s26, 1
      %p49 = por %p47, %p48
      %p51 = scmp.ne.s32.totalorder %s34, %s50
      %p52 = scmp.eq.s32.totalorder %s26, 0
      %p53 = por %p51, %p52
      %s54 = ssub.s32 %s20, %s27
      %p55 = scmp.eq.s32.totalorder %s54, 0
      %s57 = sadd.s32 %s56, 1
      %s58 = scalar_select %p55, %s56, %s57
      %p61 = pneg %p55
      %p62 = scmp.eq.s32.totalorder %s20, 1
      %p63 = por %p61, %p62
      %p64 = scmp.ne.s32.totalorder %s56, %s59
      %p65 = scmp.eq.s32.totalorder %s20, 0
      %p66 = por %p64, %p65
      %p67 = scmp.ne.s32.totalorder %s56, %s59
      %p68 = scmp.eq.s32.totalorder %s25, 1
      %p69 = por %p67, %p68
      %p70 = scmp.ne.s32.totalorder %s59, %s60
      %p71 = scmp.eq.s32.totalorder %s25, 0
      %p72 = por %p70, %p71
      %p73 = scmp.ne.s32.totalorder %s59, %s60
      %p74 = scmp.eq.s32.totalorder %s26, 1
      %p75 = por %p73, %p74
      %p77 = scmp.ne.s32.totalorder %s60, %s76
      %p78 = scmp.eq.s32.totalorder %s26, 0
      %p79 = por %p77, %p78
      %s81 = sadd.s32 %s80, 1
      %p84 = scmp.eq.s32.totalorder %s20, 1
      %p85 = scmp.ne.s32.totalorder %s80, %s82
      %p86 = scmp.eq.s32.totalorder %s20, 0
      %p87 = por %p85, %p86
      %p88 = scmp.ne.s32.totalorder %s80, %s82
      %p89 = scmp.eq.s32.totalorder %s25, 1
      %p90 = por %p88, %p89
      %p91 = scmp.ne.s32.totalorder %s82, %s83
      %p92 = scmp.eq.s32.totalorder %s25, 0
      %p93 = por %p91, %p92
      %p94 = scmp.ne.s32.totalorder %s82, %s83
      %p95 = scmp.eq.s32.totalorder %s26, 1
      %p96 = por %p94, %p95
      %p98 = scmp.ne.s32.totalorder %s83, %s97
      %p99 = scmp.eq.s32.totalorder %s26, 0
      %p100 = por %p98, %p99
      %s102 = sadd.s32 %s101, 1
      %p105 = scmp.eq.s32.totalorder %s20, 1
      %p106 = scmp.ne.s32.totalorder %s101, %s103
      %p107 = scmp.eq.s32.totalorder %s20, 0
      %p108 = por %p106, %p107
      %p109 = scmp.ne.s32.totalorder %s101, %s103
      %p110 = scmp.eq.s32.totalorder %s25, 1
      %p111 = por %p109, %p110
      %p112 = scmp.ne.s32.totalorder %s103, %s104
      %p113 = scmp.eq.s32.totalorder %s25, 0
      %p114 = por %p112, %p113
      %p115 = scmp.ne.s32.totalorder %s103, %s104
      %p116 = scmp.eq.s32.totalorder %s26, 1
      %p117 = por %p115, %p116
      %p119 = scmp.ne.s32.totalorder %s104, %s118
      %p120 = scmp.eq.s32.totalorder %s26, 0
      %p121 = por %p119, %p120
      %s123 = sadd.s32 %s122, 1
      %p126 = scmp.eq.s32.totalorder %s20, 1
      %p127 = scmp.ne.s32.totalorder %s122, %s124
      %p128 = scmp.eq.s32.totalorder %s20, 0
      %p129 = por %p127, %p128
      %p130 = scmp.ne.s32.totalorder %s122, %s124
      %p131 = scmp.eq.s32.totalorder %s25, 1
      %p132 = por %p130, %p131
      %p133 = scmp.ne.s32.totalorder %s124, %s125
      %p134 = scmp.eq.s32.totalorder %s25, 0
      %p135 = por %p133, %p134
      %p136 = scmp.ne.s32.totalorder %s124, %s125
      %p137 = scmp.eq.s32.totalorder %s26, 1
      %p138 = por %p136, %p137
      %p140 = scmp.ne.s32.totalorder %s125, %s139
      %p141 = scmp.eq.s32.totalorder %s26, 0
      %p142 = por %p140, %p141
      %s144 = sadd.s32 %s143, 1
      %p147 = scmp.eq.s32.totalorder %s20, 1
      %p148 = scmp.ne.s32.totalorder %s143, %s145
      %p149 = scmp.eq.s32.totalorder %s20, 0
      %p150 = por %p148, %p149
      %p151 = scmp.ne.s32.totalorder %s143, %s145
      %p152 = scmp.eq.s32.totalorder %s25, 1
      %p153 = por %p151, %p152
      %p154 = scmp.ne.s32.totalorder %s145, %s146
      %p155 = scmp.eq.s32.totalorder %s25, 0
      %p156 = por %p154, %p155
      %p157 = scmp.ne.s32.totalorder %s145, %s146
      %p158 = scmp.eq.s32.totalorder %s26, 1
      %p159 = por %p157, %p158
      %p161 = scmp.ne.s32.totalorder %s146, %s160
      %p162 = scmp.eq.s32.totalorder %s26, 0
      %p163 = por %p161, %p162
      %s165 = sadd.s32 %s164, 1
      %p168 = scmp.eq.s32.totalorder %s20, 1
      %p169 = scmp.ne.s32.totalorder %s164, %s166
      %p170 = scmp.eq.s32.totalorder %s20, 0
      %p171 = por %p169, %p170
      %p172 = scmp.ne.s32.totalorder %s164, %s166
      %p173 = scmp.eq.s32.totalorder %s25, 1
      %p174 = por %p172, %p173
      %p175 = scmp.ne.s32.totalorder %s166, %s167
      %p176 = scmp.eq.s32.totalorder %s25, 0
      %p177 = por %p175, %p176
      %p178 = scmp.ne.s32.totalorder %s166, %s167
      %p179 = scmp.eq.s32.totalorder %s26, 1
      %p180 = por %p178, %p179
      %p182 = scmp.ne.s32.totalorder %s167, %s181
      %p183 = scmp.eq.s32.totalorder %s26, 0
      %p184 = por %p182, %p183
      %s186 = sadd.s32 %s185, 1
      %p189 = scmp.eq.s32.totalorder %s20, 1
      %p190 = scmp.ne.s32.totalorder %s185, %s187
      %p191 = scmp.eq.s32.totalorder %s20, 0
      %p192 = por %p190, %p191
      %p193 = scmp.ne.s32.totalorder %s185, %s187
      %p194 = scmp.eq.s32.totalorder %s25, 1
      %p195 = por %p193, %p194
      %p196 = scmp.ne.s32.totalorder %s187, %s188
      %p197 = scmp.eq.s32.totalorder %s25, 0
      %p198 = por %p196, %p197
      %p199 = scmp.ne.s32.totalorder %s187, %s188
      %p200 = scmp.eq.s32.totalorder %s26, 1
      %p201 = por %p199, %p200
      %p203 = scmp.ne.s32.totalorder %s188, %s202
      %p204 = scmp.eq.s32.totalorder %s26, 0
      %p205 = por %p203, %p204
      %s207 = sadd.s32 %s206, 1
      %p210 = scmp.eq.s32.totalorder %s20, 1
      %p211 = scmp.ne.s32.totalorder %s206, %s208
      %p212 = scmp.eq.s32.totalorder %s20, 0
      %p213 = por %p211, %p212
      %p214 = scmp.ne.s32.totalorder %s206, %s208
      %p215 = scmp.eq.s32.totalorder %s25, 1
      %p216 = por %p214, %p215
      %p217 = scmp.ne.s32.totalorder %s208, %s209
      %p218 = scmp.eq.s32.totalorder %s25, 0
      %p219 = por %p217, %p218
      %p220 = scmp.ne.s32.totalorder %s208, %s209
      %p221 = scmp.eq.s32.totalorder %s26, 1
      %p222 = por %p220, %p221
      %p224 = scmp.ne.s32.totalorder %s209, %s223
      %p225 = scmp.eq.s32.totalorder %s26, 0
      %p226 = por %p224, %p225
      %s228 = sadd.s32 %s227, 1
      %p231 = scmp.eq.s32.totalorder %s20, 1
      %p232 = scmp.ne.s32.totalorder %s227, %s229
      %p233 = scmp.eq.s32.totalorder %s20, 0
      %p234 = por %p232, %p233
      %p235 = scmp.ne.s32.totalorder %s227, %s229
      %p236 = scmp.eq.s32.totalorder %s25, 1
      %p237 = por %p235, %p236
      %p238 = scmp.ne.s32.totalorder %s229, %s230
      %p239 = scmp.eq.s32.totalorder %s25, 0
      %p240 = por %p238, %p239
      %p241 = scmp.ne.s32.totalorder %s229, %s230
      %p242 = scmp.eq.s32.totalorder %s26, 1
      %p243 = por %p241, %p242
      %p245 = scmp.ne.s32.totalorder %s230, %s244
      %p246 = scmp.eq.s32.totalorder %s26, 0
      %p247 = por %p245, %p246
      %s249 = sadd.s32 %s248, 1
      %p252 = scmp.eq.s32.totalorder %s20, 1
      %p253 = scmp.ne.s32.totalorder %s248, %s250
      %p254 = scmp.eq.s32.totalorder %s20, 0
      %p255 = por %p253, %p254
      %p256 = scmp.ne.s32.totalorder %s248, %s250
      %p257 = scmp.eq.s32.totalorder %s25, 1
      %p258 = por %p256, %p257
      %p259 = scmp.ne.s32.totalorder %s250, %s251
      %p260 = scmp.eq.s32.totalorder %s25, 0
      %p261 = por %p259, %p260
      %p262 = scmp.ne.s32.totalorder %s250, %s251
      %p263 = scmp.eq.s32.totalorder %s26, 1
      %p264 = por %p262, %p263
      %p266 = scmp.ne.s32.totalorder %s251, %s265
      %p267 = scmp.eq.s32.totalorder %s26, 0
      %p268 = por %p266, %p267
      %s269 = ssub.s32 %s20, %s27
      %p270 = scmp.eq.s32.totalorder %s269, 0
      %s272 = sadd.s32 %s271, 1
      %s273 = scalar_select %p270, %s271, %s272
      %p276 = pneg %p270
      %p277 = scmp.eq.s32.totalorder %s20, 1
      %p278 = por %p276, %p277
      %p279 = scmp.ne.s32.totalorder %s271, %s274
      %p280 = scmp.eq.s32.totalorder %s20, 0
      %p281 = por %p279, %p280
      %p282 = scmp.ne.s32.totalorder %s271, %s274
      %p283 = scmp.eq.s32.totalorder %s25, 1
      %p284 = por %p282, %p283
      %p285 = scmp.ne.s32.totalorder %s274, %s275
      %p286 = scmp.eq.s32.totalorder %s25, 0
      %p287 = por %p285, %p286
      %p288 = scmp.ne.s32.totalorder %s274, %s275
      %p289 = scmp.eq.s32.totalorder %s26, 1
      %p290 = por %p288, %p289
      %p292 = scmp.ne.s32.totalorder %s275, %s291
      %p293 = scmp.eq.s32.totalorder %s26, 0
      %p294 = por %p292, %p293
      %p295 = scmp.le.s32.totalorder 1, %s20
      %p296 = scmp.lt.s32.totalorder %s20, 3
      %p297 = pnand %p295, %p296
      %p298 = pneg %p297
      // Predicated region
      $region9: #{transformer_forward.1} parent=5 // pred_check
        _
      $region10: #{transformer_forward.1} parent=5 // pred_check_branch
        %300 = sbr.rel (%p297) target = $region12
      $region11: #{transformer_forward.1} parent=5 // pred_region
        %s301 = ssub.s32 %s20, 1
        // Predicated region
        $region13: #{transformer_forward.1} parent=11 // pred_check
          %p302 = pneg %p93
        $region14: #{transformer_forward.1} parent=11 // pred_check_branch
          %304 = sbr.rel (%p302) target = $region16
        $region15: #{transformer_forward.1} parent=11 // pred_region
          _
        $region16: #{transformer_forward.1} parent=11 // pred_fallthru
          _
        // Predicated region
        $region17: #{transformer_forward.1} parent=11 // pred_check
          %p305 = pneg %p114
        $region18: #{transformer_forward.1} parent=11 // pred_check_branch
          %307 = sbr.rel (%p305) target = $region20
        $region19: #{transformer_forward.1} parent=11 // pred_region
          _
        $region20: #{transformer_forward.1} parent=11 // pred_fallthru
          _
        // Predicated region
        $region21: #{transformer_forward.1} parent=11 // pred_check
          %p308 = pneg %p135
        $region22: #{transformer_forward.1} parent=11 // pred_check_branch
          %310 = sbr.rel (%p308) target = $region24
        $region23: #{transformer_forward.1} parent=11 // pred_region
          _
        $region24: #{transformer_forward.1} parent=11 // pred_fallthru
          _
        // Predicated region
        $region25: #{transformer_forward.1} parent=11 // pred_check
          %p311 = pneg %p156
        $region26: #{transformer_forward.1} parent=11 // pred_check_branch
          %313 = sbr.rel (%p311) target = $region28
        $region27: #{transformer_forward.1} parent=11 // pred_region
          _
        $region28: #{transformer_forward.1} parent=11 // pred_fallthru
          _
        // Predicated region
        $region29: #{transformer_forward.1} parent=11 // pred_check
          %p314 = pneg %p177
        $region30: #{transformer_forward.1} parent=11 // pred_check_branch
          %316 = sbr.rel (%p314) target = $region32
        $region31: #{transformer_forward.1} parent=11 // pred_region
          _
        $region32: #{transformer_forward.1} parent=11 // pred_fallthru
          _
        // Predicated region
        $region33: #{transformer_forward.1} parent=11 // pred_check
          %p317 = pneg %p198
        $region34: #{transformer_forward.1} parent=11 // pred_check_branch
          %319 = sbr.rel (%p317) target = $region36
        $region35: #{transformer_forward.1} parent=11 // pred_region
          _
        $region36: #{transformer_forward.1} parent=11 // pred_fallthru
          _
        // Predicated region
        $region37: #{transformer_forward.1} parent=11 // pred_check
          %p320 = pneg %p219
        $region38: #{transformer_forward.1} parent=11 // pred_check_branch
          %322 = sbr.rel (%p320) target = $region40
        $region39: #{transformer_forward.1} parent=11 // pred_region
          _
        $region40: #{transformer_forward.1} parent=11 // pred_fallthru
          _
        // Predicated region
        $region41: #{transformer_forward.1} parent=11 // pred_check
          %p323 = pneg %p240
        $region42: #{transformer_forward.1} parent=11 // pred_check_branch
          %325 = sbr.rel (%p323) target = $region44
        $region43: #{transformer_forward.1} parent=11 // pred_region
          _
        $region44: #{transformer_forward.1} parent=11 // pred_fallthru
          _
        // Predicated region
        $region45: #{transformer_forward.1} parent=11 // pred_check
          %p326 = pneg %p261
        $region46: #{transformer_forward.1} parent=11 // pred_check_branch
          %328 = sbr.rel (%p326) target = $region48
        $region47: #{transformer_forward.1} parent=11 // pred_region
          _
        $region48: #{transformer_forward.1} parent=11 // pred_fallthru
          _
      $region12: #{transformer_forward.1} parent=5 // pred_fallthru
        _
      %p329 = scmp.lt.s32.totalorder %s20, 2
      // Predicated region
      $region49: #{transformer_forward.1} parent=5 // pred_check
        %p330 = pneg %p329
      $region50: #{transformer_forward.1} parent=5 // pred_check_branch
        %332 = sbr.rel (%p330) target = $region52
      $region51: #{transformer_forward.1} parent=5 // pred_region
        // Predicated region
        $region53: #{transformer_forward.1} parent=51 // pred_check
          %p333 = pneg %p40
        $region54: #{transformer_forward.1} parent=51 // pred_check_branch
          %335 = sbr.rel (%p333) target = $region56
        $region55: #{transformer_forward.1} parent=51 // pred_region
          %p336 = scmp.lt.s32.totalorder %s20, 1
          %s337 = scalar_select %p336, %s20, 1
          %s338 = smul.addr %s337, 8
          %s339 = scalar_lea.vmem %s0, %s338
        $region56: #{transformer_forward.1} parent=51 // pred_fallthru
          _
        // Predicated region
        $region57: #{transformer_forward.1} parent=51 // pred_check
          %p340 = pneg %p66
        $region58: #{transformer_forward.1} parent=51 // pred_check_branch
          %342 = sbr.rel (%p340) target = $region60
        $region59: #{transformer_forward.1} parent=51 // pred_region
          %p343 = scmp.lt.s32.totalorder %s20, 1
          %s344 = scalar_select %p343, %s20, 1
          %s345 = scalar_lea.vmem %s1, %s344
        $region60: #{transformer_forward.1} parent=51 // pred_fallthru
          _
      $region52: #{transformer_forward.1} parent=5 // pred_fallthru
        _
      %p346 = scmp.le.s32.totalorder 1, %s20
      %p347 = scmp.lt.s32.totalorder %s20, 3
      %p348 = pnand %p346, %p347
      %p349 = pneg %p348
      // Predicated region
      $region61: #{transformer_forward.1} parent=5 // pred_check
        _
      $region62: #{transformer_forward.1} parent=5 // pred_check_branch
        %351 = sbr.rel (%p348) target = $region64
      $region63: #{transformer_forward.1} parent=5 // pred_region
        %s352 = ssub.s32 %s20, 1
        %p353 = scmp.lt.s32.totalorder %s25, 1
        %s354 = scalar_select %p353, %s25, 1
        %s355 = smul.addr %s354, 8
        %s356 = scalar_lea.vmem %s0, %s355
        %p357 = pneg %p46
        %p358 = pneg %p43
        %p359 = scmp.lt.s32.totalorder %s25, 1
        %s360 = scalar_select %p359, %s25, 1
        %s361 = scalar_lea.vmem %s1, %s360
        %p362 = pneg %p72
        %p363 = pneg %p69
        %p364 = pneg %p93
        %p365 = pneg %p90
        %p366 = pneg %p114
        %p367 = pneg %p111
        %p368 = pneg %p135
        %p369 = pneg %p132
        %p370 = pneg %p156
        %p371 = pneg %p153
        %p372 = pneg %p177
        %p373 = pneg %p174
        %p374 = pneg %p198
        %p375 = pneg %p195
        %p376 = pneg %p219
        %p377 = pneg %p216
        %p378 = pneg %p240
        %p379 = pneg %p237
        %p380 = pneg %p261
        %p381 = pneg %p258
        %p382 = pneg %p287
        %p383 = pneg %p284
        %s384 = sand.u32 %s274, 1
        %s385 = scalar_lea.sflag [#allocation3], %s384
        %s386 = sand.u32 %s274, 1
        %s387 = smul.addr %s386, 8
        %s388 = scalar_lea.vmem [#allocation2], %s387
        %p389 = scmp.lt.s32.totalorder %s25, 1
        %s390 = scalar_select %p389, %s25, 1
        %s391 = smul.addr %s390, 8
        %s392 = scalar_lea.vmem %s0, %s391
        %p393 = scmp.lt.s32.totalorder %s25, 1
        %s394 = scalar_select %p393, %s25, 1
        %s395 = scalar_lea.vmem %s1, %s394
        %v396 = vld [vmem:[%s392] sm:$0xff]
        %v397 = vld [vmem:[%s395] sm:$0x1]
        %v399 = vlaneseq
        %v400 = vshrl.u32 %v399, 7
        %v401 = vsub.s32 0, %v400
        %v402 = vrot.slane %v397, %v401
        %v404 = vadd.f32 %v396, %v402
        %v405 = vlaneseq
        %v406 = vshrl.u32 %v405, 7
        %v407 = vlaneseq
        %v408 = vand.u32 %v407, 127
        %vm409 = vcmp.le.s32.totalorder %v408, %v406
        %v410 = vsel %vm409, 0.0, -1e+30
        %v411 = vld [vmem:[%s2] sm:$0xff]
        %v412 = vld [vmem:[%s2 + $0x8] sm:$0xff]
        %v413 = vld [vmem:[%s2 + $0x10] sm:$0xff]
        %v414 = vld [vmem:[%s2 + $0x18] sm:$0xff]
        %v415 = vld [vmem:[%s3] sm:$0x1]
        %v416 = vld [vmem:[%s4] sm:$0xff]
        %v417 = vld [vmem:[%s4 + $0x8] sm:$0xff]
        %v418 = vld [vmem:[%s4 + $0x10] sm:$0xff]
        %v419 = vld [vmem:[%s4 + $0x18] sm:$0xff]
        %v420 = vld [vmem:[%s5] sm:$0xff]
        %v421 = vld [vmem:[%s5 + $0x8] sm:$0xff]
        %v422 = vld [vmem:[%s5 + $0x10] sm:$0xff]
        %v423 = vld [vmem:[%s5 + $0x18] sm:$0xff]
        %v424 = vld [vmem:[%s6] sm:$0x1]
        %v425 = vld [vmem:[%s7] sm:$0xff]
        %v426 = vld [vmem:[%s7 + $0x8] sm:$0xff]
        %v427 = vld [vmem:[%s7 + $0x10] sm:$0xff]
        %v428 = vld [vmem:[%s7 + $0x18] sm:$0xff]
        %v429 = vld [vmem:[%s7 + $0x20] sm:$0xff]
        %v430 = vld [vmem:[%s7 + $0x28] sm:$0xff]
        %v431 = vld [vmem:[%s7 + $0x30] sm:$0xff]
        %v432 = vld [vmem:[%s7 + $0x38] sm:$0xff]
        %v433 = vld [vmem:[%s8] sm:$0x3f]
        %v435 = vlaneseq
        %v436 = vshrl.u32 %v435, 7
        %v437 = vsub.s32 0, %v436
        %v438 = vrot.slane %v415, %v437
        %vm440 = vcmask 261120
        %v442 = vsel %vm440, %v404, 0
        %444 = vmatprep.subr.mxu0 0.0
        %445 = vmatpush1.msra.mxu0 %v411
        %446 = vmatprep.subr.mxu0 0.0
        %447 = vmatpush1.msra.mxu0 %v412
        %448 = vmatprep.subr.mxu0 0.0
        %449 = vmatpush1.msra.mxu0 %v413
        %450 = vmatprep.subr.mxu0 0.0
        %451 = vmatpush1.msra.mxu0 %v414
        %452 = vmatprep.subr.mxu0 0.0
        %453 = vmatpush1.msra.mxu0 0.0
        %454 = vmatprep.subr.mxu0 0.0
        %455 = vmatpush1.msra.mxu0 0.0
        %456 = vmatprep.subr.mxu0 0.0
        %457 = vmatpush1.msra.mxu0 0.0
        %458 = vmatprep.subr.mxu0 0.0
        %459 = vmatpush1.msra.mxu0 0.0
        %460 = vmatprep.subr.mxu0 0.0
        %461 = vmatpush1.msra.mxu0 0.0
        %462 = vmatprep.subr.mxu0 0.0
        %463 = vmatpush1.msra.mxu0 0.0
        %464 = vmatprep.subr.mxu0 0.0
        %465 = vmatpush1.msra.mxu0 0.0
        %466 = vmatprep.subr.mxu0 0.0
        %467 = vmatpush1.msra.mxu0 0.0
        %468 = vmatprep.subr.mxu0 0.0
        %469 = vmatpush1.msra.mxu0 0.0
        %470 = vmatprep.subr.mxu0 0.0
        %471 = vmatpush1.msra.mxu0 0.0
        %472 = vmatprep.subr.mxu0 0.0
        %473 = vmatpush1.msra.mxu0 0.0
        %474 = vmatprep.subr.mxu0 0.0
        %475 = vmatpush1.msra.mxu0 0.0
        %476 = vmatprep.subr.mxu0 0.0
        %477 = vmatpush1.msra.mxu0 0.0
        %478 = vmatprep.subr.mxu0 0.0
        %479 = vmatpush1.msra.mxu0 0.0
        %480 = vmatprep.subr.mxu0 0.0
        %481 = vmatpush1.msra.mxu0 0.0
        %482 = vmatprep.subr.mxu0 0.0
        %483 = vmatpush1.msra.mxu0 0.0
        %484 = vmatprep.subr.mxu0 0.0
        %485 = vmatpush1.msra.mxu0 0.0
        %486 = vmatprep.subr.mxu0 0.0
        %487 = vmatpush1.msra.mxu0 0.0
        %488 = vmatprep.subr.mxu0 0.0
        %489 = vmatpush1.msra.mxu0 0.0
        %490 = vmatprep.subr.mxu0 0.0
        %491 = vmatpush1.msra.mxu0 0.0
        %492 = vmatprep.subr.mxu0 0.0
        %493 = vmatpush1.msra.mxu0 0.0
        %494 = vmatprep.subr.mxu0 0.0
        %495 = vmatpush1.msra.mxu0 0.0
        %496 = vmatprep.subr.mxu0 0.0
        %497 = vmatpush1.msra.mxu0 0.0
        %498 = vmatprep.subr.mxu0 0.0
        %499 = vmatpush1.msra.mxu0 0.0
        %500 = vmatprep.subr.mxu0 0.0
        %501 = vmatpush1.msra.mxu0 0.0
        %502 = vmatprep.subr.mxu0 0.0
        %503 = vmatpush1.msra.mxu0 0.0
        %504 = vmatprep.subr.mxu0 0.0
        %505 = vmatpush1.msra.mxu0 0.0
        %506 = vmatprep.subr.mxu0 0.0
        %507 = vmatpush1.msra.mxu0 0.0
        %508 = vmatprep.mubr.f32.mxu0 0.0
        %509 = vmatmul.mubr.f32.gmra.mrb[0].mxu0 %v442
        %v510 = vpop.f32.mrb[0].mxu0
        %v511 = vadd.f32 %v438, %v510
        %v512 = vpop.f32.mrb[0].mxu0
        %513 = vdwg.mxu0
        %515 = vrot.lane.b32.xlu0 %v511, 96
        %v516 = vpop.permute.xlu0 %515
        %vm517 = vcmask 64512
        %v518 = vsel %vm517, %v511, 0
        %v520 = vsel %vm517, %v516, 0
        %522 = vmatprep.subr.mxu0 0.0
        %523 = vmatpush1.xpose.msra.mxu0 %v520
        %524 = vmatprep.subr.mxu0 0.0
        %525 = vmatpush1.xpose.msra.mxu0 0.0
        %526 = vmatprep.subr.mxu0 0.0
        %527 = vmatpush1.xpose.msra.mxu0 0.0
        %528 = vmatprep.subr.mxu0 0.0
        %529 = vmatpush1.xpose.msra.mxu0 0.0
        %530 = vmatprep.subr.mxu0 0.0
        %531 = vmatpush1.xpose.msra.mxu0 0.0
        %532 = vmatprep.subr.mxu0 0.0
        %533 = vmatpush1.xpose.msra.mxu0 0.0
        %534 = vmatprep.subr.mxu0 0.0
        %535 = vmatpush1.xpose.msra.mxu0 0.0
        %536 = vmatprep.subr.mxu0 0.0
        %537 = vmatpush1.xpose.msra.mxu0 0.0
        %538 = vmatprep.subr.mxu0 0.0
        %539 = vmatpush1.xpose.msra.mxu0 0.0
        %540 = vmatprep.subr.mxu0 0.0
        %541 = vmatpush1.xpose.msra.mxu0 0.0
        %542 = vmatprep.subr.mxu0 0.0
        %543 = vmatpush1.xpose.msra.mxu0 0.0
        %544 = vmatprep.subr.mxu0 0.0
        %545 = vmatpush1.xpose.msra.mxu0 0.0
        %546 = vmatprep.subr.mxu0 0.0
        %547 = vmatpush1.xpose.msra.mxu0 0.0
        %548 = vmatprep.subr.mxu0 0.0
        %549 = vmatpush1.xpose.msra.mxu0 0.0
        %550 = vmatprep.subr.mxu0 0.0
        %551 = vmatpush1.xpose.msra.mxu0 0.0
        %552 = vmatprep.subr.mxu0 0.0
        %553 = vmatpush1.xpose.msra.mxu0 0.0
        %554 = vmatprep.subr.mxu0 0.0
        %555 = vmatpush1.xpose.msra.mxu0 0.0
        %556 = vmatprep.subr.mxu0 0.0
        %557 = vmatpush1.xpose.msra.mxu0 0.0
        %558 = vmatprep.subr.mxu0 0.0
        %559 = vmatpush1.xpose.msra.mxu0 0.0
        %560 = vmatprep.subr.mxu0 0.0
        %561 = vmatpush1.xpose.msra.mxu0 0.0
        %562 = vmatprep.subr.mxu0 0.0
        %563 = vmatpush1.xpose.msra.mxu0 0.0
        %564 = vmatprep.subr.mxu0 0.0
        %565 = vmatpush1.xpose.msra.mxu0 0.0
        %566 = vmatprep.subr.mxu0 0.0
        %567 = vmatpush1.xpose.msra.mxu0 0.0
        %568 = vmatprep.subr.mxu0 0.0
        %569 = vmatpush1.xpose.msra.mxu0 0.0
        %570 = vmatprep.subr.mxu0 0.0
        %571 = vmatpush1.xpose.msra.mxu0 0.0
        %572 = vmatprep.subr.mxu0 0.0
        %573 = vmatpush1.xpose.msra.mxu0 0.0
        %574 = vmatprep.subr.mxu0 0.0
        %575 = vmatpush1.xpose.msra.mxu0 0.0
        %576 = vmatprep.subr.mxu0 0.0
        %577 = vmatpush1.xpose.msra.mxu0 0.0
        %578 = vmatprep.subr.mxu0 0.0
        %579 = vmatpush1.xpose.msra.mxu0 0.0
        %580 = vmatprep.subr.mxu0 0.0
        %581 = vmatpush1.xpose.msra.mxu0 0.0
        %582 = vmatprep.subr.mxu0 0.0
        %583 = vmatpush1.xpose.msra.mxu0 0.0
        %584 = vmatprep.subr.mxu0 0.0
        %585 = vmatpush1.xpose.msra.mxu0 0.0
        %586 = vmatprep.mubr.f32.mxu0 0.0
        %587 = vmatmul.mubr.f32.gmra.mrb[0].mxu0 %v518
        %v588 = vpop.f32.mrb[0].mxu0
        %v589 = vadd.f32 %v410, %v588
        %v590 = vpop.f32.mrb[0].mxu0
        %591 = vdwg.mxu0
        %v592 = vsel %vm517, %v589, -inf
        %593 = vmax.xlane.f32.xlu0 %v592
        %v594 = vpop.xlane.xlu0 %593
        %v595 = vsub.f32 %v589, %v594
        %v596 = vmul.f32 %v595, 1.442695
        %v597 = vpow.pop %v596
        %v598 = vsel %vm517, %v597, 0.0
        %599 = vadd.xlane.f32.xlu0 %v598
        %v600 = vpop.xlane.xlu0 %599
        %v601 = vrcp.pop %v600
        %v602 = vmul.f32 %v597, %v601
        %603 = vrot.lane.b32.xlu0 %v511, 64
        %v604 = vpop.permute.xlu0 %603
        %v607 = vsel %vm517, %v602, 0
        %609 = vmatprep.subr.mxu0 0.0
        %610 = vmatpush1.msra.mxu0 %v604
        %611 = vmatprep.subr.mxu0 0.0
        %612 = vmatpush1.msra.mxu0 0.0
        %613 = vmatprep.subr.mxu0 0.0
        %614 = vmatpush1.msra.mxu0 0.0
        %615 = vmatprep.subr.mxu0 0.0
        %616 = vmatpush1.msra.mxu0 0.0
        %617 = vmatprep.subr.mxu0 0.0
        %618 = vmatpush1.msra.mxu0 0.0
        %619 = vmatprep.subr.mxu0 0.0
        %620 = vmatpush1.msra.mxu0 0.0
        %621 = vmatprep.subr.mxu0 0.0
        %622 = vmatpush1.msra.mxu0 0.0
        %623 = vmatprep.subr.mxu0 0.0
        %624 = vmatpush1.msra.mxu0 0.0
        %625 = vmatprep.subr.mxu0 0.0
        %626 = vmatpush1.msra.mxu0 0.0
        %627 = vmatprep.subr.mxu0 0.0
        %628 = vmatpush1.msra.mxu0 0.0
        %629 = vmatprep.subr.mxu0 0.0
        %630 = vmatpush1.msra.mxu0 0.0
        %631 = vmatprep.subr.mxu0 0.0
        %632 = vmatpush1.msra.mxu0 0.0
        %633 = vmatprep.subr.mxu0 0.0
        %634 = vmatpush1.msra.mxu0 0.0
        %635 = vmatprep.subr.mxu0 0.0
        %636 = vmatpush1.msra.mxu0 0.0
        %637 = vmatprep.subr.mxu0 0.0
        %638 = vmatpush1.msra.mxu0 0.0
        %639 = vmatprep.subr.mxu0 0.0
        %640 = vmatpush1.msra.mxu0 0.0
        %641 = vmatprep.subr.mxu0 0.0
        %642 = vmatpush1.msra.mxu0 0.0
        %643 = vmatprep.subr.mxu0 0.0
        %644 = vmatpush1.msra.mxu0 0.0
        %645 = vmatprep.subr.mxu0 0.0
        %646 = vmatpush1.msra.mxu0 0.0
        %647 = vmatprep.subr.mxu0 0.0
        %648 = vmatpush1.msra.mxu0 0.0
        %649 = vmatprep.subr.mxu0 0.0
        %650 = vmatpush1.msra.mxu0 0.0
        %651 = vmatprep.subr.mxu0 0.0
        %652 = vmatpush1.msra.mxu0 0.0
        %653 = vmatprep.subr.mxu0 0.0
        %654 = vmatpush1.msra.mxu0 0.0
        %655 = vmatprep.subr.mxu0 0.0
        %656 = vmatpush1.msra.mxu0 0.0
        %657 = vmatprep.subr.mxu0 0.0
        %658 = vmatpush1.msra.mxu0 0.0
        %659 = vmatprep.subr.mxu0 0.0
        %660 = vmatpush1.msra.mxu0 0.0
        %661 = vmatprep.subr.mxu0 0.0
        %662 = vmatpush1.msra.mxu0 0.0
        %663 = vmatprep.subr.mxu0 0.0
        %664 = vmatpush1.msra.mxu0 0.0
        %665 = vmatprep.subr.mxu0 0.0
        %666 = vmatpush1.msra.mxu0 0.0
        %667 = vmatprep.subr.mxu0 0.0
        %668 = vmatpush1.msra.mxu0 0.0
        %669 = vmatprep.subr.mxu0 0.0
        %670 = vmatpush1.msra.mxu0 0.0
        %671 = vmatprep.subr.mxu0 0.0
        %672 = vmatpush1.msra.mxu0 0.0
        %673 = vmatprep.mubr.f32.mxu0 0.0
        %674 = vmatmul.mubr.f32.gmra.mrb[0].mxu0 %v607
        %v675 = vpop.f32.mrb[0].mxu0
        %v676 = vadd.f32 0.0, %v675
        %v677 = vpop.f32.mrb[0].mxu0
        %678 = vdwg.mxu0
        %679 = vrot.lane.b32.xlu0 %v511, 120
        %v680 = vpop.permute.xlu0 %679
        %681 = vrot.lane.b32.xlu0 %v511, 88
        %v682 = vpop.permute.xlu0 %681
        %v683 = vsel %vm517, %v680, 0
        %v685 = vsel %vm517, %v682, 0
        %687 = vmatprep.subr.mxu0 0.0
        %688 = vmatpush1.xpose.msra.mxu0 %v685
        %689 = vmatprep.subr.mxu0 0.0
        %690 = vmatpush1.xpose.msra.mxu0 0.0
        %691 = vmatprep.subr.mxu0 0.0
        %692 = vmatpush1.xpose.msra.mxu0 0.0
        %693 = vmatprep.subr.mxu0 0.0
        %694 = vmatpush1.xpose.msra.mxu0 0.0
        %695 = vmatprep.subr.mxu0 0.0
        %696 = vmatpush1.xpose.msra.mxu0 0.0
        %697 = vmatprep.subr.mxu0 0.0
        %698 = vmatpush1.xpose.msra.mxu0 0.0
        %699 = vmatprep.subr.mxu0 0.0
        %700 = vmatpush1.xpose.msra.mxu0 0.0
        %701 = vmatprep.subr.mxu0 0.0
        %702 = vmatpush1.xpose.msra.mxu0 0.0
        %703 = vmatprep.subr.mxu0 0.0
        %704 = vmatpush1.xpose.msra.mxu0 0.0
        %705 = vmatprep.subr.mxu0 0.0
        %706 = vmatpush1.xpose.msra.mxu0 0.0
        %707 = vmatprep.subr.mxu0 0.0
        %708 = vmatpush1.xpose.msra.mxu0 0.0
        %709 = vmatprep.subr.mxu0 0.0
        %710 = vmatpush1.xpose.msra.mxu0 0.0
        %711 = vmatprep.subr.mxu0 0.0
        %712 = vmatpush1.xpose.msra.mxu0 0.0
        %713 = vmatprep.subr.mxu0 0.0
        %714 = vmatpush1.xpose.msra.mxu0 0.0
        %715 = vmatprep.subr.mxu0 0.0
        %716 = vmatpush1.xpose.msra.mxu0 0.0
        %717 = vmatprep.subr.mxu0 0.0
        %718 = vmatpush1.xpose.msra.mxu0 0.0
        %719 = vmatprep.subr.mxu0 0.0
        %720 = vmatpush1.xpose.msra.mxu0 0.0
        %721 = vmatprep.subr.mxu0 0.0
        %722 = vmatpush1.xpose.msra.mxu0 0.0
        %723 = vmatprep.subr.mxu0 0.0
        %724 = vmatpush1.xpose.msra.mxu0 0.0
        %725 = vmatprep.subr.mxu0 0.0
        %726 = vmatpush1.xpose.msra.mxu0 0.0
        %727 = vmatprep.subr.mxu0 0.0
        %728 = vmatpush1.xpose.msra.mxu0 0.0
        %729 = vmatprep.subr.mxu0 0.0
        %730 = vmatpush1.xpose.msra.mxu0 0.0
        %731 = vmatprep.subr.mxu0 0.0
        %732 = vmatpush1.xpose.msra.mxu0 0.0
        %733 = vmatprep.subr.mxu0 0.0
        %734 = vmatpush1.xpose.msra.mxu0 0.0
        %735 = vmatprep.subr.mxu0 0.0
        %736 = vmatpush1.xpose.msra.mxu0 0.0
        %737 = vmatprep.subr.mxu0 0.0
        %738 = vmatpush1.xpose.msra.mxu0 0.0
        %739 = vmatprep.subr.mxu0 0.0
        %740 = vmatpush1.xpose.msra.mxu0 0.0
        %741 = vmatprep.subr.mxu0 0.0
        %742 = vmatpush1.xpose.msra.mxu0 0.0
        %743 = vmatprep.subr.mxu0 0.0
        %744 = vmatpush1.xpose.msra.mxu0 0.0
        %745 = vmatprep.subr.mxu0 0.0
        %746 = vmatpush1.xpose.msra.mxu0 0.0
        %747 = vmatprep.subr.mxu0 0.0
        %748 = vmatpush1.xpose.msra.mxu0 0.0
        %749 = vmatprep.subr.mxu0 0.0
        %750 = vmatpush1.xpose.msra.mxu0 0.0
        %751 = vmatprep.mubr.f32.mxu0 0.0
        %752 = vmatmul.mubr.f32.gmra.mrb[0].mxu0 %v683
        %v753 = vpop.f32.mrb[0].mxu0
        %v754 = vadd.f32 %v410, %v753
        %v755 = vpop.f32.mrb[0].mxu0
        %756 = vdwg.mxu0
        %v757 = vsel %vm517, %v754, -inf
        %758 = vmax.xlane.f32.xlu0 %v757
        %v759 = vpop.xlane.xlu0 %758
        %v760 = vsub.f32 %v754, %v759
        %v761 = vmul.f32 %v760, 1.442695
        %v762 = vpow.pop %v761
        %v763 = vsel %vm517, %v762, 0.0
        %764 = vadd.xlane.f32.xlu0 %v763
        %v765 = vpop.xlane.xlu0 %764
        %v766 = vrcp.pop %v765
        %v767 = vmul.f32 %v762, %v766
        %768 = vrot.lane.b32.xlu0 %v511, 56
        %v769 = vpop.permute.xlu0 %768
        %v772 = vsel %vm517, %v767, 0
        %774 = vmatprep.subr.mxu0 0.0
        %775 = vmatpush1.msra.mxu0 %v769
        %776 = vmatprep.subr.mxu0 0.0
        %777 = vmatpush1.msra.mxu0 0.0
        %778 = vmatprep.subr.mxu0 0.0
        %779 = vmatpush1.msra.mxu0 0.0
        %780 = vmatprep.subr.mxu0 0.0
        %781 = vmatpush1.msra.mxu0 0.0
        %782 = vmatprep.subr.mxu0 0.0
        %783 = vmatpush1.msra.mxu0 0.0
        %784 = vmatprep.subr.mxu0 0.0
        %785 = vmatpush1.msra.mxu0 0.0
        %786 = vmatprep.subr.mxu0 0.0
        %787 = vmatpush1.msra.mxu0 0.0
        %788 = vmatprep.subr.mxu0 0.0
        %789 = vmatpush1.msra.mxu0 0.0
        %790 = vmatprep.subr.mxu0 0.0
        %791 = vmatpush1.msra.mxu0 0.0
        %792 = vmatprep.subr.mxu0 0.0
        %793 = vmatpush1.msra.mxu0 0.0
        %794 = vmatprep.subr.mxu0 0.0
        %795 = vmatpush1.msra.mxu0 0.0
        %796 = vmatprep.subr.mxu0 0.0
        %797 = vmatpush1.msra.mxu0 0.0
        %798 = vmatprep.subr.mxu0 0.0
        %799 = vmatpush1.msra.mxu0 0.0
        %800 = vmatprep.subr.mxu0 0.0
        %801 = vmatpush1.msra.mxu0 0.0
        %802 = vmatprep.subr.mxu0 0.0
        %803 = vmatpush1.msra.mxu0 0.0
        %804 = vmatprep.subr.mxu0 0.0
        %805 = vmatpush1.msra.mxu0 0.0
        %806 = vmatprep.subr.mxu0 0.0
        %807 = vmatpush1.msra.mxu0 0.0
        %808 = vmatprep.subr.mxu0 0.0
        %809 = vmatpush1.msra.mxu0 0.0
        %810 = vmatprep.subr.mxu0 0.0
        %811 = vmatpush1.msra.mxu0 0.0
        %812 = vmatprep.subr.mxu0 0.0
        %813 = vmatpush1.msra.mxu0 0.0
        %814 = vmatprep.subr.mxu0 0.0
        %815 = vmatpush1.msra.mxu0 0.0
        %816 = vmatprep.subr.mxu0 0.0
        %817 = vmatpush1.msra.mxu0 0.0
        %818 = vmatprep.subr.mxu0 0.0
        %819 = vmatpush1.msra.mxu0 0.0
        %820 = vmatprep.subr.mxu0 0.0
        %821 = vmatpush1.msra.mxu0 0.0
        %822 = vmatprep.subr.mxu0 0.0
        %823 = vmatpush1.msra.mxu0 0.0
        %824 = vmatprep.subr.mxu0 0.0
        %825 = vmatpush1.msra.mxu0 0.0
        %826 = vmatprep.subr.mxu0 0.0
        %827 = vmatpush1.msra.mxu0 0.0
        %828 = vmatprep.subr.mxu0 0.0
        %829 = vmatpush1.msra.mxu0 0.0
        %830 = vmatprep.subr.mxu0 0.0
        %831 = vmatpush1.msra.mxu0 0.0
        %832 = vmatprep.subr.mxu0 0.0
        %833 = vmatpush1.msra.mxu0 0.0
        %834 = vmatprep.subr.mxu0 0.0
        %835 = vmatpush1.msra.mxu0 0.0
        %836 = vmatprep.subr.mxu0 0.0
        %837 = vmatpush1.msra.mxu0 0.0
        %838 = vmatprep.mubr.f32.mxu0 0.0
        %839 = vmatmul.mubr.f32.gmra.mrb[0].mxu0 %v772
        %v840 = vpop.f32.mrb[0].mxu0
        %v841 = vadd.f32 0.0, %v840
        %v842 = vpop.f32.mrb[0].mxu0
        %843 = vdwg.mxu0
        %844 = vrot.lane.b32.xlu0 %v511, 112
        %v845 = vpop.permute.xlu0 %844
        %846 = vrot.lane.b32.xlu0 %v511, 80
        %v847 = vpop.permute.xlu0 %846
        %v848 = vsel %vm517, %v845, 0
        %v850 = vsel %vm517, %v847, 0
        %852 = vmatprep.subr.mxu0 0.0
        %853 = vmatpush1.xpose.msra.mxu0 %v850
        %854 = vmatprep.subr.mxu0 0.0
        %855 = vmatpush1.xpose.msra.mxu0 0.0
        %856 = vmatprep.subr.mxu0 0.0
        %857 = vmatpush1.xpose.msra.mxu0 0.0
        %858 = vmatprep.subr.mxu0 0.0
        %859 = vmatpush1.xpose.msra.mxu0 0.0
        %860 = vmatprep.subr.mxu0 0.0
        %861 = vmatpush1.xpose.msra.mxu0 0.0
        %862 = vmatprep.subr.mxu0 0.0
        %863 = vmatpush1.xpose.msra.mxu0 0.0
        %864 = vmatprep.subr.mxu0 0.0
        %865 = vmatpush1.xpose.msra.mxu0 0.0
        %866 = vmatprep.subr.mxu0 0.0
        %867 = vmatpush1.xpose.msra.mxu0 0.0
        %868 = vmatprep.subr.mxu0 0.0
        %869 = vmatpush1.xpose.msra.mxu0 0.0
        %870 = vmatprep.subr.mxu0 0.0
        %871 = vmatpush1.xpose.msra.mxu0 0.0
        %872 = vmatprep.subr.mxu0 0.0
        %873 = vmatpush1.xpose.msra.mxu0 0.0
        %874 = vmatprep.subr.mxu0 0.0
        %875 = vmatpush1.xpose.msra.mxu0 0.0
        %876 = vmatprep.subr.mxu0 0.0
        %877 = vmatpush1.xpose.msra.mxu0 0.0
        %878 = vmatprep.subr.mxu0 0.0
        %879 = vmatpush1.xpose.msra.mxu0 0.0
        %880 = vmatprep.subr.mxu0 0.0
        %881 = vmatpush1.xpose.msra.mxu0 0.0
        %882 = vmatprep.subr.mxu0 0.0
        %883 = vmatpush1.xpose.msra.mxu0 0.0
        %884 = vmatprep.subr.mxu0 0.0
        %885 = vmatpush1.xpose.msra.mxu0 0.0
        %886 = vmatprep.subr.mxu0 0.0
        %887 = vmatpush1.xpose.msra.mxu0 0.0
        %888 = vmatprep.subr.mxu0 0.0
        %889 = vmatpush1.xpose.msra.mxu0 0.0
        %890 = vmatprep.subr.mxu0 0.0
        %891 = vmatpush1.xpose.msra.mxu0 0.0
        %892 = vmatprep.subr.mxu0 0.0
        %893 = vmatpush1.xpose.msra.mxu0 0.0
        %894 = vmatprep.subr.mxu0 0.0
        %895 = vmatpush1.xpose.msra.mxu0 0.0
        %896 = vmatprep.subr.mxu0 0.0
        %897 = vmatpush1.xpose.msra.mxu0 0.0
        %898 = vmatprep.subr.mxu0 0.0
        %899 = vmatpush1.xpose.msra.mxu0 0.0
        %900 = vmatprep.subr.mxu0 0.0
        %901 = vmatpush1.xpose.msra.mxu0 0.0
        %902 = vmatprep.subr.mxu0 0.0
        %903 = vmatpush1.xpose.msra.mxu0 0.0
        %904 = vmatprep.subr.mxu0 0.0
        %905 = vmatpush1.xpose.msra.mxu0 0.0
        %906 = vmatprep.subr.mxu0 0.0
        %907 = vmatpush1.xpose.msra.mxu0 0.0
        %908 = vmatprep.subr.mxu0 0.0
        %909 = vmatpush1.xpose.msra.mxu0 0.0
        %910 = vmatprep.subr.mxu0 0.0
        %911 = vmatpush1.xpose.msra.mxu0 0.0
        %912 = vmatprep.subr.mxu0 0.0
        %913 = vmatpush1.xpose.msra.mxu0 0.0
        %914 = vmatprep.subr.mxu0 0.0
        %915 = vmatpush1.xpose.msra.mxu0 0.0
        %916 = vmatprep.mubr.f32.mxu0 0.0
        %917 = vmatmul.mubr.f32.gmra.mrb[0].mxu0 %v848
        %v918 = vpop.f32.mrb[0].mxu0
        %v919 = vadd.f32 %v410, %v918
        %v920 = vpop.f32.mrb[0].mxu0
        %921 = vdwg.mxu0
        %v922 = vsel %vm517, %v919, -inf
        %923 = vmax.xlane.f32.xlu0 %v922
        %v924 = vpop.xlane.xlu0 %923
        %v925 = vsub.f32 %v919, %v924
        %v926 = vmul.f32 %v925, 1.442695
        %v927 = vpow.pop %v926
        %v928 = vsel %vm517, %v927, 0.0
        %929 = vadd.xlane.f32.xlu0 %v928
        %v930 = vpop.xlane.xlu0 %929
        %v931 = vrcp.pop %v930
        %v932 = vmul.f32 %v927, %v931
        %933 = vrot.lane.b32.xlu0 %v511, 48
        %v934 = vpop.permute.xlu0 %933
        %v937 = vsel %vm517, %v932, 0
        %939 = vmatprep.subr.mxu0 0.0
        %940 = vmatpush1.msra.mxu0 %v934
        %941 = vmatprep.subr.mxu0 0.0
        %942 = vmatpush1.msra.mxu0 0.0
        %943 = vmatprep.subr.mxu0 0.0
        %944 = vmatpush1.msra.mxu0 0.0
        %945 = vmatprep.subr.mxu0 0.0
        %946 = vmatpush1.msra.mxu0 0.0
        %947 = vmatprep.subr.mxu0 0.0
        %948 = vmatpush1.msra.mxu0 0.0
        %949 = vmatprep.subr.mxu0 0.0
        %950 = vmatpush1.msra.mxu0 0.0
        %951 = vmatprep.subr.mxu0 0.0
        %952 = vmatpush1.msra.mxu0 0.0
        %953 = vmatprep.subr.mxu0 0.0
        %954 = vmatpush1.msra.mxu0 0.0
        %955 = vmatprep.subr.mxu0 0.0
        %956 = vmatpush1.msra.mxu0 0.0
        %957 = vmatprep.subr.mxu0 0.0
        %958 = vmatpush1.msra.mxu0 0.0
        %959 = vmatprep.subr.mxu0 0.0
        %960 = vmatpush1.msra.mxu0 0.0
        %961 = vmatprep.subr.mxu0 0.0
        %962 = vmatpush1.msra.mxu0 0.0
        %963 = vmatprep.subr.mxu0 0.0
        %964 = vmatpush1.msra.mxu0 0.0
        %965 = vmatprep.subr.mxu0 0.0
        %966 = vmatpush1.msra.mxu0 0.0
        %967 = vmatprep.subr.mxu0 0.0
        %968 = vmatpush1.msra.mxu0 0.0
        %969 = vmatprep.subr.mxu0 0.0
        %970 = vmatpush1.msra.mxu0 0.0
        %971 = vmatprep.subr.mxu0 0.0
        %972 = vmatpush1.msra.mxu0 0.0
        %973 = vmatprep.subr.mxu0 0.0
        %974 = vmatpush1.msra.mxu0 0.0
        %975 = vmatprep.subr.mxu0 0.0
        %976 = vmatpush1.msra.mxu0 0.0
        %977 = vmatprep.subr.mxu0 0.0
        %978 = vmatpush1.msra.mxu0 0.0
        %979 = vmatprep.subr.mxu0 0.0
        %980 = vmatpush1.msra.mxu0 0.0
        %981 = vmatprep.subr.mxu0 0.0
        %982 = vmatpush1.msra.mxu0 0.0
        %983 = vmatprep.subr.mxu0 0.0
        %984 = vmatpush1.msra.mxu0 0.0
        %985 = vmatprep.subr.mxu0 0.0
        %986 = vmatpush1.msra.mxu0 0.0
        %987 = vmatprep.subr.mxu0 0.0
        %988 = vmatpush1.msra.mxu0 0.0
        %989 = vmatprep.subr.mxu0 0.0
        %990 = vmatpush1.msra.mxu0 0.0
        %991 = vmatprep.subr.mxu0 0.0
        %992 = vmatpush1.msra.mxu0 0.0
        %993 = vmatprep.subr.mxu0 0.0
        %994 = vmatpush1.msra.mxu0 0.0
        %995 = vmatprep.subr.mxu0 0.0
        %996 = vmatpush1.msra.mxu0 0.0
        %997 = vmatprep.subr.mxu0 0.0
        %998 = vmatpush1.msra.mxu0 0.0
        %999 = vmatprep.subr.mxu0 0.0
        %1000 = vmatpush1.msra.mxu0 0.0
        %1001 = vmatprep.subr.mxu0 0.0
        %1002 = vmatpush1.msra.mxu0 0.0
        %1003 = vmatprep.mubr.f32.mxu0 0.0
        %1004 = vmatmul.mubr.f32.gmra.mrb[0].mxu0 %v937
        %v1005 = vpop.f32.mrb[0].mxu0
        %v1006 = vadd.f32 0.0, %v1005
        %v1007 = vpop.f32.mrb[0].mxu0
        %1008 = vdwg.mxu0
        %1009 = vrot.lane.b32.xlu0 %v511, 104
        %v1010 = vpop.permute.xlu0 %1009
        %1011 = vrot.lane.b32.xlu0 %v511, 72
        %v1012 = vpop.permute.xlu0 %1011
        %v1013 = vsel %vm517, %v1010, 0
        %v1015 = vsel %vm517, %v1012, 0
        %1017 = vmatprep.subr.mxu0 0.0
        %1018 = vmatpush1.xpose.msra.mxu0 %v1015
        %1019 = vmatprep.subr.mxu0 0.0
        %1020 = vmatpush1.xpose.msra.mxu0 0.0
        %1021 = vmatprep.subr.mxu0 0.0
        %1022 = vmatpush1.xpose.msra.mxu0 0.0
        %1023 = vmatprep.subr.mxu0 0.0
        %1024 = vmatpush1.xpose.msra.mxu0 0.0
        %1025 = vmatprep.subr.mxu0 0.0
        %1026 = vmatpush1.xpose.msra.mxu0 0.0
        %1027 = vmatprep.subr.mxu0 0.0
        %1028 = vmatpush1.xpose.msra.mxu0 0.0
        %1029 = vmatprep.subr.mxu0 0.0
        %1030 = vmatpush1.xpose.msra.mxu0 0.0
        %1031 = vmatprep.subr.mxu0 0.0
        %1032 = vmatpush1.xpose.msra.mxu0 0.0
        %1033 = vmatprep.subr.mxu0 0.0
        %1034 = vmatpush1.xpose.msra.mxu0 0.0
        %1035 = vmatprep.subr.mxu0 0.0
        %1036 = vmatpush1.xpose.msra.mxu0 0.0
        %1037 = vmatprep.subr.mxu0 0.0
        %1038 = vmatpush1.xpose.msra.mxu0 0.0
        %1039 = vmatprep.subr.mxu0 0.0
        %1040 = vmatpush1.xpose.msra.mxu0 0.0
        %1041 = vmatprep.subr.mxu0 0.0
        %1042 = vmatpush1.xpose.msra.mxu0 0.0
        %1043 = vmatprep.subr.mxu0 0.0
        %1044 = vmatpush1.xpose.msra.mxu0 0.0
        %1045 = vmatprep.subr.mxu0 0.0
        %1046 = vmatpush1.xpose.msra.mxu0 0.0
        %1047 = vmatprep.subr.mxu0 0.0
        %1048 = vmatpush1.xpose.msra.mxu0 0.0
        %1049 = vmatprep.subr.mxu0 0.0
        %1050 = vmatpush1.xpose.msra.mxu0 0.0
        %1051 = vmatprep.subr.mxu0 0.0
        %1052 = vmatpush1.xpose.msra.mxu0 0.0
        %1053 = vmatprep.subr.mxu0 0.0
        %1054 = vmatpush1.xpose.msra.mxu0 0.0
        %1055 = vmatprep.subr.mxu0 0.0
        %1056 = vmatpush1.xpose.msra.mxu0 0.0
        %1057 = vmatprep.subr.mxu0 0.0
        %1058 = vmatpush1.xpose.msra.mxu0 0.0
        %1059 = vmatprep.subr.mxu0 0.0
        %1060 = vmatpush1.xpose.msra.mxu0 0.0
        %1061 = vmatprep.subr.mxu0 0.0
        %1062 = vmatpush1.xpose.msra.mxu0 0.0
        %1063 = vmatprep.subr.mxu0 0.0
        %1064 = vmatpush1.xpose.msra.mxu0 0.0
        %1065 = vmatprep.subr.mxu0 0.0
        %1066 = vmatpush1.xpose.msra.mxu0 0.0
        %1067 = vmatprep.subr.mxu0 0.0
        %1068 = vmatpush1.xpose.msra.mxu0 0.0
        %1069 = vmatprep.subr.mxu0 0.0
        %1070 = vmatpush1.xpose.msra.mxu0 0.0
        %1071 = vmatprep.subr.mxu0 0.0
        %1072 = vmatpush1.xpose.msra.mxu0 0.0
        %1073 = vmatprep.subr.mxu0 0.0
        %1074 = vmatpush1.xpose.msra.mxu0 0.0
        %1075 = vmatprep.subr.mxu0 0.0
        %1076 = vmatpush1.xpose.msra.mxu0 0.0
        %1077 = vmatprep.subr.mxu0 0.0
        %1078 = vmatpush1.xpose.msra.mxu0 0.0
        %1079 = vmatprep.subr.mxu0 0.0
        %1080 = vmatpush1.xpose.msra.mxu0 0.0
        %1081 = vmatprep.mubr.f32.mxu0 0.0
        %1082 = vmatmul.mubr.f32.gmra.mrb[0].mxu0 %v1013
        %v1083 = vpop.f32.mrb[0].mxu0
        %v1084 = vadd.f32 %v410, %v1083
        %v1085 = vpop.f32.mrb[0].mxu0
        %1086 = vdwg.mxu0
        %v1087 = vsel %vm517, %v1084, -inf
        %1088 = vmax.xlane.f32.xlu0 %v1087
        %v1089 = vpop.xlane.xlu0 %1088
        %v1090 = vsub.f32 %v1084, %v1089
        %v1091 = vmul.f32 %v1090, 1.442695
        %v1092 = vpow.pop %v1091
        %v1093 = vsel %vm517, %v1092, 0.0
        %1094 = vadd.xlane.f32.xlu0 %v1093
        %v1095 = vpop.xlane.xlu0 %1094
        %v1096 = vrcp.pop %v1095
        %v1097 = vmul.f32 %v1092, %v1096
        %1098 = vrot.lane.b32.xlu0 %v511, 40
        %v1099 = vpop.permute.xlu0 %1098
        %v1102 = vsel %vm517, %v1097, 0
        %1104 = vmatprep.subr.mxu0 0.0
        %1105 = vmatpush1.msra.mxu0 %v1099
        %1106 = vmatprep.subr.mxu0 0.0
        %1107 = vmatpush1.msra.mxu0 0.0
        %1108 = vmatprep.subr.mxu0 0.0
        %1109 = vmatpush1.msra.mxu0 0.0
        %1110 = vmatprep.subr.mxu0 0.0
        %1111 = vmatpush1.msra.mxu0 0.0
        %1112 = vmatprep.subr.mxu0 0.0
        %1113 = vmatpush1.msra.mxu0 0.0
        %1114 = vmatprep.subr.mxu0 0.0
        %1115 = vmatpush1.msra.mxu0 0.0
        %1116 = vmatprep.subr.mxu0 0.0
        %1117 = vmatpush1.msra.mxu0 0.0
        %1118 = vmatprep.subr.mxu0 0.0
        %1119 = vmatpush1.msra.mxu0 0.0
        %1120 = vmatprep.subr.mxu0 0.0
        %1121 = vmatpush1.msra.mxu0 0.0
        %1122 = vmatprep.subr.mxu0 0.0
        %1123 = vmatpush1.msra.mxu0 0.0
        %1124 = vmatprep.subr.mxu0 0.0
        %1125 = vmatpush1.msra.mxu0 0.0
        %1126 = vmatprep.subr.mxu0 0.0
        %1127 = vmatpush1.msra.mxu0 0.0
        %1128 = vmatprep.subr.mxu0 0.0
        %1129 = vmatpush1.msra.mxu0 0.0
        %1130 = vmatprep.subr.mxu0 0.0
        %1131 = vmatpush1.msra.mxu0 0.0
        %1132 = vmatprep.subr.mxu0 0.0
        %1133 = vmatpush1.msra.mxu0 0.0
        %1134 = vmatprep.subr.mxu0 0.0
        %1135 = vmatpush1.msra.mxu0 0.0
        %1136 = vmatprep.subr.mxu0 0.0
        %1137 = vmatpush1.msra.mxu0 0.0
        %1138 = vmatprep.subr.mxu0 0.0
        %1139 = vmatpush1.msra.mxu0 0.0
        %1140 = vmatprep.subr.mxu0 0.0
        %1141 = vmatpush1.msra.mxu0 0.0
        %1142 = vmatprep.subr.mxu0 0.0
        %1143 = vmatpush1.msra.mxu0 0.0
        %1144 = vmatprep.subr.mxu0 0.0
        %1145 = vmatpush1.msra.mxu0 0.0
        %1146 = vmatprep.subr.mxu0 0.0
        %1147 = vmatpush1.msra.mxu0 0.0
        %1148 = vmatprep.subr.mxu0 0.0
        %1149 = vmatpush1.msra.mxu0 0.0
        %1150 = vmatprep.subr.mxu0 0.0
        %1151 = vmatpush1.msra.mxu0 0.0
        %1152 = vmatprep.subr.mxu0 0.0
        %1153 = vmatpush1.msra.mxu0 0.0
        %1154 = vmatprep.subr.mxu0 0.0
        %1155 = vmatpush1.msra.mxu0 0.0
        %1156 = vmatprep.subr.mxu0 0.0
        %1157 = vmatpush1.msra.mxu0 0.0
        %1158 = vmatprep.subr.mxu0 0.0
        %1159 = vmatpush1.msra.mxu0 0.0
        %1160 = vmatprep.subr.mxu0 0.0
        %1161 = vmatpush1.msra.mxu0 0.0
        %1162 = vmatprep.subr.mxu0 0.0
        %1163 = vmatpush1.msra.mxu0 0.0
        %1164 = vmatprep.subr.mxu0 0.0
        %1165 = vmatpush1.msra.mxu0 0.0
        %1166 = vmatprep.subr.mxu0 0.0
        %1167 = vmatpush1.msra.mxu0 0.0
        %1168 = vmatprep.mubr.f32.mxu0 0.0
        %1169 = vmatmul.mubr.f32.gmra.mrb[0].mxu0 %v1102
        %v1170 = vpop.f32.mrb[0].mxu0
        %v1171 = vadd.f32 0.0, %v1170
        %v1172 = vpop.f32.mrb[0].mxu0
        %1173 = vdwg.mxu0
        %1175 = vrot.lane.b32.xlu0 %v841, 8
        %v1176 = vpop.permute.xlu0 %1175
        %1179 = vrot.lane.b32.xlu0 %v1006, 16
        %v1180 = vpop.permute.xlu0 %1179
        %1183 = vrot.lane.b32.xlu0 %v1171, 24
        %v1184 = vpop.permute.xlu0 %1183
        %v1186 = vsel %vm517, %v676, %v1176
        %vm1187 = vcmask 130048
        %v1188 = vsel %vm1187, %v1186, %v1180
        %vm1189 = vcmask 195584
        %v1190 = vsel %vm1189, %v1188, %v1184
        %v1191 = vlaneseq
        %v1192 = vshrl.u32 %v1191, 7
        %v1193 = vsub.s32 0, %v1192
        %v1194 = vrot.slane %v433, %v1193
        %v1196 = vsel %vm440, %v1190, 0
        %1198 = vmatprep.subr.mxu0 0.0
        %1199 = vmatpush1.msra.mxu0 %v416
        %1200 = vmatprep.subr.mxu0 0.0
        %1201 = vmatpush1.msra.mxu0 %v417
        %1202 = vmatprep.subr.mxu0 0.0
        %1203 = vmatpush1.msra.mxu0 %v418
        %1204 = vmatprep.subr.mxu0 0.0
        %1205 = vmatpush1.msra.mxu0 %v419
        %1206 = vmatprep.subr.mxu0 0.0
        %1207 = vmatpush1.msra.mxu0 0.0
        %1208 = vmatprep.subr.mxu0 0.0
        %1209 = vmatpush1.msra.mxu0 0.0
        %1210 = vmatprep.subr.mxu0 0.0
        %1211 = vmatpush1.msra.mxu0 0.0
        %1212 = vmatprep.subr.mxu0 0.0
        %1213 = vmatpush1.msra.mxu0 0.0
        %1214 = vmatprep.subr.mxu0 0.0
        %1215 = vmatpush1.msra.mxu0 0.0
        %1216 = vmatprep.subr.mxu0 0.0
        %1217 = vmatpush1.msra.mxu0 0.0
        %1218 = vmatprep.subr.mxu0 0.0
        %1219 = vmatpush1.msra.mxu0 0.0
        %1220 = vmatprep.subr.mxu0 0.0
        %1221 = vmatpush1.msra.mxu0 0.0
        %1222 = vmatprep.subr.mxu0 0.0
        %1223 = vmatpush1.msra.mxu0 0.0
        %1224 = vmatprep.subr.mxu0 0.0
        %1225 = vmatpush1.msra.mxu0 0.0
        %1226 = vmatprep.subr.mxu0 0.0
        %1227 = vmatpush1.msra.mxu0 0.0
        %1228 = vmatprep.subr.mxu0 0.0
        %1229 = vmatpush1.msra.mxu0 0.0
        %1230 = vmatprep.subr.mxu0 0.0
        %1231 = vmatpush1.msra.mxu0 0.0
        %1232 = vmatprep.subr.mxu0 0.0
        %1233 = vmatpush1.msra.mxu0 0.0
        %1234 = vmatprep.subr.mxu0 0.0
        %1235 = vmatpush1.msra.mxu0 0.0
        %1236 = vmatprep.subr.mxu0 0.0
        %1237 = vmatpush1.msra.mxu0 0.0
        %1238 = vmatprep.subr.mxu0 0.0
        %1239 = vmatpush1.msra.mxu0 0.0
        %1240 = vmatprep.subr.mxu0 0.0
        %1241 = vmatpush1.msra.mxu0 0.0
        %1242 = vmatprep.subr.mxu0 0.0
        %1243 = vmatpush1.msra.mxu0 0.0
        %1244 = vmatprep.subr.mxu0 0.0
        %1245 = vmatpush1.msra.mxu0 0.0
        %1246 = vmatprep.subr.mxu0 0.0
        %1247 = vmatpush1.msra.mxu0 0.0
        %1248 = vmatprep.subr.mxu0 0.0
        %1249 = vmatpush1.msra.mxu0 0.0
        %1250 = vmatprep.subr.mxu0 0.0
        %1251 = vmatpush1.msra.mxu0 0.0
        %1252 = vmatprep.subr.mxu0 0.0
        %1253 = vmatpush1.msra.mxu0 0.0
        %1254 = vmatprep.subr.mxu0 0.0
        %1255 = vmatpush1.msra.mxu0 0.0
        %1256 = vmatprep.subr.mxu0 0.0
        %1257 = vmatpush1.msra.mxu0 0.0
        %1258 = vmatprep.subr.mxu0 0.0
        %1259 = vmatpush1.msra.mxu0 0.0
        %1260 = vmatprep.subr.mxu0 0.0
        %1261 = vmatpush1.msra.mxu0 0.0
        %1262 = vmatprep.mubr.f32.mxu0 0.0
        %1263 = vmatmul.mubr.f32.gmra.mrb[0].mxu0 %v1196
        %v1264 = vpop.f32.mrb[0].mxu0
        %v1265 = vadd.f32 %v1194, %v1264
        %v1266 = vpop.f32.mrb[0].mxu0
        %1267 = vdwg.mxu0
        %v1268 = vadd.f32 %v404, %v1265
        %v1269 = vsel %vm440, %v1268, 0.0
        %1270 = vadd.xlane.f32.xlu0 %v1269
        %v1271 = vpop.xlane.xlu0 %1270
        %v1272 = vrcp.pop 32.0
        %v1273 = vmul.f32 %v1271, %v1272
        %v1274 = vsub.f32 %v1268, %v1273
        %v1275 = vmul.f32 %v1274, %v1274
        %v1276 = vsel %vm440, %v1275, 0.0
        %1277 = vadd.xlane.f32.xlu0 %v1276
        %v1278 = vpop.xlane.xlu0 %1277
        %v1279 = vmul.f32 %v1278, %v1272
        %v1280 = vadd.f32 %v1279, 1e-05
        %v1281 = vrsqrt.pop %v1280
        %v1282 = vmul.f32 %v1274, %v1281
        %v1283 = vlaneseq
        %v1284 = vshrl.u32 %v1283, 7
        %v1285 = vsub.s32 2, %v1284
        %v1286 = vrot.slane %v433, %v1285
        %v1287 = vmul.f32 %v1282, %v1286
        %v1288 = vlaneseq
        %v1289 = vshrl.u32 %v1288, 7
        %v1290 = vsub.s32 3, %v1289
        %v1291 = vrot.slane %v433, %v1290
        %v1292 = vadd.f32 %v1287, %v1291
        %v1294 = vlaneseq
        %v1295 = vshrl.u32 %v1294, 7
        %v1296 = vsub.s32 0, %v1295
        %v1297 = vrot.slane %v424, %v1296
        %v1300 = vsel %vm440, %v1292, 0
        %1302 = vmatprep.subr.mxu0 0.0
        %1303 = vmatpush1.msra.mxu0 %v420
        %1304 = vmatprep.subr.mxu0 0.0
        %1305 = vmatpush1.msra.mxu0 %v421
        %1306 = vmatprep.subr.mxu0 0.0
        %1307 = vmatpush1.msra.mxu0 %v422
        %1308 = vmatprep.subr.mxu0 0.0
        %1309 = vmatpush1.msra.mxu0 %v423
        %1310 = vmatprep.subr.mxu0 0.0
        %1311 = vmatpush1.msra.mxu0 0.0
        %1312 = vmatprep.subr.mxu0 0.0
        %1313 = vmatpush1.msra.mxu0 0.0
        %1314 = vmatprep.subr.mxu0 0.0
        %1315 = vmatpush1.msra.mxu0 0.0
        %1316 = vmatprep.subr.mxu0 0.0
        %1317 = vmatpush1.msra.mxu0 0.0
        %1318 = vmatprep.subr.mxu0 0.0
        %1319 = vmatpush1.msra.mxu0 0.0
        %1320 = vmatprep.subr.mxu0 0.0
        %1321 = vmatpush1.msra.mxu0 0.0
        %1322 = vmatprep.subr.mxu0 0.0
        %1323 = vmatpush1.msra.mxu0 0.0
        %1324 = vmatprep.subr.mxu0 0.0
        %1325 = vmatpush1.msra.mxu0 0.0
        %1326 = vmatprep.subr.mxu0 0.0
        %1327 = vmatpush1.msra.mxu0 0.0
        %1328 = vmatprep.subr.mxu0 0.0
        %1329 = vmatpush1.msra.mxu0 0.0
        %1330 = vmatprep.subr.mxu0 0.0
        %1331 = vmatpush1.msra.mxu0 0.0
        %1332 = vmatprep.subr.mxu0 0.0
        %1333 = vmatpush1.msra.mxu0 0.0
        %1334 = vmatprep.subr.mxu0 0.0
        %1335 = vmatpush1.msra.mxu0 0.0
        %1336 = vmatprep.subr.mxu0 0.0
        %1337 = vmatpush1.msra.mxu0 0.0
        %1338 = vmatprep.subr.mxu0 0.0
        %1339 = vmatpush1.msra.mxu0 0.0
        %1340 = vmatprep.subr.mxu0 0.0
        %1341 = vmatpush1.msra.mxu0 0.0
        %1342 = vmatprep.subr.mxu0 0.0
        %1343 = vmatpush1.msra.mxu0 0.0
        %1344 = vmatprep.subr.mxu0 0.0
        %1345 = vmatpush1.msra.mxu0 0.0
        %1346 = vmatprep.subr.mxu0 0.0
        %1347 = vmatpush1.msra.mxu0 0.0
        %1348 = vmatprep.subr.mxu0 0.0
        %1349 = vmatpush1.msra.mxu0 0.0
        %1350 = vmatprep.subr.mxu0 0.0
        %1351 = vmatpush1.msra.mxu0 0.0
        %1352 = vmatprep.subr.mxu0 0.0
        %1353 = vmatpush1.msra.mxu0 0.0
        %1354 = vmatprep.subr.mxu0 0.0
        %1355 = vmatpush1.msra.mxu0 0.0
        %1356 = vmatprep.subr.mxu0 0.0
        %1357 = vmatpush1.msra.mxu0 0.0
        %1358 = vmatprep.subr.mxu0 0.0
        %1359 = vmatpush1.msra.mxu0 0.0
        %1360 = vmatprep.subr.mxu0 0.0
        %1361 = vmatpush1.msra.mxu0 0.0
        %1362 = vmatprep.subr.mxu0 0.0
        %1363 = vmatpush1.msra.mxu0 0.0
        %1364 = vmatprep.subr.mxu0 0.0
        %1365 = vmatpush1.msra.mxu0 0.0
        %1366 = vmatprep.mubr.f32.mxu0 0.0
        %1367 = vmatmul.mubr.f32.gmra.mrb[0].mxu0 %v1300
        %v1368 = vpop.f32.mrb[0].mxu0
        %v1369 = vadd.f32 %v1297, %v1368
        %v1370 = vpop.f32.mrb[0].mxu0
        %1371 = vdwg.mxu0
        %v1372 = vmax.f32 %v1369, 0.0
        %v1373 = vlaneseq
        %v1374 = vshrl.u32 %v1373, 7
        %v1375 = vsub.s32 1, %v1374
        %v1376 = vrot.slane %v433, %v1375
        %vm1377 = vcmask 523264
        %v1379 = vsel %vm1377, %v1372, 0
        %1381 = vmatprep.subr.mxu0 0.0
        %1382 = vmatpush1.msra.mxu0 %v425
        %1383 = vmatprep.subr.mxu0 0.0
        %1384 = vmatpush1.msra.mxu0 %v426
        %1385 = vmatprep.subr.mxu0 0.0
        %1386 = vmatpush1.msra.mxu0 %v427
        %1387 = vmatprep.subr.mxu0 0.0
        %1388 = vmatpush1.msra.mxu0 %v428
        %1389 = vmatprep.subr.mxu0 0.0
        %1390 = vmatpush1.msra.mxu0 %v429
        %1391 = vmatprep.subr.mxu0 0.0
        %1392 = vmatpush1.msra.mxu0 %v430
        %1393 = vmatprep.subr.mxu0 0.0
        %1394 = vmatpush1.msra.mxu0 %v431
        %1395 = vmatprep.subr.mxu0 0.0
        %1396 = vmatpush1.msra.mxu0 %v432
        %1397 = vmatprep.subr.mxu0 0.0
        %1398 = vmatpush1.msra.mxu0 0.0
        %1399 = vmatprep.subr.mxu0 0.0
        %1400 = vmatpush1.msra.mxu0 0.0
        %1401 = vmatprep.subr.mxu0 0.0
        %1402 = vmatpush1.msra.mxu0 0.0
        %1403 = vmatprep.subr.mxu0 0.0
        %1404 = vmatpush1.msra.mxu0 0.0
        %1405 = vmatprep.subr.mxu0 0.0
        %1406 = vmatpush1.msra.mxu0 0.0
        %1407 = vmatprep.subr.mxu0 0.0
        %1408 = vmatpush1.msra.mxu0 0.0
        %1409 = vmatprep.subr.mxu0 0.0
        %1410 = vmatpush1.msra.mxu0 0.0
        %1411 = vmatprep.subr.mxu0 0.0
        %1412 = vmatpush1.msra.mxu0 0.0
        %1413 = vmatprep.subr.mxu0 0.0
        %1414 = vmatpush1.msra.mxu0 0.0
        %1415 = vmatprep.subr.mxu0 0.0
        %1416 = vmatpush1.msra.mxu0 0.0
        %1417 = vmatprep.subr.mxu0 0.0
        %1418 = vmatpush1.msra.mxu0 0.0
        %1419 = vmatprep.subr.mxu0 0.0
        %1420 = vmatpush1.msra.mxu0 0.0
        %1421 = vmatprep.subr.mxu0 0.0
        %1422 = vmatpush1.msra.mxu0 0.0
        %1423 = vmatprep.subr.mxu0 0.0
        %1424 = vmatpush1.msra.mxu0 0.0
        %1425 = vmatprep.subr.mxu0 0.0
        %1426 = vmatpush1.msra.mxu0 0.0
        %1427 = vmatprep.subr.mxu0 0.0
        %1428 = vmatpush1.msra.mxu0 0.0
        %1429 = vmatprep.subr.mxu0 0.0
        %1430 = vmatpush1.msra.mxu0 0.0
        %1431 = vmatprep.subr.mxu0 0.0
        %1432 = vmatpush1.msra.mxu0 0.0
        %1433 = vmatprep.subr.mxu0 0.0
        %1434 = vmatpush1.msra.mxu0 0.0
        %1435 = vmatprep.subr.mxu0 0.0
        %1436 = vmatpush1.msra.mxu0 0.0
        %1437 = vmatprep.subr.mxu0 0.0
        %1438 = vmatpush1.msra.mxu0 0.0
        %1439 = vmatprep.subr.mxu0 0.0
        %1440 = vmatpush1.msra.mxu0 0.0
        %1441 = vmatprep.subr.mxu0 0.0
        %1442 = vmatpush1.msra.mxu0 0.0
        %1443 = vmatprep.subr.mxu0 0.0
        %1444 = vmatpush1.msra.mxu0 0.0
        %1445 = vmatprep.mubr.f32.mxu0 0.0
        %1446 = vmatmul.mubr.f32.gmra.mrb[0].mxu0 %v1379
        %v1447 = vpop.f32.mrb[0].mxu0
        %v1448 = vadd.f32 %v1376, %v1447
        %v1449 = vpop.f32.mrb[0].mxu0
        %1450 = vdwg.mxu0
        %v1451 = vadd.f32 %v1292, %v1448
        %v1452 = vsel %vm440, %v1451, 0.0
        %1453 = vadd.xlane.f32.xlu0 %v1452
        %v1454 = vpop.xlane.xlu0 %1453
        %v1455 = vmul.f32 %v1454, %v1272
        %v1456 = vsub.f32 %v1451, %v1455
        %v1457 = vmul.f32 %v1456, %v1456
        %v1458 = vsel %vm440, %v1457, 0.0
        %1459 = vadd.xlane.f32.xlu0 %v1458
        %v1460 = vpop.xlane.xlu0 %1459
        %v1461 = vmul.f32 %v1460, %v1272
        %v1462 = vadd.f32 %v1461, 1e-05
        %v1463 = vrsqrt.pop %v1462
        %v1464 = vmul.f32 %v1456, %v1463
        %v1465 = vlaneseq
        %v1466 = vshrl.u32 %v1465, 7
        %v1467 = vsub.s32 4, %v1466
        %v1468 = vrot.slane %v433, %v1467
        %v1469 = vmul.f32 %v1464, %v1468
        %v1470 = vlaneseq
        %v1471 = vshrl.u32 %v1470, 7
        %v1472 = vsub.s32 5, %v1471
        %v1473 = vrot.slane %v433, %v1472
        %v1474 = vadd.f32 %v1469, %v1473
        %s1475 = scalar_lea.vmem %s2, 32
        %v1476 = vld [vmem:[%s1475] sm:$0xff]
        %v1477 = vld [vmem:[%s1475 + $0x8] sm:$0xff]
        %v1478 = vld [vmem:[%s1475 + $0x10] sm:$0xff]
        %v1479 = vld [vmem:[%s1475 + $0x18] sm:$0xff]
        %s1480 = scalar_lea.vmem %s3, 1
        %v1481 = vld [vmem:[%s1480] sm:$0x1]
        %s1482 = scalar_lea.vmem %s4, 32
        %v1483 = vld [vmem:[%s1482] sm:$0xff]
        %v1484 = vld [vmem:[%s1482 + $0x8] sm:$0xff]
        %v1485 = vld [vmem:[%s1482 + $0x10] sm:$0xff]
        %v1486 = vld [vmem:[%s1482 + $0x18] sm:$0xff]
        %s1487 = scalar_lea.vmem %s5, 32
        %v1488 = vld [vmem:[%s1487] sm:$0xff]
        %v1489 = vld [vmem:[%s1487 + $0x8] sm:$0xff]
        %v1490 = vld [vmem:[%s1487 + $0x10] sm:$0xff]
        %v1491 = vld [vmem:[%s1487 + $0x18] sm:$0xff]
        %s1492 = scalar_lea.vmem %s6, 1
        %v1493 = vld [vmem:[%s1492] sm:$0x1]
        %s1494 = scalar_lea.vmem %s7, 64
        %v1495 = vld [vmem:[%s1494] sm:$0xff]
        %v1496 = vld [vmem:[%s1494 + $0x8] sm:$0xff]
        %v1497 = vld [vmem:[%s1494 + $0x10] sm:$0xff]
        %v1498 = vld [vmem:[%s1494 + $0x18] sm:$0xff]
        %v1499 = vld [vmem:[%s1494 + $0x20] sm:$0xff]
        %v1500 = vld [vmem:[%s1494 + $0x28] sm:$0xff]
        %v1501 = vld [vmem:[%s1494 + $0x30] sm:$0xff]
        %v1502 = vld [vmem:[%s1494 + $0x38] sm:$0xff]
        %s1503 = scalar_lea.vmem %s8, 8
        %v1504 = vld [vmem:[%s1503] sm:$0x3f]
        %v1506 = vlaneseq
        %v1507 = vshrl.u32 %v1506, 7
        %v1508 = vsub.s32 0, %v1507
        %v1509 = vrot.slane %v1481, %v1508
        %v1512 = vsel %vm440, %v1474, 0
        %1514 = vmatprep.subr.mxu0 0.0
        %1515 = vmatpush1.msra.mxu0 %v1476
        %1516 = vmatprep.subr.mxu0 0.0
        %1517 = vmatpush1.msra.mxu0 %v1477
        %1518 = vmatprep.subr.mxu0 0.0
        %1519 = vmatpush1.msra.mxu0 %v1478
        %1520 = vmatprep.subr.mxu0 0.0
        %1521 = vmatpush1.msra.mxu0 %v1479
        %1522 = vmatprep.subr.mxu0 0.0
        %1523 = vmatpush1.msra.mxu0 0.0
        %1524 = vmatprep.subr.mxu0 0.0
        %1525 = vmatpush1.msra.mxu0 0.0
        %1526 = vmatprep.subr.mxu0 0.0
        %1527 = vmatpush1.msra.mxu0 0.0
        %1528 = vmatprep.subr.mxu0 0.0
        %1529 = vmatpush1.msra.mxu0 0.0
        %1530 = vmatprep.subr.mxu0 0.0
        %1531 = vmatpush1.msra.mxu0 0.0
        %1532 = vmatprep.subr.mxu0 0.0
        %1533 = vmatpush1.msra.mxu0 0.0
        %1534 = vmatprep.subr.mxu0 0.0
        %1535 = vmatpush1.msra.mxu0 0.0
        %1536 = vmatprep.subr.mxu0 0.0
        %1537 = vmatpush1.msra.mxu0 0.0
        %1538 = vmatprep.subr.mxu0 0.0
        %1539 = vmatpush1.msra.mxu0 0.0
        %1540 = vmatprep.subr.mxu0 0.0
        %1541 = vmatpush1.msra.mxu0 0.0
        %1542 = vmatprep.subr.mxu0 0.0
        %1543 = vmatpush1.msra.mxu0 0.0
        %1544 = vmatprep.subr.mxu0 0.0
        %1545 = vmatpush1.msra.mxu0 0.0
        %1546 = vmatprep.subr.mxu0 0.0
        %1547 = vmatpush1.msra.mxu0 0.0
        %1548 = vmatprep.subr.mxu0 0.0
        %1549 = vmatpush1.msra.mxu0 0.0
        %1550 = vmatprep.subr.mxu0 0.0
        %1551 = vmatpush1.msra.mxu0 0.0
        %1552 = vmatprep.subr.mxu0 0.0
        %1553 = vmatpush1.msra.mxu0 0.0
        %1554 = vmatprep.subr.mxu0 0.0
        %1555 = vmatpush1.msra.mxu0 0.0
        %1556 = vmatprep.subr.mxu0 0.0
        %1557 = vmatpush1.msra.mxu0 0.0
        %1558 = vmatprep.subr.mxu0 0.0
        %1559 = vmatpush1.msra.mxu0 0.0
        %1560 = vmatprep.subr.mxu0 0.0
        %1561 = vmatpush1.msra.mxu0 0.0
        %1562 = vmatprep.subr.mxu0 0.0
        %1563 = vmatpush1.msra.mxu0 0.0
        %1564 = vmatprep.subr.mxu0 0.0
        %1565 = vmatpush1.msra.mxu0 0.0
        %1566 = vmatprep.subr.mxu0 0.0
        %1567 = vmatpush1.msra.mxu0 0.0
        %1568 = vmatprep.subr.mxu0 0.0
        %1569 = vmatpush1.msra.mxu0 0.0
        %1570 = vmatprep.subr.mxu0 0.0
        %1571 = vmatpush1.msra.mxu0 0.0
        %1572 = vmatprep.subr.mxu0 0.0
        %1573 = vmatpush1.msra.mxu0 0.0
        %1574 = vmatprep.subr.mxu0 0.0
        %1575 = vmatpush1.msra.mxu0 0.0
        %1576 = vmatprep.subr.mxu0 0.0
        %1577 = vmatpush1.msra.mxu0 0.0
        %1578 = vmatprep.mubr.f32.mxu0 0.0
        %1579 = vmatmul.mubr.f32.gmra.mrb[0].mxu0 %v1512
        %v1580 = vpop.f32.mrb[0].mxu0
        %v1581 = vadd.f32 %v1509, %v1580
        %v1582 = vpop.f32.mrb[0].mxu0
        %1583 = vdwg.mxu0
        %1585 = vrot.lane.b32.xlu0 %v1581, 96
        %v1586 = vpop.permute.xlu0 %1585
        %v1587 = vsel %vm517, %v1581, 0
        %v1589 = vsel %vm517, %v1586, 0
        %1591 = vmatprep.subr.mxu0 0.0
        %1592 = vmatpush1.xpose.msra.mxu0 %v1589
        %1593 = vmatprep.subr.mxu0 0.0
        %1594 = vmatpush1.xpose.msra.mxu0 0.0
        %1595 = vmatprep.subr.mxu0 0.0
        %1596 = vmatpush1.xpose.msra.mxu0 0.0
        %1597 = vmatprep.subr.mxu0 0.0
        %1598 = vmatpush1.xpose.msra.mxu0 0.0
        %1599 = vmatprep.subr.mxu0 0.0
        %1600 = vmatpush1.xpose.msra.mxu0 0.0
        %1601 = vmatprep.subr.mxu0 0.0
        %1602 = vmatpush1.xpose.msra.mxu0 0.0
        %1603 = vmatprep.subr.mxu0 0.0
        %1604 = vmatpush1.xpose.msra.mxu0 0.0
        %1605 = vmatprep.subr.mxu0 0.0
        %1606 = vmatpush1.xpose.msra.mxu0 0.0
        %1607 = vmatprep.subr.mxu0 0.0
        %1608 = vmatpush1.xpose.msra.mxu0 0.0
        %1609 = vmatprep.subr.mxu0 0.0
        %1610 = vmatpush1.xpose.msra.mxu0 0.0
        %1611 = vmatprep.subr.mxu0 0.0
        %1612 = vmatpush1.xpose.msra.mxu0 0.0
        %1613 = vmatprep.subr.mxu0 0.0
        %1614 = vmatpush1.xpose.msra.mxu0 0.0
        %1615 = vmatprep.subr.mxu0 0.0
        %1616 = vmatpush1.xpose.msra.mxu0 0.0
        %1617 = vmatprep.subr.mxu0 0.0
        %1618 = vmatpush1.xpose.msra.mxu0 0.0
        %1619 = vmatprep.subr.mxu0 0.0
        %1620 = vmatpush1.xpose.msra.mxu0 0.0
        %1621 = vmatprep.subr.mxu0 0.0
        %1622 = vmatpush1.xpose.msra.mxu0 0.0
        %1623 = vmatprep.subr.mxu0 0.0
        %1624 = vmatpush1.xpose.msra.mxu0 0.0
        %1625 = vmatprep.subr.mxu0 0.0
        %1626 = vmatpush1.xpose.msra.mxu0 0.0
        %1627 = vmatprep.subr.mxu0 0.0
        %1628 = vmatpush1.xpose.msra.mxu0 0.0
        %1629 = vmatprep.subr.mxu0 0.0
        %1630 = vmatpush1.xpose.msra.mxu0 0.0
        %1631 = vmatprep.subr.mxu0 0.0
        %1632 = vmatpush1.xpose.msra.mxu0 0.0
        %1633 = vmatprep.subr.mxu0 0.0
        %1634 = vmatpush1.xpose.msra.mxu0 0.0
        %1635 = vmatprep.subr.mxu0 0.0
        %1636 = vmatpush1.xpose.msra.mxu0 0.0
        %1637 = vmatprep.subr.mxu0 0.0
        %1638 = vmatpush1.xpose.msra.mxu0 0.0
        %1639 = vmatprep.subr.mxu0 0.0
        %1640 = vmatpush1.xpose.msra.mxu0 0.0
        %1641 = vmatprep.subr.mxu0 0.0
        %1642 = vmatpush1.xpose.msra.mxu0 0.0
        %1643 = vmatprep.subr.mxu0 0.0
        %1644 = vmatpush1.xpose.msra.mxu0 0.0
        %1645 = vmatprep.subr.mxu0 0.0
        %1646 = vmatpush1.xpose.msra.mxu0 0.0
        %1647 = vmatprep.subr.mxu0 0.0
        %1648 = vmatpush1.xpose.msra.mxu0 0.0
        %1649 = vmatprep.subr.mxu0 0.0
        %1650 = vmatpush1.xpose.msra.mxu0 0.0
        %1651 = vmatprep.subr.mxu0 0.0
        %1652 = vmatpush1.xpose.msra.mxu0 0.0
        %1653 = vmatprep.subr.mxu0 0.0
        %1654 = vmatpush1.xpose.msra.mxu0 0.0
        %1655 = vmatprep.mubr.f32.mxu0 0.0
        %1656 = vmatmul.mubr.f32.gmra.mrb[0].mxu0 %v1587
        %v1657 = vpop.f32.mrb[0].mxu0
        %v1658 = vadd.f32 %v410, %v1657
        %v1659 = vpop.f32.mrb[0].mxu0
        %1660 = vdwg.mxu0
        %v1661 = vsel %vm517, %v1658, -inf
        %1662 = vmax.xlane.f32.xlu0 %v1661
        %v1663 = vpop.xlane.xlu0 %1662
        %v1664 = vsub.f32 %v1658, %v1663
        %v1665 = vmul.f32 %v1664, 1.442695
        %v1666 = vpow.pop %v1665
        %v1667 = vsel %vm517, %v1666, 0.0
        %1668 = vadd.xlane.f32.xlu0 %v1667
        %v1669 = vpop.xlane.xlu0 %1668
        %v1670 = vrcp.pop %v1669
        %v1671 = vmul.f32 %v1666, %v1670
        %1672 = vrot.lane.b32.xlu0 %v1581, 64
        %v1673 = vpop.permute.xlu0 %1672
        %v1676 = vsel %vm517, %v1671, 0
        %1678 = vmatprep.subr.mxu0 0.0
        %1679 = vmatpush1.msra.mxu0 %v1673
        %1680 = vmatprep.subr.mxu0 0.0
        %1681 = vmatpush1.msra.mxu0 0.0
        %1682 = vmatprep.subr.mxu0 0.0
        %1683 = vmatpush1.msra.mxu0 0.0
        %1684 = vmatprep.subr.mxu0 0.0
        %1685 = vmatpush1.msra.mxu0 0.0
        %1686 = vmatprep.subr.mxu0 0.0
        %1687 = vmatpush1.msra.mxu0 0.0
        %1688 = vmatprep.subr.mxu0 0.0
        %1689 = vmatpush1.msra.mxu0 0.0
        %1690 = vmatprep.subr.mxu0 0.0
        %1691 = vmatpush1.msra.mxu0 0.0
        %1692 = vmatprep.subr.mxu0 0.0
        %1693 = vmatpush1.msra.mxu0 0.0
        %1694 = vmatprep.subr.mxu0 0.0
        %1695 = vmatpush1.msra.mxu0 0.0
        %1696 = vmatprep.subr.mxu0 0.0
        %1697 = vmatpush1.msra.mxu0 0.0
        %1698 = vmatprep.subr.mxu0 0.0
        %1699 = vmatpush1.msra.mxu0 0.0
        %1700 = vmatprep.subr.mxu0 0.0
        %1701 = vmatpush1.msra.mxu0 0.0
        %1702 = vmatprep.subr.mxu0 0.0
        %1703 = vmatpush1.msra.mxu0 0.0
        %1704 = vmatprep.subr.mxu0 0.0
        %1705 = vmatpush1.msra.mxu0 0.0
        %1706 = vmatprep.subr.mxu0 0.0
        %1707 = vmatpush1.msra.mxu0 0.0
        %1708 = vmatprep.subr.mxu0 0.0
        %1709 = vmatpush1.msra.mxu0 0.0
        %1710 = vmatprep.subr.mxu0 0.0
        %1711 = vmatpush1.msra.mxu0 0.0
        %1712 = vmatprep.subr.mxu0 0.0
        %1713 = vmatpush1.msra.mxu0 0.0
        %1714 = vmatprep.subr.mxu0 0.0
        %1715 = vmatpush1.msra.mxu0 0.0
        %1716 = vmatprep.subr.mxu0 0.0
        %1717 = vmatpush1.msra.mxu0 0.0
        %1718 = vmatprep.subr.mxu0 0.0
        %1719 = vmatpush1.msra.mxu0 0.0
        %1720 = vmatprep.subr.mxu0 0.0
        %1721 = vmatpush1.msra.mxu0 0.0
        %1722 = vmatprep.subr.mxu0 0.0
        %1723 = vmatpush1.msra.mxu0 0.0
        %1724 = vmatprep.subr.mxu0 0.0
        %1725 = vmatpush1.msra.mxu0 0.0
        %1726 = vmatprep.subr.mxu0 0.0
        %1727 = vmatpush1.msra.mxu0 0.0
        %1728 = vmatprep.subr.mxu0 0.0
        %1729 = vmatpush1.msra.mxu0 0.0
        %1730 = vmatprep.subr.mxu0 0.0
        %1731 = vmatpush1.msra.mxu0 0.0
        %1732 = vmatprep.subr.mxu0 0.0
        %1733 = vmatpush1.msra.mxu0 0.0
        %1734 = vmatprep.subr.mxu0 0.0
        %1735 = vmatpush1.msra.mxu0 0.0
        %1736 = vmatprep.subr.mxu0 0.0
        %1737 = vmatpush1.msra.mxu0 0.0
        %1738 = vmatprep.subr.mxu0 0.0
        %1739 = vmatpush1.msra.mxu0 0.0
        %1740 = vmatprep.subr.mxu0 0.0
        %1741 = vmatpush1.msra.mxu0 0.0
        %1742 = vmatprep.mubr.f32.mxu0 0.0
        %1743 = vmatmul.mubr.f32.gmra.mrb[0].mxu0 %v1676
        %v1744 = vpop.f32.mrb[0].mxu0
        %v1745 = vadd.f32 0.0, %v1744
        %v1746 = vpop.f32.mrb[0].mxu0
        %1747 = vdwg.mxu0
        %1748 = vrot.lane.b32.xlu0 %v1581, 120
        %v1749 = vpop.permute.xlu0 %1748
        %1750 = vrot.lane.b32.xlu0 %v1581, 88
        %v1751 = vpop.permute.xlu0 %1750
        %v1752 = vsel %vm517, %v1749, 0
        %v1754 = vsel %vm517, %v1751, 0
        %1756 = vmatprep.subr.mxu0 0.0
        %1757 = vmatpush1.xpose.msra.mxu0 %v1754
        %1758 = vmatprep.subr.mxu0 0.0
        %1759 = vmatpush1.xpose.msra.mxu0 0.0
        %1760 = vmatprep.subr.mxu0 0.0
        %1761 = vmatpush1.xpose.msra.mxu0 0.0
        %1762 = vmatprep.subr.mxu0 0.0
        %1763 = vmatpush1.xpose.msra.mxu0 0.0
        %1764 = vmatprep.subr.mxu0 0.0
        %1765 = vmatpush1.xpose.msra.mxu0 0.0
        %1766 = vmatprep.subr.mxu0 0.0
        %1767 = vmatpush1.xpose.msra.mxu0 0.0
        %1768 = vmatprep.subr.mxu0 0.0
        %1769 = vmatpush1.xpose.msra.mxu0 0.0
        %1770 = vmatprep.subr.mxu0 0.0
        %1771 = vmatpush1.xpose.msra.mxu0 0.0
        %1772 = vmatprep.subr.mxu0 0.0
        %1773 = vmatpush1.xpose.msra.mxu0 0.0
        %1774 = vmatprep.subr.mxu0 0.0
        %1775 = vmatpush1.xpose.msra.mxu0 0.0
        %1776 = vmatprep.subr.mxu0 0.0
        %1777 = vmatpush1.xpose.msra.mxu0 0.0
        %1778 = vmatprep.subr.mxu0 0.0
        %1779 = vmatpush1.xpose.msra.mxu0 0.0
        %1780 = vmatprep.subr.mxu0 0.0
        %1781 = vmatpush1.xpose.msra.mxu0 0.0
        %1782 = vmatprep.subr.mxu0 0.0
        %1783 = vmatpush1.xpose.msra.mxu0 0.0
        %1784 = vmatprep.subr.mxu0 0.0
        %1785 = vmatpush1.xpose.msra.mxu0 0.0
        %1786 = vmatprep.subr.mxu0 0.0
        %1787 = vmatpush1.xpose.msra.mxu0 0.0
        %1788 = vmatprep.subr.mxu0 0.0
        %1789 = vmatpush1.xpose.msra.mxu0 0.0
        %1790 = vmatprep.subr.mxu0 0.0
        %1791 = vmatpush1.xpose.msra.mxu0 0.0
        %1792 = vmatprep.subr.mxu0 0.0
        %1793 = vmatpush1.xpose.msra.mxu0 0.0
        %1794 = vmatprep.subr.mxu0 0.0
        %1795 = vmatpush1.xpose.msra.mxu0 0.0
        %1796 = vmatprep.subr.mxu0 0.0
        %1797 = vmatpush1.xpose.msra.mxu0 0.0
        %1798 = vmatprep.subr.mxu0 0.0
        %1799 = vmatpush1.xpose.msra.mxu0 0.0
        %1800 = vmatprep.subr.mxu0 0.0
        %1801 = vmatpush1.xpose.msra.mxu0 0.0
        %1802 = vmatprep.subr.mxu0 0.0
        %1803 = vmatpush1.xpose.msra.mxu0 0.0
        %1804 = vmatprep.subr.mxu0 0.0
        %1805 = vmatpush1.xpose.msra.mxu0 0.0
        %1806 = vmatprep.subr.mxu0 0.0
        %1807 = vmatpush1.xpose.msra.mxu0 0.0
        %1808 = vmatprep.subr.mxu0 0.0
        %1809 = vmatpush1.xpose.msra.mxu0 0.0
        %1810 = vmatprep.subr.mxu0 0.0
        %1811 = vmatpush1.xpose.msra.mxu0 0.0
        %1812 = vmatprep.subr.mxu0 0.0
        %1813 = vmatpush1.xpose.msra.mxu0 0.0
        %1814 = vmatprep.subr.mxu0 0.0
        %1815 = vmatpush1.xpose.msra.mxu0 0.0
        %1816 = vmatprep.subr.mxu0 0.0
        %1817 = vmatpush1.xpose.msra.mxu0 0.0
        %1818 = vmatprep.subr.mxu0 0.0
        %1819 = vmatpush1.xpose.msra.mxu0 0.0
        %1820 = vmatprep.mubr.f32.mxu0 0.0
        %1821 = vmatmul.mubr.f32.gmra.mrb[0].mxu0 %v1752
        %v1822 = vpop.f32.mrb[0].mxu0
        %v1823 = vadd.f32 %v410, %v1822
        %v1824 = vpop.f32.mrb[0].mxu0
        %1825 = vdwg.mxu0
        %v1826 = vsel %vm517, %v1823, -inf
        %1827 = vmax.xlane.f32.xlu0 %v1826
        %v1828 = vpop.xlane.xlu0 %1827
        %v1829 = vsub.f32 %v1823, %v1828
        %v1830 = vmul.f32 %v1829, 1.442695
        %v1831 = vpow.pop %v1830
        %v1832 = vsel %vm517, %v1831, 0.0
        %1833 = vadd.xlane.f32.xlu0 %v1832
        %v1834 = vpop.xlane.xlu0 %1833
        %v1835 = vrcp.pop %v1834
        %v1836 = vmul.f32 %v1831, %v1835
        %1837 = vrot.lane.b32.xlu0 %v1581, 56
        %v1838 = vpop.permute.xlu0 %1837
        %v1841 = vsel %vm517, %v1836, 0
        %1843 = vmatprep.subr.mxu0 0.0
        %1844 = vmatpush1.msra.mxu0 %v1838
        %1845 = vmatprep.subr.mxu0 0.0
        %1846 = vmatpush1.msra.mxu0 0.0
        %1847 = vmatprep.subr.mxu0 0.0
        %1848 = vmatpush1.msra.mxu0 0.0
        %1849 = vmatprep.subr.mxu0 0.0
        %1850 = vmatpush1.msra.mxu0 0.0
        %1851 = vmatprep.subr.mxu0 0.0
        %1852 = vmatpush1.msra.mxu0 0.0
        %1853 = vmatprep.subr.mxu0 0.0
        %1854 = vmatpush1.msra.mxu0 0.0
        %1855 = vmatprep.subr.mxu0 0.0
        %1856 = vmatpush1.msra.mxu0 0.0
        %1857 = vmatprep.subr.mxu0 0.0
        %1858 = vmatpush1.msra.mxu0 0.0
        %1859 = vmatprep.subr.mxu0 0.0
        %1860 = vmatpush1.msra.mxu0 0.0
        %1861 = vmatprep.subr.mxu0 0.0
        %1862 = vmatpush1.msra.mxu0 0.0
        %1863 = vmatprep.subr.mxu0 0.0
        %1864 = vmatpush1.msra.mxu0 0.0
        %1865 = vmatprep.subr.mxu0 0.0
        %1866 = vmatpush1.msra.mxu0 0.0
        %1867 = vmatprep.subr.mxu0 0.0
        %1868 = vmatpush1.msra.mxu0 0.0
        %1869 = vmatprep.subr.mxu0 0.0
        %1870 = vmatpush1.msra.mxu0 0.0
        %1871 = vmatprep.subr.mxu0 0.0
        %1872 = vmatpush1.msra.mxu0 0.0
        %1873 = vmatprep.subr.mxu0 0.0
        %1874 = vmatpush1.msra.mxu0 0.0
        %1875 = vmatprep.subr.mxu0 0.0
        %1876 = vmatpush1.msra.mxu0 0.0
        %1877 = vmatprep.subr.mxu0 0.0
        %1878 = vmatpush1.msra.mxu0 0.0
        %1879 = vmatprep.subr.mxu0 0.0
        %1880 = vmatpush1.msra.mxu0 0.0
        %1881 = vmatprep.subr.mxu0 0.0
        %1882 = vmatpush1.msra.mxu0 0.0
        %1883 = vmatprep.subr.mxu0 0.0
        %1884 = vmatpush1.msra.mxu0 0.0
        %1885 = vmatprep.subr.mxu0 0.0
        %1886 = vmatpush1.msra.mxu0 0.0
        %1887 = vmatprep.subr.mxu0 0.0
        %1888 = vmatpush1.msra.mxu0 0.0
        %1889 = vmatprep.subr.mxu0 0.0
        %1890 = vmatpush1.msra.mxu0 0.0
        %1891 = vmatprep.subr.mxu0 0.0
        %1892 = vmatpush1.msra.mxu0 0.0
        %1893 = vmatprep.subr.mxu0 0.0
        %1894 = vmatpush1.msra.mxu0 0.0
        %1895 = vmatprep.subr.mxu0 0.0
        %1896 = vmatpush1.msra.mxu0 0.0
        %1897 = vmatprep.subr.mxu0 0.0
        %1898 = vmatpush1.msra.mxu0 0.0
        %1899 = vmatprep.subr.mxu0 0.0
        %1900 = vmatpush1.msra.mxu0 0.0
        %1901 = vmatprep.subr.mxu0 0.0
        %1902 = vmatpush1.msra.mxu0 0.0
        %1903 = vmatprep.subr.mxu0 0.0
        %1904 = vmatpush1.msra.mxu0 0.0
        %1905 = vmatprep.subr.mxu0 0.0
        %1906 = vmatpush1.msra.mxu0 0.0
        %1907 = vmatprep.mubr.f32.mxu0 0.0
        %1908 = vmatmul.mubr.f32.gmra.mrb[0].mxu0 %v1841
        %v1909 = vpop.f32.mrb[0].mxu0
        %v1910 = vadd.f32 0.0, %v1909
        %v1911 = vpop.f32.mrb[0].mxu0
        %1912 = vdwg.mxu0
        %1913 = vrot.lane.b32.xlu0 %v1581, 112
        %v1914 = vpop.permute.xlu0 %1913
        %1915 = vrot.lane.b32.xlu0 %v1581, 80
        %v1916 = vpop.permute.xlu0 %1915
        %v1917 = vsel %vm517, %v1914, 0
        %v1919 = vsel %vm517, %v1916, 0
        %1921 = vmatprep.subr.mxu0 0.0
        %1922 = vmatpush1.xpose.msra.mxu0 %v1919
        %1923 = vmatprep.subr.mxu0 0.0
        %1924 = vmatpush1.xpose.msra.mxu0 0.0
        %1925 = vmatprep.subr.mxu0 0.0
        %1926 = vmatpush1.xpose.msra.mxu0 0.0
        %1927 = vmatprep.subr.mxu0 0.0
        %1928 = vmatpush1.xpose.msra.mxu0 0.0
        %1929 = vmatprep.subr.mxu0 0.0
        %1930 = vmatpush1.xpose.msra.mxu0 0.0
        %1931 = vmatprep.subr.mxu0 0.0
        %1932 = vmatpush1.xpose.msra.mxu0 0.0
        %1933 = vmatprep.subr.mxu0 0.0
        %1934 = vmatpush1.xpose.msra.mxu0 0.0
        %1935 = vmatprep.subr.mxu0 0.0
        %1936 = vmatpush1.xpose.msra.mxu0 0.0
        %1937 = vmatprep.subr.mxu0 0.0
        %1938 = vmatpush1.xpose.msra.mxu0 0.0
        %1939 = vmatprep.subr.mxu0 0.0
        %1940 = vmatpush1.xpose.msra.mxu0 0.0
        %1941 = vmatprep.subr.mxu0 0.0
        %1942 = vmatpush1.xpose.msra.mxu0 0.0
        %1943 = vmatprep.subr.mxu0 0.0
        %1944 = vmatpush1.xpose.msra.mxu0 0.0
        %1945 = vmatprep.subr.mxu0 0.0
        %1946 = vmatpush1.xpose.msra.mxu0 0.0
        %1947 = vmatprep.subr.mxu0 0.0
        %1948 = vmatpush1.xpose.msra.mxu0 0.0
        %1949 = vmatprep.subr.mxu0 0.0
        %1950 = vmatpush1.xpose.msra.mxu0 0.0
        %1951 = vmatprep.subr.mxu0 0.0
        %1952 = vmatpush1.xpose.msra.mxu0 0.0
        %1953 = vmatprep.subr.mxu0 0.0
        %1954 = vmatpush1.xpose.msra.mxu0 0.0
        %1955 = vmatprep.subr.mxu0 0.0
        %1956 = vmatpush1.xpose.msra.mxu0 0.0
        %1957 = vmatprep.subr.mxu0 0.0
        %1958 = vmatpush1.xpose.msra.mxu0 0.0
        %1959 = vmatprep.subr.mxu0 0.0
        %1960 = vmatpush1.xpose.msra.mxu0 0.0
        %1961 = vmatprep.subr.mxu0 0.0
        %1962 = vmatpush1.xpose.msra.mxu0 0.0
        %1963 = vmatprep.subr.mxu0 0.0
        %1964 = vmatpush1.xpose.msra.mxu0 0.0
        %1965 = vmatprep.subr.mxu0 0.0
        %1966 = vmatpush1.xpose.msra.mxu0 0.0
        %1967 = vmatprep.subr.mxu0 0.0
        %1968 = vmatpush1.xpose.msra.mxu0 0.0
        %1969 = vmatprep.subr.mxu0 0.0
        %1970 = vmatpush1.xpose.msra.mxu0 0.0
        %1971 = vmatprep.subr.mxu0 0.0
        %1972 = vmatpush1.xpose.msra.mxu0 0.0
        %1973 = vmatprep.subr.mxu0 0.0
        %1974 = vmatpush1.xpose.msra.mxu0 0.0
        %1975 = vmatprep.subr.mxu0 0.0
        %1976 = vmatpush1.xpose.msra.mxu0 0.0
        %1977 = vmatprep.subr.mxu0 0.0
        %1978 = vmatpush1.xpose.msra.mxu0 0.0
        %1979 = vmatprep.subr.mxu0 0.0
        %1980 = vmatpush1.xpose.msra.mxu0 0.0
        %1981 = vmatprep.subr.mxu0 0.0
        %1982 = vmatpush1.xpose.msra.mxu0 0.0
        %1983 = vmatprep.subr.mxu0 0.0
        %1984 = vmatpush1.xpose.msra.mxu0 0.0
        %1985 = vmatprep.mubr.f32.mxu0 0.0
        %1986 = vmatmul.mubr.f32.gmra.mrb[0].mxu0 %v1917
        %v1987 = vpop.f32.mrb[0].mxu0
        %v1988 = vadd.f32 %v410, %v1987
        %v1989 = vpop.f32.mrb[0].mxu0
        %1990 = vdwg.mxu0
        %v1991 = vsel %vm517, %v1988, -inf
        %1992 = vmax.xlane.f32.xlu0 %v1991
        %v1993 = vpop.xlane.xlu0 %1992
        %v1994 = vsub.f32 %v1988, %v1993
        %v1995 = vmul.f32 %v1994, 1.442695
        %v1996 = vpow.pop %v1995
        %v1997 = vsel %vm517, %v1996, 0.0
        %1998 = vadd.xlane.f32.xlu0 %v1997
        %v1999 = vpop.xlane.xlu0 %1998
        %v2000 = vrcp.pop %v1999
        %v2001 = vmul.f32 %v1996, %v2000
        %2002 = vrot.lane.b32.xlu0 %v1581, 48
        %v2003 = vpop.permute.xlu0 %2002
        %v2006 = vsel %vm517, %v2001, 0
        %2008 = vmatprep.subr.mxu0 0.0
        %2009 = vmatpush1.msra.mxu0 %v2003
        %2010 = vmatprep.subr.mxu0 0.0
        %2011 = vmatpush1.msra.mxu0 0.0
        %2012 = vmatprep.subr.mxu0 0.0
        %2013 = vmatpush1.msra.mxu0 0.0
        %2014 = vmatprep.subr.mxu0 0.0
        %2015 = vmatpush1.msra.mxu0 0.0
        %2016 = vmatprep.subr.mxu0 0.0
        %2017 = vmatpush1.msra.mxu0 0.0
        %2018 = vmatprep.subr.mxu0 0.0
        %2019 = vmatpush1.msra.mxu0 0.0
        %2020 = vmatprep.subr.mxu0 0.0
        %2021 = vmatpush1.msra.mxu0 0.0
        %2022 = vmatprep.subr.mxu0 0.0
        %2023 = vmatpush1.msra.mxu0 0.0
        %2024 = vmatprep.subr.mxu0 0.0
        %2025 = vmatpush1.msra.mxu0 0.0
        %2026 = vmatprep.subr.mxu0 0.0
        %2027 = vmatpush1.msra.mxu0 0.0
        %2028 = vmatprep.subr.mxu0 0.0
        %2029 = vmatpush1.msra.mxu0 0.0
        %2030 = vmatprep.subr.mxu0 0.0
        %2031 = vmatpush1.msra.mxu0 0.0
        %2032 = vmatprep.subr.mxu0 0.0
        %2033 = vmatpush1.msra.mxu0 0.0
        %2034 = vmatprep.subr.mxu0 0.0
        %2035 = vmatpush1.msra.mxu0 0.0
        %2036 = vmatprep.subr.mxu0 0.0
        %2037 = vmatpush1.msra.mxu0 0.0
        %2038 = vmatprep.subr.mxu0 0.0
        %2039 = vmatpush1.msra.mxu0 0.0
        %2040 = vmatprep.subr.mxu0 0.0
        %2041 = vmatpush1.msra.mxu0 0.0
        %2042 = vmatprep.subr.mxu0 0.0
        %2043 = vmatpush1.msra.mxu0 0.0
        %2044 = vmatprep.subr.mxu0 0.0
        %2045 = vmatpush1.msra.mxu0 0.0
        %2046 = vmatprep.subr.mxu0 0.0
        %2047 = vmatpush1.msra.mxu0 0.0
        %2048 = vmatprep.subr.mxu0 0.0
        %2049 = vmatpush1.msra.mxu0 0.0
        %2050 = vmatprep.subr.mxu0 0.0
        %2051 = vmatpush1.msra.mxu0 0.0
        %2052 = vmatprep.subr.mxu0 0.0
        %2053 = vmatpush1.msra.mxu0 0.0
        %2054 = vmatprep.subr.mxu0 0.0
        %2055 = vmatpush1.msra.mxu0 0.0
        %2056 = vmatprep.subr.mxu0 0.0
        %2057 = vmatpush1.msra.mxu0 0.0
        %2058 = vmatprep.subr.mxu0 0.0
        %2059 = vmatpush1.msra.mxu0 0.0
        %2060 = vmatprep.subr.mxu0 0.0
        %2061 = vmatpush1.msra.mxu0 0.0
        %2062 = vmatprep.subr.mxu0 0.0
        %2063 = vmatpush1.msra.mxu0 0.0
        %2064 = vmatprep.subr.mxu0 0.0
        %2065 = vmatpush1.msra.mxu0 0.0
        %2066 = vmatprep.subr.mxu0 0.0
        %2067 = vmatpush1.msra.mxu0 0.0
        %2068 = vmatprep.subr.mxu0 0.0
        %2069 = vmatpush1.msra.mxu0 0.0
        %2070 = vmatprep.subr.mxu0 0.0
        %2071 = vmatpush1.msra.mxu0 0.0
        %2072 = vmatprep.mubr.f32.mxu0 0.0
        %2073 = vmatmul.mubr.f32.gmra.mrb[0].mxu0 %v2006
        %v2074 = vpop.f32.mrb[0].mxu0
        %v2075 = vadd.f32 0.0, %v2074
        %v2076 = vpop.f32.mrb[0].mxu0
        %2077 = vdwg.mxu0
        %2078 = vrot.lane.b32.xlu0 %v1581, 104
        %v2079 = vpop.permute.xlu0 %2078
        %2080 = vrot.lane.b32.xlu0 %v1581, 72
        %v2081 = vpop.permute.xlu0 %2080
        %v2082 = vsel %vm517, %v2079, 0
        %v2084 = vsel %vm517, %v2081, 0
        %2086 = vmatprep.subr.mxu0 0.0
        %2087 = vmatpush1.xpose.msra.mxu0 %v2084
        %2088 = vmatprep.subr.mxu0 0.0
        %2089 = vmatpush1.xpose.msra.mxu0 0.0
        %2090 = vmatprep.subr.mxu0 0.0
        %2091 = vmatpush1.xpose.msra.mxu0 0.0
        %2092 = vmatprep.subr.mxu0 0.0
        %2093 = vmatpush1.xpose.msra.mxu0 0.0
        %2094 = vmatprep.subr.mxu0 0.0
        %2095 = vmatpush1.xpose.msra.mxu0 0.0
        %2096 = vmatprep.subr.mxu0 0.0
        %2097 = vmatpush1.xpose.msra.mxu0 0.0
        %2098 = vmatprep.subr.mxu0 0.0
        %2099 = vmatpush1.xpose.msra.mxu0 0.0
        %2100 = vmatprep.subr.mxu0 0.0
        %2101 = vmatpush1.xpose.msra.mxu0 0.0
        %2102 = vmatprep.subr.mxu0 0.0
        %2103 = vmatpush1.xpose.msra.mxu0 0.0
        %2104 = vmatprep.subr.mxu0 0.0
        %2105 = vmatpush1.xpose.msra.mxu0 0.0
        %2106 = vmatprep.subr.mxu0 0.0
        %2107 = vmatpush1.xpose.msra.mxu0 0.0
        %2108 = vmatprep.subr.mxu0 0.0
        %2109 = vmatpush1.xpose.msra.mxu0 0.0
        %2110 = vmatprep.subr.mxu0 0.0
        %2111 = vmatpush1.xpose.msra.mxu0 0.0
        %2112 = vmatprep.subr.mxu0 0.0
        %2113 = vmatpush1.xpose.msra.mxu0 0.0
        %2114 = vmatprep.subr.mxu0 0.0
        %2115 = vmatpush1.xpose.msra.mxu0 0.0
        %2116 = vmatprep.subr.mxu0 0.0
        %2117 = vmatpush1.xpose.msra.mxu0 0.0
        %2118 = vmatprep.subr.mxu0 0.0
        %2119 = vmatpush1.xpose.msra.mxu0 0.0
        %2120 = vmatprep.subr.mxu0 0.0
        %2121 = vmatpush1.xpose.msra.mxu0 0.0
        %2122 = vmatprep.subr.mxu0 0.0
        %2123 = vmatpush1.xpose.msra.mxu0 0.0
        %2124 = vmatprep.subr.mxu0 0.0
        %2125 = vmatpush1.xpose.msra.mxu0 0.0
        %2126 = vmatprep.subr.mxu0 0.0
        %2127 = vmatpush1.xpose.msra.mxu0 0.0
        %2128 = vmatprep.subr.mxu0 0.0
        %2129 = vmatpush1.xpose.msra.mxu0 0.0
        %2130 = vmatprep.subr.mxu0 0.0
        %2131 = vmatpush1.xpose.msra.mxu0 0.0
        %2132 = vmatprep.subr.mxu0 0.0
        %2133 = vmatpush1.xpose.msra.mxu0 0.0
        %2134 = vmatprep.subr.mxu0 0.0
        %2135 = vmatpush1.xpose.msra.mxu0 0.0
        %2136 = vmatprep.subr.mxu0 0.0
        %2137 = vmatpush1.xpose.msra.mxu0 0.0
        %2138 = vmatprep.subr.mxu0 0.0
        %2139 = vmatpush1.xpose.msra.mxu0 0.0
        %2140 = vmatprep.subr.mxu0 0.0
        %2141 = vmatpush1.xpose.msra.mxu0 0.0
        %2142 = vmatprep.subr.mxu0 0.0
        %2143 = vmatpush1.xpose.msra.mxu0 0.0
        %2144 = vmatprep.subr.mxu0 0.0
        %2145 = vmatpush1.xpose.msra.mxu0 0.0
        %2146 = vmatprep.subr.mxu0 0.0
        %2147 = vmatpush1.xpose.msra.mxu0 0.0
        %2148 = vmatprep.subr.mxu0 0.0
        %2149 = vmatpush1.xpose.msra.mxu0 0.0
        %2150 = vmatprep.mubr.f32.mxu0 0.0
        %2151 = vmatmul.mubr.f32.gmra.mrb[0].mxu0 %v2082
        %v2152 = vpop.f32.mrb[0].mxu0
        %v2153 = vadd.f32 %v410, %v2152
        %v2154 = vpop.f32.mrb[0].mxu0
        %2155 = vdwg.mxu0
        %v2156 = vsel %vm517, %v2153, -inf
        %2157 = vmax.xlane.f32.xlu0 %v2156
        %v2158 = vpop.xlane.xlu0 %2157
        %v2159 = vsub.f32 %v2153, %v2158
        %v2160 = vmul.f32 %v2159, 1.442695
        %v2161 = vpow.pop %v2160
        %v2162 = vsel %vm517, %v2161, 0.0
        %2163 = vadd.xlane.f32.xlu0 %v2162
        %v2164 = vpop.xlane.xlu0 %2163
        %v2165 = vrcp.pop %v2164
        %v2166 = vmul.f32 %v2161, %v2165
        %2167 = vrot.lane.b32.xlu0 %v1581, 40
        %v2168 = vpop.permute.xlu0 %2167
        %v2171 = vsel %vm517, %v2166, 0
        %2173 = vmatprep.subr.mxu0 0.0
        %2174 = vmatpush1.msra.mxu0 %v2168
        %2175 = vmatprep.subr.mxu0 0.0
        %2176 = vmatpush1.msra.mxu0 0.0
        %2177 = vmatprep.subr.mxu0 0.0
        %2178 = vmatpush1.msra.mxu0 0.0
        %2179 = vmatprep.subr.mxu0 0.0
        %2180 = vmatpush1.msra.mxu0 0.0
        %2181 = vmatprep.subr.mxu0 0.0
        %2182 = vmatpush1.msra.mxu0 0.0
        %2183 = vmatprep.subr.mxu0 0.0
        %2184 = vmatpush1.msra.mxu0 0.0
        %2185 = vmatprep.subr.mxu0 0.0
        %2186 = vmatpush1.msra.mxu0 0.0
        %2187 = vmatprep.subr.mxu0 0.0
        %2188 = vmatpush1.msra.mxu0 0.0
        %2189 = vmatprep.subr.mxu0 0.0
        %2190 = vmatpush1.msra.mxu0 0.0
        %2191 = vmatprep.subr.mxu0 0.0
        %2192 = vmatpush1.msra.mxu0 0.0
        %2193 = vmatprep.subr.mxu0 0.0
        %2194 = vmatpush1.msra.mxu0 0.0
        %2195 = vmatprep.subr.mxu0 0.0
        %2196 = vmatpush1.msra.mxu0 0.0
        %2197 = vmatprep.subr.mxu0 0.0
        %2198 = vmatpush1.msra.mxu0 0.0
        %2199 = vmatprep.subr.mxu0 0.0
        %2200 = vmatpush1.msra.mxu0 0.0
        %2201 = vmatprep.subr.mxu0 0.0
        %2202 = vmatpush1.msra.mxu0 0.0
        %2203 = vmatprep.subr.mxu0 0.0
        %2204 = vmatpush1.msra.mxu0 0.0
        %2205 = vmatprep.subr.mxu0 0.0
        %2206 = vmatpush1.msra.mxu0 0.0
        %2207 = vmatprep.subr.mxu0 0.0
        %2208 = vmatpush1.msra.mxu0 0.0
        %2209 = vmatprep.subr.mxu0 0.0
        %2210 = vmatpush1.msra.mxu0 0.0
        %2211 = vmatprep.subr.mxu0 0.0
        %2212 = vmatpush1.msra.mxu0 0.0
        %2213 = vmatprep.subr.mxu0 0.0
        %2214 = vmatpush1.msra.mxu0 0.0
        %2215 = vmatprep.subr.mxu0 0.0
        %2216 = vmatpush1.msra.mxu0 0.0
        %2217 = vmatprep.subr.mxu0 0.0
        %2218 = vmatpush1.msra.mxu0 0.0
        %2219 = vmatprep.subr.mxu0 0.0
        %2220 = vmatpush1.msra.mxu0 0.0
        %2221 = vmatprep.subr.mxu0 0.0
        %2222 = vmatpush1.msra.mxu0 0.0
        %2223 = vmatprep.subr.mxu0 0.0
        %2224 = vmatpush1.msra.mxu0 0.0
        %2225 = vmatprep.subr.mxu0 0.0
        %2226 = vmatpush1.msra.mxu0 0.0
        %2227 = vmatprep.subr.mxu0 0.0
        %2228 = vmatpush1.msra.mxu0 0.0
        %2229 = vmatprep.subr.mxu0 0.0
        %2230 = vmatpush1.msra.mxu0 0.0
        %2231 = vmatprep.subr.mxu0 0.0
        %2232 = vmatpush1.msra.mxu0 0.0
        %2233 = vmatprep.subr.mxu0 0.0
        %2234 = vmatpush1.msra.mxu0 0.0
        %2235 = vmatprep.subr.mxu0 0.0
        %2236 = vmatpush1.msra.mxu0 0.0
        %2237 = vmatprep.mubr.f32.mxu0 0.0
        %2238 = vmatmul.mubr.f32.gmra.mrb[0].mxu0 %v2171
        %v2239 = vpop.f32.mrb[0].mxu0
        %v2240 = vadd.f32 0.0, %v2239
        %v2241 = vpop.f32.mrb[0].mxu0
        %2242 = vdwg.mxu0
        %2244 = vrot.lane.b32.xlu0 %v1910, 8
        %v2245 = vpop.permute.xlu0 %2244
        %2248 = vrot.lane.b32.xlu0 %v2075, 16
        %v2249 = vpop.permute.xlu0 %2248
        %2252 = vrot.lane.b32.xlu0 %v2240, 24
        %v2253 = vpop.permute.xlu0 %2252
        %v2255 = vsel %vm517, %v1745, %v2245
        %v2256 = vsel %vm1187, %v2255, %v2249
        %v2257 = vsel %vm1189, %v2256, %v2253
        %v2258 = vlaneseq
        %v2259 = vshrl.u32 %v2258, 7
        %v2260 = vsub.s32 0, %v2259
        %v2261 = vrot.slane %v1504, %v2260
        %v2263 = vsel %vm440, %v2257, 0
        %2265 = vmatprep.subr.mxu0 0.0
        %2266 = vmatpush1.msra.mxu0 %v1483
        %2267 = vmatprep.subr.mxu0 0.0
        %2268 = vmatpush1.msra.mxu0 %v1484
        %2269 = vmatprep.subr.mxu0 0.0
        %2270 = vmatpush1.msra.mxu0 %v1485
        %2271 = vmatprep.subr.mxu0 0.0
        %2272 = vmatpush1.msra.mxu0 %v1486
        %2273 = vmatprep.subr.mxu0 0.0
        %2274 = vmatpush1.msra.mxu0 0.0
        %2275 = vmatprep.subr.mxu0 0.0
        %2276 = vmatpush1.msra.mxu0 0.0
        %2277 = vmatprep.subr.mxu0 0.0
        %2278 = vmatpush1.msra.mxu0 0.0
        %2279 = vmatprep.subr.mxu0 0.0
        %2280 = vmatpush1.msra.mxu0 0.0
        %2281 = vmatprep.subr.mxu0 0.0
        %2282 = vmatpush1.msra.mxu0 0.0
        %2283 = vmatprep.subr.mxu0 0.0
        %2284 = vmatpush1.msra.mxu0 0.0
        %2285 = vmatprep.subr.mxu0 0.0
        %2286 = vmatpush1.msra.mxu0 0.0
        %2287 = vmatprep.subr.mxu0 0.0
        %2288 = vmatpush1.msra.mxu0 0.0
        %2289 = vmatprep.subr.mxu0 0.0
        %2290 = vmatpush1.msra.mxu0 0.0
        %2291 = vmatprep.subr.mxu0 0.0
        %2292 = vmatpush1.msra.mxu0 0.0
        %2293 = vmatprep.subr.mxu0 0.0
        %2294 = vmatpush1.msra.mxu0 0.0
        %2295 = vmatprep.subr.mxu0 0.0
        %2296 = vmatpush1.msra.mxu0 0.0
        %2297 = vmatprep.subr.mxu0 0.0
        %2298 = vmatpush1.msra.mxu0 0.0
        %2299 = vmatprep.subr.mxu0 0.0
        %2300 = vmatpush1.msra.mxu0 0.0
        %2301 = vmatprep.subr.mxu0 0.0
        %2302 = vmatpush1.msra.mxu0 0.0
        %2303 = vmatprep.subr.mxu0 0.0
        %2304 = vmatpush1.msra.mxu0 0.0
        %2305 = vmatprep.subr.mxu0 0.0
        %2306 = vmatpush1.msra.mxu0 0.0
        %2307 = vmatprep.subr.mxu0 0.0
        %2308 = vmatpush1.msra.mxu0 0.0
        %2309 = vmatprep.subr.mxu0 0.0
        %2310 = vmatpush1.msra.mxu0 0.0
        %2311 = vmatprep.subr.mxu0 0.0
        %2312 = vmatpush1.msra.mxu0 0.0
        %2313 = vmatprep.subr.mxu0 0.0
        %2314 = vmatpush1.msra.mxu0 0.0
        %2315 = vmatprep.subr.mxu0 0.0
        %2316 = vmatpush1.msra.mxu0 0.0
        %2317 = vmatprep.subr.mxu0 0.0
        %2318 = vmatpush1.msra.mxu0 0.0
        %2319 = vmatprep.subr.mxu0 0.0
        %2320 = vmatpush1.msra.mxu0 0.0
        %2321 = vmatprep.subr.mxu0 0.0
        %2322 = vmatpush1.msra.mxu0 0.0
        %2323 = vmatprep.subr.mxu0 0.0
        %2324 = vmatpush1.msra.mxu0 0.0
        %2325 = vmatprep.subr.mxu0 0.0
        %2326 = vmatpush1.msra.mxu0 0.0
        %2327 = vmatprep.subr.mxu0 0.0
        %2328 = vmatpush1.msra.mxu0 0.0
        %2329 = vmatprep.mubr.f32.mxu0 0.0
        %2330 = vmatmul.mubr.f32.gmra.mrb[0].mxu0 %v2263
        %v2331 = vpop.f32.mrb[0].mxu0
        %v2332 = vadd.f32 %v2261, %v2331
        %v2333 = vpop.f32.mrb[0].mxu0
        %2334 = vdwg.mxu0
        %v2335 = vadd.f32 %v1474, %v2332
        %v2336 = vsel %vm440, %v2335, 0.0
        %2337 = vadd.xlane.f32.xlu0 %v2336
        %v2338 = vpop.xlane.xlu0 %2337
        %v2339 = vmul.f32 %v2338, %v1272
        %v2340 = vsub.f32 %v2335, %v2339
        %v2341 = vmul.f32 %v2340, %v2340
        %v2342 = vsel %vm440, %v2341, 0.0
        %2343 = vadd.xlane.f32.xlu0 %v2342
        %v2344 = vpop.xlane.xlu0 %2343
        %v2345 = vmul.f32 %v2344, %v1272
        %v2346 = vadd.f32 %v2345, 1e-05
        %v2347 = vrsqrt.pop %v2346
        %v2348 = vmul.f32 %v2340, %v2347
        %v2349 = vlaneseq
        %v2350 = vshrl.u32 %v2349, 7
        %v2351 = vsub.s32 2, %v2350
        %v2352 = vrot.slane %v1504, %v2351
        %v2353 = vmul.f32 %v2348, %v2352
        %v2354 = vlaneseq
        %v2355 = vshrl.u32 %v2354, 7
        %v2356 = vsub.s32 3, %v2355
        %v2357 = vrot.slane %v1504, %v2356
        %v2358 = vadd.f32 %v2353, %v2357
        %v2360 = vlaneseq
        %v2361 = vshrl.u32 %v2360, 7
        %v2362 = vsub.s32 0, %v2361
        %v2363 = vrot.slane %v1493, %v2362
        %v2366 = vsel %vm440, %v2358, 0
        %2368 = vmatprep.subr.mxu0 0.0
        %2369 = vmatpush1.msra.mxu0 %v1488
        %2370 = vmatprep.subr.mxu0 0.0
        %2371 = vmatpush1.msra.mxu0 %v1489
        %2372 = vmatprep.subr.mxu0 0.0
        %2373 = vmatpush1.msra.mxu0 %v1490
        %2374 = vmatprep.subr.mxu0 0.0
        %2375 = vmatpush1.msra.mxu0 %v1491
        %2376 = vmatprep.subr.mxu0 0.0
        %2377 = vmatpush1.msra.mxu0 0.0
        %2378 = vmatprep.subr.mxu0 0.0
        %2379 = vmatpush1.msra.mxu0 0.0
        %2380 = vmatprep.subr.mxu0 0.0
        %2381 = vmatpush1.msra.mxu0 0.0
        %2382 = vmatprep.subr.mxu0 0.0
        %2383 = vmatpush1.msra.mxu0 0.0
        %2384 = vmatprep.subr.mxu0 0.0
        %2385 = vmatpush1.msra.mxu0 0.0
        %2386 = vmatprep.subr.mxu0 0.0
        %2387 = vmatpush1.msra.mxu0 0.0
        %2388 = vmatprep.subr.mxu0 0.0
        %2389 = vmatpush1.msra.mxu0 0.0
        %2390 = vmatprep.subr.mxu0 0.0
        %2391 = vmatpush1.msra.mxu0 0.0
        %2392 = vmatprep.subr.mxu0 0.0
        %2393 = vmatpush1.msra.mxu0 0.0
        %2394 = vmatprep.subr.mxu0 0.0
        %2395 = vmatpush1.msra.mxu0 0.0
        %2396 = vmatprep.subr.mxu0 0.0
        %2397 = vmatpush1.msra.mxu0 0.0
        %2398 = vmatprep.subr.mxu0 0.0
        %2399 = vmatpush1.msra.mxu0 0.0
        %2400 = vmatprep.subr.mxu0 0.0
        %2401 = vmatpush1.msra.mxu0 0.0
        %2402 = vmatprep.subr.mxu0 0.0
        %2403 = vmatpush1.msra.mxu0 0.0
        %2404 = vmatprep.subr.mxu0 0.0
        %2405 = vmatpush1.msra.mxu0 0.0
        %2406 = vmatprep.subr.mxu0 0.0
        %2407 = vmatpush1.msra.mxu0 0.0
        %2408 = vmatprep.subr.mxu0 0.0
        %2409 = vmatpush1.msra.mxu0 0.0
        %2410 = vmatprep.subr.mxu0 0.0
        %2411 = vmatpush1.msra.mxu0 0.0
        %2412 = vmatprep.subr.mxu0 0.0
        %2413 = vmatpush1.msra.mxu0 0.0
        %2414 = vmatprep.subr.mxu0 0.0
        %2415 = vmatpush1.msra.mxu0 0.0
        %2416 = vmatprep.subr.mxu0 0.0
        %2417 = vmatpush1.msra.mxu0 0.0
        %2418 = vmatprep.subr.mxu0 0.0
        %2419 = vmatpush1.msra.mxu0 0.0
        %2420 = vmatprep.subr.mxu0 0.0
        %2421 = vmatpush1.msra.mxu0 0.0
        %2422 = vmatprep.subr.mxu0 0.0
        %2423 = vmatpush1.msra.mxu0 0.0
        %2424 = vmatprep.subr.mxu0 0.0
        %2425 = vmatpush1.msra.mxu0 0.0
        %2426 = vmatprep.subr.mxu0 0.0
        %2427 = vmatpush1.msra.mxu0 0.0
        %2428 = vmatprep.subr.mxu0 0.0
        %2429 = vmatpush1.msra.mxu0 0.0
        %2430 = vmatprep.subr.mxu0 0.0
        %2431 = vmatpush1.msra.mxu0 0.0
        %2432 = vmatprep.mubr.f32.mxu0 0.0
        %2433 = vmatmul.mubr.f32.gmra.mrb[0].mxu0 %v2366
        %v2434 = vpop.f32.mrb[0].mxu0
        %v2435 = vadd.f32 %v2363, %v2434
        %v2436 = vpop.f32.mrb[0].mxu0
        %2437 = vdwg.mxu0
        %v2438 = vmax.f32 %v2435, 0.0
        %v2439 = vlaneseq
        %v2440 = vshrl.u32 %v2439, 7
        %v2441 = vsub.s32 1, %v2440
        %v2442 = vrot.slane %v1504, %v2441
        %v2444 = vsel %vm1377, %v2438, 0
        %2446 = vmatprep.subr.mxu0 0.0
        %2447 = vmatpush1.msra.mxu0 %v1495
        %2448 = vmatprep.subr.mxu0 0.0
        %2449 = vmatpush1.msra.mxu0 %v1496
        %2450 = vmatprep.subr.mxu0 0.0
        %2451 = vmatpush1.msra.mxu0 %v1497
        %2452 = vmatprep.subr.mxu0 0.0
        %2453 = vmatpush1.msra.mxu0 %v1498
        %2454 = vmatprep.subr.mxu0 0.0
        %2455 = vmatpush1.msra.mxu0 %v1499
        %2456 = vmatprep.subr.mxu0 0.0
        %2457 = vmatpush1.msra.mxu0 %v1500
        %2458 = vmatprep.subr.mxu0 0.0
        %2459 = vmatpush1.msra.mxu0 %v1501
        %2460 = vmatprep.subr.mxu0 0.0
        %2461 = vmatpush1.msra.mxu0 %v1502
        %2462 = vmatprep.subr.mxu0 0.0
        %2463 = vmatpush1.msra.mxu0 0.0
        %2464 = vmatprep.subr.mxu0 0.0
        %2465 = vmatpush1.msra.mxu0 0.0
        %2466 = vmatprep.subr.mxu0 0.0
        %2467 = vmatpush1.msra.mxu0 0.0
        %2468 = vmatprep.subr.mxu0 0.0
        %2469 = vmatpush1.msra.mxu0 0.0
        %2470 = vmatprep.subr.mxu0 0.0
        %2471 = vmatpush1.msra.mxu0 0.0
        %2472 = vmatprep.subr.mxu0 0.0
        %2473 = vmatpush1.msra.mxu0 0.0
        %2474 = vmatprep.subr.mxu0 0.0
        %2475 = vmatpush1.msra.mxu0 0.0
        %2476 = vmatprep.subr.mxu0 0.0
        %2477 = vmatpush1.msra.mxu0 0.0
        %2478 = vmatprep.subr.mxu0 0.0
        %2479 = vmatpush1.msra.mxu0 0.0
        %2480 = vmatprep.subr.mxu0 0.0
        %2481 = vmatpush1.msra.mxu0 0.0
        %2482 = vmatprep.subr.mxu0 0.0
        %2483 = vmatpush1.msra.mxu0 0.0
        %2484 = vmatprep.subr.mxu0 0.0
        %2485 = vmatpush1.msra.mxu0 0.0
        %2486 = vmatprep.subr.mxu0 0.0
        %2487 = vmatpush1.msra.mxu0 0.0
        %2488 = vmatprep.subr.mxu0 0.0
        %2489 = vmatpush1.msra.mxu0 0.0
        %2490 = vmatprep.subr.mxu0 0.0
        %2491 = vmatpush1.msra.mxu0 0.0
        %2492 = vmatprep.subr.mxu0 0.0
        %2493 = vmatpush1.msra.mxu0 0.0
        %2494 = vmatprep.subr.mxu0 0.0
        %2495 = vmatpush1.msra.mxu0 0.0
        %2496 = vmatprep.subr.mxu0 0.0
        %2497 = vmatpush1.msra.mxu0 0.0
        %2498 = vmatprep.subr.mxu0 0.0
        %2499 = vmatpush1.msra.mxu0 0.0
        %2500 = vmatprep.subr.mxu0 0.0
        %2501 = vmatpush1.msra.mxu0 0.0
        %2502 = vmatprep.subr.mxu0 0.0
        %2503 = vmatpush1.msra.mxu0 0.0
        %2504 = vmatprep.subr.mxu0 0.0
        %2505 = vmatpush1.msra.mxu0 0.0
        %2506 = vmatprep.subr.mxu0 0.0
        %2507 = vmatpush1.msra.mxu0 0.0
        %2508 = vmatprep.subr.mxu0 0.0
        %2509 = vmatpush1.msra.mxu0 0.0
        %2510 = vmatprep.mubr.f32.mxu0 0.0
        %2511 = vmatmul.mubr.f32.gmra.mrb[0].mxu0 %v2444
        %v2512 = vpop.f32.mrb[0].mxu0
        %v2513 = vadd.f32 %v2442, %v2512
        %v2514 = vpop.f32.mrb[0].mxu0
        %2515 = vdwg.mxu0
        %v2516 = vadd.f32 %v2358, %v2513
        %v2517 = vsel %vm440, %v2516, 0.0
        %2518 = vadd.xlane.f32.xlu0 %v2517
        %v2519 = vpop.xlane.xlu0 %2518
        %v2520 = vmul.f32 %v2519, %v1272
        %v2521 = vsub.f32 %v2516, %v2520
        %v2522 = vmul.f32 %v2521, %v2521
        %v2523 = vsel %vm440, %v2522, 0.0
        %2524 = vadd.xlane.f32.xlu0 %v2523
        %v2525 = vpop.xlane.xlu0 %2524
        %v2526 = vmul.f32 %v2525, %v1272
        %v2527 = vadd.f32 %v2526, 1e-05
        %v2528 = vrsqrt.pop %v2527
        %v2529 = vmul.f32 %v2521, %v2528
        %v2530 = vlaneseq
        %v2531 = vshrl.u32 %v2530, 7
        %v2532 = vsub.s32 4, %v2531
        %v2533 = vrot.slane %v1504, %v2532
        %v2534 = vmul.f32 %v2529, %v2533
        %v2535 = vlaneseq
        %v2536 = vshrl.u32 %v2535, 7
        %v2537 = vsub.s32 5, %v2536
        %v2538 = vrot.slane %v1504, %v2537
        %v2539 = vadd.f32 %v2534, %v2538
        %v2540 = vld [vmem:[%s9] sm:$0xff]
        %v2541 = vld [vmem:[%s9 + $0x8] sm:$0xff]
        %v2542 = vld [vmem:[%s9 + $0x10] sm:$0xff]
        %v2543 = vld [vmem:[%s9 + $0x18] sm:$0xff]
        %v2544 = vld [vmem:[%s10] sm:$0x1]
        %v2546 = vlaneseq
        %v2547 = vshrl.u32 %v2546, 7
        %v2548 = vsub.s32 0, %v2547
        %v2549 = vrot.slane %v2544, %v2548
        %v2552 = vsel %vm440, %v2539, 0
        %2554 = vmatprep.subr.mxu0 0.0
        %2555 = vmatpush1.msra.mxu0 %v2540
        %2556 = vmatprep.subr.mxu0 0.0
        %2557 = vmatpush1.msra.mxu0 %v2541
        %2558 = vmatprep.subr.mxu0 0.0
        %2559 = vmatpush1.msra.mxu0 %v2542
        %2560 = vmatprep.subr.mxu0 0.0
        %2561 = vmatpush1.msra.mxu0 %v2543
        %2562 = vmatprep.subr.mxu0 0.0
        %2563 = vmatpush1.msra.mxu0 0.0
        %2564 = vmatprep.subr.mxu0 0.0
        %2565 = vmatpush1.msra.mxu0 0.0
        %2566 = vmatprep.subr.mxu0 0.0
        %2567 = vmatpush1.msra.mxu0 0.0
        %2568 = vmatprep.subr.mxu0 0.0
        %2569 = vmatpush1.msra.mxu0 0.0
        %2570 = vmatprep.subr.mxu0 0.0
        %2571 = vmatpush1.msra.mxu0 0.0
        %2572 = vmatprep.subr.mxu0 0.0
        %2573 = vmatpush1.msra.mxu0 0.0
        %2574 = vmatprep.subr.mxu0 0.0
        %2575 = vmatpush1.msra.mxu0 0.0
        %2576 = vmatprep.subr.mxu0 0.0
        %2577 = vmatpush1.msra.mxu0 0.0
        %2578 = vmatprep.subr.mxu0 0.0
        %2579 = vmatpush1.msra.mxu0 0.0
        %2580 = vmatprep.subr.mxu0 0.0
        %2581 = vmatpush1.msra.mxu0 0.0
        %2582 = vmatprep.subr.mxu0 0.0
        %2583 = vmatpush1.msra.mxu0 0.0
        %2584 = vmatprep.subr.mxu0 0.0
        %2585 = vmatpush1.msra.mxu0 0.0
        %2586 = vmatprep.subr.mxu0 0.0
        %2587 = vmatpush1.msra.mxu0 0.0
        %2588 = vmatprep.subr.mxu0 0.0
        %2589 = vmatpush1.msra.mxu0 0.0
        %2590 = vmatprep.subr.mxu0 0.0
        %2591 = vmatpush1.msra.mxu0 0.0
        %2592 = vmatprep.subr.mxu0 0.0
        %2593 = vmatpush1.msra.mxu0 0.0
        %2594 = vmatprep.subr.mxu0 0.0
        %2595 = vmatpush1.msra.mxu0 0.0
        %2596 = vmatprep.subr.mxu0 0.0
        %2597 = vmatpush1.msra.mxu0 0.0
        %2598 = vmatprep.subr.mxu0 0.0
        %2599 = vmatpush1.msra.mxu0 0.0
        %2600 = vmatprep.subr.mxu0 0.0
        %2601 = vmatpush1.msra.mxu0 0.0
        %2602 = vmatprep.subr.mxu0 0.0
        %2603 = vmatpush1.msra.mxu0 0.0
        %2604 = vmatprep.subr.mxu0 0.0
        %2605 = vmatpush1.msra.mxu0 0.0
        %2606 = vmatprep.subr.mxu0 0.0
        %2607 = vmatpush1.msra.mxu0 0.0
        %2608 = vmatprep.subr.mxu0 0.0
        %2609 = vmatpush1.msra.mxu0 0.0
        %2610 = vmatprep.subr.mxu0 0.0
        %2611 = vmatpush1.msra.mxu0 0.0
        %2612 = vmatprep.subr.mxu0 0.0
        %2613 = vmatpush1.msra.mxu0 0.0
        %2614 = vmatprep.subr.mxu0 0.0
        %2615 = vmatpush1.msra.mxu0 0.0
        %2616 = vmatprep.subr.mxu0 0.0
        %2617 = vmatpush1.msra.mxu0 0.0
        %2618 = vmatprep.mubr.f32.mxu0 0.0
        %2619 = vmatmul.mubr.f32.gmra.mrb[0].mxu0 %v2552
        %v2620 = vpop.f32.mrb[0].mxu0
        %v2621 = vadd.f32 %v2549, %v2620
        %v2622 = vpop.f32.mrb[0].mxu0
        %2623 = vdwg.mxu0
        %2624 = vst [vmem:[%s388] sm:$0xff] %v2621
        %s2625 = sand.u32 %s274, 1
        %s2626 = scalar_lea.sflag [#allocation3], %s2625
        %s2627 = sand.u32 %s274, 1
        %s2628 = smul.addr %s2627, 8
        %s2629 = scalar_lea.vmem [#allocation2], %s2628
        // Predicated region
        $region65: #{transformer_forward.1} parent=63 // pred_check
          %p2630 = pneg %p284
        $region66: #{transformer_forward.1} parent=63 // pred_check_branch
          %2632 = sbr.rel (%p2630) target = $region68
        $region67: #{transformer_forward.1} parent=63 // pred_region
          %s2634 = ssub.s32 128, 128
          %2635 = vsyncadd %s2626, %s2634
          %s2636 = smul.addr %s25, 128
          %s2637 = scalar_lea.hbm %s11, %s2636
          %s2639 = sshll.u32 %s2629, 4
          %s2640 = int_to_ptr.vmem [resolvable:$true] %s2639
          %2642 = dma.vmem_to_hbm [thread:$0]  %s2640, 128, %s2637, %s2626
        $region68: #{transformer_forward.1} parent=63 // pred_fallthru
          _
      $region64: #{transformer_forward.1} parent=5 // pred_fallthru
        _
      %p2643 = scmp.le.s32.totalorder 2, %s20
      // Predicated region
      $region69: #{transformer_forward.1} parent=5 // pred_check
        %p2644 = pneg %p2643
      $region70: #{transformer_forward.1} parent=5 // pred_check_branch
        %2646 = sbr.rel (%p2644) target = $region72
      $region71: #{transformer_forward.1} parent=5 // pred_region
        %s2647 = ssub.s32 %s20, 2
        // Predicated region
        $region73: #{transformer_forward.1} parent=71 // pred_check
          %p2648 = pneg %p290
        $region74: #{transformer_forward.1} parent=71 // pred_check_branch
          %2650 = sbr.rel (%p2648) target = $region76
        $region75: #{transformer_forward.1} parent=71 // pred_region
          %s2651 = sand.u32 %s275, 1
          %s2652 = scalar_lea.sflag [#allocation3], %s2651
          %s2653 = sand.u32 %s275, 1
          %s2654 = smul.addr %s2653, 8
          %s2655 = scalar_lea.vmem [#allocation2], %s2654
          %2656 = dma.done %s2652, 128
        $region76: #{transformer_forward.1} parent=71 // pred_fallthru
          _
      $region72: #{transformer_forward.1} parent=5 // pred_fallthru
        _
    $region6: #{transformer_forward.1} parent=1 // loop_footer
      %s24 = sadd.s32 1, %s20
    $region7: #{transformer_forward.1} parent=1 // loop_footer_branch
      %19 = sbr.rel target = $region3
    $region8: #{transformer_forward.1} parent=1 // loop_exit
      _
    %2657 = vsyncpa [#allocation3], 1
    %s2658 = scalar_lea.sflag [#allocation3], 1
    %2659 = vsyncpa %s2658, 1

</llo_original>
